<compile_context>
chip_gen: v7x
topology: tpu7x:2x2x1
jax: 0.10.0
libtpu: 0.0.40
codegen_flags: <defaults>
</compile_context>

<pallas_src>
import functools

import jax
import jax.numpy as jnp
from jax.experimental import pallas as pl
from jax.experimental.pallas import tpu as pltpu


# ----------------------------- fully fused forward kernel -----------------------------
def fused_forward_kernel(
    x_ref,      # (T*B, Din)  time-major rows (t, b)
    m_ref,      # (T*B, 1)    validity mask (1 valid, 0 pad), same row order
    pm_ref,     # (B, T)      attention key pad-mask (1.0 where token == PAD)
    wih_ref,    # (Din, 8H)   [W_ih_fwd | W_ih_bwd]
    bih_ref,    # (1, 8H)     [b_fwd | b_bwd] (b_ih + b_hh combined per direction)
    whh_ref,    # (2H, 8H)    block-diag([W_hh_fwd, W_hh_bwd])
    wqkv_ref,   # (H, 3H)     [Wq | Wk | Wv] (no bias in the reference module)
    wo_ref,     # (H, H)
    wmd_ref,    # (T*H, C)
    bmd_ref,    # (1, C)
    out_ref,    # (B, C)
    h_sc,       # VMEM (B*T, H)   bidirectional hidden, rows ordered (b, t)
    ctx_sc,     # VMEM (B*T, H)   merged attention context
    flat_sc,    # VMEM (B, T*H)   lane-dense flatten for multi_dense
    *, T, B, H, heads,
):
    f32 = jnp.float32
    bf16 = jnp.bfloat16
    dk = H // heads
    scale = float(dk) ** (-0.5)
    G4 = 4 * H
    NEG_INF = jnp.float32(-1e9)

    # ---- hoisted input projection for BOTH directions: one (T*B, Din) x (Din, 8H) matmul ----
    gx = (jnp.dot(x_ref[...].astype(bf16), wih_ref[...].astype(bf16),
                  preferred_element_type=f32)
          + bih_ref[...])                                   # (T*B, 8H)
    gx_f = gx[:, :G4]                                       # forward-direction gate slab
    gx_b = gx[:, G4:]                                       # backward-direction gate slab
    m_all = m_ref[...]                                      # (T*B, 1)
    whh = whh_ref[...].astype(bf16)                         # (2H, 8H) block-diagonal

    def cell(gates, c_prev):
        # PyTorch gate order i, f, g, o
        i = jax.nn.sigmoid(gates[:, 0:H])
        f = jax.nn.sigmoid(gates[:, H:2 * H])
        g = jnp.tanh(gates[:, 2 * H:3 * H])
        o = jax.nn.sigmoid(gates[:, 3 * H:4 * H])
        c_new = f * c_prev + i * g
        h_new = o * jnp.tanh(c_new)
        return h_new, c_new

    h_f = jnp.zeros((B, H), f32)
    c_f = jnp.zeros((B, H), f32)
    h_b = jnp.zeros((B, H), f32)
    c_b = jnp.zeros((B, H), f32)
    outs_f = [None] * T
    outs_b = [None] * T

    # ---- fused bidirectional recurrence (statically unrolled; only h @ W_hh stays serial) ----
    for t in range(T):
        r = T - 1 - t
        h_cat = jnp.concatenate([h_f, h_b], axis=1)          # (B, 2H)
        rec = jnp.dot(h_cat.astype(bf16), whh,
                      preferred_element_type=f32)            # (B, 8H)  single MXU push, N = 256

        gates_f = gx_f[t * B:(t + 1) * B, :] + rec[:, :G4]
        gates_b = gx_b[r * B:(r + 1) * B, :] + rec[:, G4:]
        m_f = m_all[t * B:(t + 1) * B, :]                    # (B, 1)
        m_b = m_all[r * B:(r + 1) * B, :]

        hf_new, cf_new = cell(gates_f, c_f)
        hb_new, cb_new = cell(gates_b, c_b)

        # packed-sequence semantics: freeze state / zero output at padded positions
        c_f = m_f * cf_new + (1.0 - m_f) * c_f
        h_f = m_f * hf_new + (1.0 - m_f) * h_f
        c_b = m_b * cb_new + (1.0 - m_b) * c_b
        h_b = m_b * hb_new + (1.0 - m_b) * h_b

        outs_f[t] = m_f * hf_new                             # output at time t
        outs_b[r] = m_b * hb_new                             # output at time r

    # h.view(-1, T, 2, H).sum(dim=2) == fwd + bwd ; lay out rows batch-major (b, t)
    for t in range(T):
        h_t = outs_f[t] + outs_b[t]                          # (B, H)
        for b in range(B):
            h_sc[b * T + t:b * T + t + 1, :] = h_t[b:b + 1, :]
    h_all = h_sc[...]                                        # (B*T, H)

    # ---- fused QKV projection (no bias in the reference module) ----
    qkv = jnp.dot(h_all.astype(bf16), wqkv_ref[...].astype(bf16),
                  preferred_element_type=f32)                # (B*T, 3H)

    pm = pm_ref[...]                                         # (B, T) 1.0 where PAD

    # ---- all (batch, head) attention blocks inside the same kernel ----
    for b in range(B):
        key_mask = pm[b:b + 1, :] > 0.5                      # (1, T) broadcast over query rows
        for hd in range(heads):
            q = qkv[b * T:(b + 1) * T, hd * dk:(hd + 1) * dk] * scale
            k = qkv[b * T:(b + 1) * T, H + hd * dk:H + (hd + 1) * dk]
            v = qkv[b * T:(b + 1) * T, 2 * H + hd * dk:2 * H + (hd + 1) * dk]

            s = jax.lax.dot_general(q.astype(bf16), k.astype(bf16),
                                    (((1,), (1,)), ((), ())),
                                    preferred_element_type=f32)      # (T, T) = q @ k.T
            s = jnp.where(key_mask, NEG_INF, s)              # masked_fill_(mask, -1e9)
            s = s - jnp.max(s, axis=-1, keepdims=True)
            e = jnp.exp(s)
            p = e * pl.reciprocal(jnp.sum(e, axis=-1, keepdims=True), approx=True)

            ctx = jnp.dot(p.astype(bf16), v.astype(bf16),
                          preferred_element_type=f32)        # (T, dk)
            ctx_sc[b * T:(b + 1) * T, hd * dk:(hd + 1) * dk] = ctx

    ctx_all = ctx_sc[...]                                    # (B*T, H) merged heads

    # ---- attention output projection ----
    att = jnp.dot(ctx_all.astype(bf16), wo_ref[...].astype(bf16),
                  preferred_element_type=f32)                # (B*T, H)

    # ---- flatten to lane-dense (B, T*H) and apply multi_dense ----
    for b in range(B):
        for t in range(T):
            flat_sc[b:b + 1, t * H:(t + 1) * H] = att[b * T + t:b * T + t + 1, :]
    flat = flat_sc[...]                                      # (B, T*H)

    out_ref[...] = (jnp.dot(flat.astype(bf16), wmd_ref[...].astype(bf16),
                            preferred_element_type=f32)
                    + bmd_ref[...])


# ----------------------------- full forward (wrapper) -----------------------------
def textcnn_forward(params, data, pos1, pos2, cfg):
    B = data.shape[0]
    T = cfg["max_len"]
    H = cfg["hidden_size"]
    C = cfg["class_num"]
    heads = cfg["head_num"]

    token = data[:, 0, :]                                    # (B, T)
    pad_mask = (token == cfg["pad_id"]).astype(jnp.float32)  # (B, T) attention key pad mask
    valid = (data[:, 1, :] > 0).astype(jnp.float32)          # (B, T) LSTM validity mask

    # TODO(synk): embedding gathers are dynamic row gathers — kept in plain JAX/XLA glue.
    emb = params["char_vec"][token]
    p1 = params["pos1_emb"][pos1]
    p2 = params["pos2_emb"][pos2]
    x = jnp.concatenate([emb, p1, p2], axis=2).astype(jnp.float32)   # (B, T, Din)
    Din = x.shape[-1]
    # emb_dropout / lstm_dropout / att_dropout: identity in eval mode.

    # Time-major flattened rows (t, b) for the hoisted gate matmul inside the kernel.
    x_tm = jnp.transpose(x, (1, 0, 2)).reshape(T * B, Din)   # (T*B, Din)
    m_tm = jnp.transpose(valid, (1, 0)).reshape(T * B, 1)    # (T*B, 1)

    # Fused weights: both directions side by side; recurrent weights block-diagonal.
    w_ih = jnp.concatenate([params["w_ih_f"], params["w_ih_b"]], axis=1)   # (Din, 8H)
    b_ih = jnp.concatenate([params["b_f"], params["b_b"]], axis=1)         # (1, 8H)
    zeros_h = jnp.zeros((H, 4 * H), jnp.float32)
    w_hh = jnp.concatenate([
        jnp.concatenate([params["w_hh_f"], zeros_h], axis=1),
        jnp.concatenate([zeros_h, params["w_hh_b"]], axis=1),
    ], axis=0)                                                             # (2H, 8H)
    w_qkv = jnp.concatenate([params["wq"], params["wk"], params["wv"]], axis=1)  # (H, 3H)

    kern = functools.partial(fused_forward_kernel, T=T, B=B, H=H, heads=heads)
    logits = pl.pallas_call(
        kern,
        out_shape=jax.ShapeDtypeStruct((B, C), jnp.float32),
        scratch_shapes=[
            pltpu.VMEM((B * T, H), jnp.float32),   # h_sc
            pltpu.VMEM((B * T, H), jnp.float32),   # ctx_sc
            pltpu.VMEM((B, T * H), jnp.float32),   # flat_sc
        ],
    )(x_tm, m_tm, pad_mask, w_ih, b_ih, w_hh, w_qkv,
      params["wo"], params["w_md"], params["b_md"])
    return logits


# ----------------------------- parameter init -----------------------------
def init_params(key, cfg):
    V, E = cfg["vocab_size"], cfg["embedding_dimension"]
    P = cfg["pos_embedding_dimension"]
    T = cfg["max_len"]
    H = cfg["hidden_size"]
    C = cfg["class_num"]
    pos_size = 2 * T + 3
    Din = E + 2 * P

    ks = jax.random.split(key, 16)
    s = 0.1
    params = {
        "char_vec": jax.random.normal(ks[0], (V, E), jnp.float32) * s,
        "pos1_emb": jax.random.normal(ks[1], (pos_size, P), jnp.float32) * s,
        "pos2_emb": jax.random.normal(ks[2], (pos_size, P), jnp.float32) * s,
        # LSTM (layers_num = 1, bidirectional). Stored as (in, 4H) for x @ W, gate order i,f,g,o.
        "w_ih_f": jax.random.normal(ks[3], (Din, 4 * H), jnp.float32) * s,
        "w_hh_f": jax.random.normal(ks[4], (H, 4 * H), jnp.float32) * s,
        "b_f": jax.random.normal(ks[5], (1, 4 * H), jnp.float32) * s,   # b_ih + b_hh combined
        "w_ih_b": jax.random.normal(ks[6], (Din, 4 * H), jnp.float32) * s,
        "w_hh_b": jax.random.normal(ks[7], (H, 4 * H), jnp.float32) * s,
        "b_b": jax.random.normal(ks[8], (1, 4 * H), jnp.float32) * s,
        # MultiHeadAttention projections (bias=False in the module), stored (in, out).
        "wq": jax.random.normal(ks[9], (H, H), jnp.float32) * s,
        "wk": jax.random.normal(ks[10], (H, H), jnp.float32) * s,
        "wv": jax.random.normal(ks[11], (H, H), jnp.float32) * s,
        "wo": jax.random.normal(ks[12], (H, H), jnp.float32) * s,
        # multi_dense: (H*T) -> class_num
        "w_md": jax.random.normal(ks[13], (H * T, C), jnp.float32) * s,
        "b_md": jnp.zeros((1, C), jnp.float32),
    }
    return params


# ----------------------------- main -----------------------------
if __name__ == "__main__":
    cfg = {
        "vocab_size": 20,
        "embedding_dimension": 16,
        "pos_embedding_dimension": 8,
        "hidden_size": 32,
        "max_len": 8,
        "head_num": 4,
        "class_num": 5,
        "layers_num": 1,
        "pad_id": 0,
    }
    B, T = 2, cfg["max_len"]

    key = jax.random.PRNGKey(0)
    k_params, k_tok, k_p1, k_p2 = jax.random.split(key, 4)
    params = init_params(k_params, cfg)

    # data[:, 0, :] = token ids (PAD=0 at padded tail), data[:, 1, :] = validity mask.
    lengths = jnp.array([8, 5], dtype=jnp.int32)
    tpos = jnp.arange(T, dtype=jnp.int32)[None, :]
    valid = (tpos < lengths[:, None]).astype(jnp.int32)                          # (B, T)
    tokens = jax.random.randint(k_tok, (B, T), 1, cfg["vocab_size"], jnp.int32) * valid
    data = jnp.stack([tokens, valid], axis=1)                                    # (B, 2, T)

    pos_size = 2 * T + 3
    pos1 = jax.random.randint(k_p1, (B, T), 0, pos_size, jnp.int32)
    pos2 = jax.random.randint(k_p2, (B, T), 0, pos_size, jnp.int32)

    forward = jax.jit(functools.partial(textcnn_forward, cfg=cfg))
    logits = forward(params, data, pos1, pos2)
    logits = jax.block_until_ready(logits)
    assert logits.shape == (B, cfg["class_num"]), logits.shape
    assert bool(jnp.all(jnp.isfinite(logits)))
    print("KERNEL_OK")
</pallas_src>

<mosaic_0001>
module attributes {stable_mosaic.version = 11 : i64} {
  func.func @fused_forward_kernel(%arg0: memref<16x32xf32, #tpu.memory_space<vmem>>, %arg1: memref<16x1xf32, #tpu.memory_space<vmem>>, %arg2: memref<2x8xf32, #tpu.memory_space<vmem>>, %arg3: memref<32x256xf32, #tpu.memory_space<vmem>>, %arg4: memref<1x256xf32, #tpu.memory_space<vmem>>, %arg5: memref<64x256xf32, #tpu.memory_space<vmem>>, %arg6: memref<32x96xf32, #tpu.memory_space<vmem>>, %arg7: memref<32x32xf32, #tpu.memory_space<vmem>>, %arg8: memref<256x5xf32, #tpu.memory_space<vmem>>, %arg9: memref<1x5xf32, #tpu.memory_space<vmem>>, %arg10: memref<2x5xf32, #tpu.memory_space<vmem>>, %arg11: memref<16x32xf32, #tpu.memory_space<vmem>>, %arg12: memref<16x32xf32, #tpu.memory_space<vmem>>, %arg13: memref<2x256xf32, #tpu.memory_space<vmem>>) attributes {dimension_semantics = [], scalar_prefetch = 0 : i64, scratch_operands = 3 : i64, tpu.core_type = #tpu.core_type<tc>} {
    %c0 = arith.constant 0 : index
    %c0_0 = arith.constant 0 : index
    %0 = vector.load %arg0[%c0, %c0_0] : memref<16x32xf32, #tpu.memory_space<vmem>>, vector<16x32xf32>
    %1 = arith.truncf %0 : vector<16x32xf32> to vector<16x32xbf16>
    %c0_1 = arith.constant 0 : index
    %c0_2 = arith.constant 0 : index
    %2 = vector.load %arg3[%c0_1, %c0_2] : memref<32x256xf32, #tpu.memory_space<vmem>>, vector<32x256xf32>
    %3 = arith.truncf %2 : vector<32x256xf32> to vector<32x256xbf16>
    %cst = arith.constant dense<0.000000e+00> : vector<16x256xf32>
    %4 = tpu.matmul %1, %3, %cst {dimension_numbers = #tpu.dot_dimension_numbers<[1], [0], [0], [1], [0, 0, 1, 1], [], []>} : vector<16x32xbf16>, vector<32x256xbf16>, vector<16x256xf32> -> vector<16x256xf32>
    %c0_3 = arith.constant 0 : index
    %c0_4 = arith.constant 0 : index
    %5 = vector.load %arg4[%c0_3, %c0_4] : memref<1x256xf32, #tpu.memory_space<vmem>>, vector<1x256xf32>
    %6 = vector.broadcast %5 : vector<1x256xf32> to vector<16x256xf32>
    %7 = arith.addf %4, %6 : vector<16x256xf32>
    %8 = vector.extract_strided_slice %7 {offsets = [0, 0], sizes = [16, 128], strides = [1, 1]} : vector<16x256xf32> to vector<16x128xf32>
    %9 = vector.extract_strided_slice %7 {offsets = [0, 128], sizes = [16, 128], strides = [1, 1]} : vector<16x256xf32> to vector<16x128xf32>
    %c0_5 = arith.constant 0 : index
    %c0_6 = arith.constant 0 : index
    %10 = vector.load %arg1[%c0_5, %c0_6] : memref<16x1xf32, #tpu.memory_space<vmem>>, vector<16x1xf32>
    %c0_7 = arith.constant 0 : index
    %c0_8 = arith.constant 0 : index
    %11 = vector.load %arg5[%c0_7, %c0_8] : memref<64x256xf32, #tpu.memory_space<vmem>>, vector<64x256xf32>
    %12 = arith.truncf %11 : vector<64x256xf32> to vector<64x256xbf16>
    %cst_9 = arith.constant 0.000000e+00 : f32
    %13 = vector.broadcast %cst_9 : f32 to vector<2x32xf32>
    %cst_10 = arith.constant 0.000000e+00 : f32
    %14 = vector.broadcast %cst_10 : f32 to vector<2x32xf32>
    %cst_11 = arith.constant 0.000000e+00 : f32
    %15 = vector.broadcast %cst_11 : f32 to vector<2x32xf32>
    %cst_12 = arith.constant 0.000000e+00 : f32
    %16 = vector.broadcast %cst_12 : f32 to vector<2x32xf32>
    %17 = tpu.concatenate %13, %15 in 1 : vector<2x32xf32>, vector<2x32xf32> -> vector<2x64xf32>
    %18 = arith.truncf %17 : vector<2x64xf32> to vector<2x64xbf16>
    %cst_13 = arith.constant dense<0.000000e+00> : vector<2x256xf32>
    %19 = tpu.matmul %18, %12, %cst_13 {dimension_numbers = #tpu.dot_dimension_numbers<[1], [0], [0], [1], [0, 0, 1, 1], [], []>} : vector<2x64xbf16>, vector<64x256xbf16>, vector<2x256xf32> -> vector<2x256xf32>
    %20 = vector.extract_strided_slice %8 {offsets = [0, 0], sizes = [2, 128], strides = [1, 1]} : vector<16x128xf32> to vector<2x128xf32>
    %21 = vector.extract_strided_slice %19 {offsets = [0, 0], sizes = [2, 128], strides = [1, 1]} : vector<2x256xf32> to vector<2x128xf32>
    %22 = arith.addf %20, %21 : vector<2x128xf32>
    %23 = vector.extract_strided_slice %9 {offsets = [14, 0], sizes = [2, 128], strides = [1, 1]} : vector<16x128xf32> to vector<2x128xf32>
    %24 = vector.extract_strided_slice %19 {offsets = [0, 128], sizes = [2, 128], strides = [1, 1]} : vector<2x256xf32> to vector<2x128xf32>
    %25 = arith.addf %23, %24 : vector<2x128xf32>
    %26 = vector.extract_strided_slice %10 {offsets = [0, 0], sizes = [2, 1], strides = [1, 1]} : vector<16x1xf32> to vector<2x1xf32>
    %27 = vector.extract_strided_slice %10 {offsets = [14, 0], sizes = [2, 1], strides = [1, 1]} : vector<16x1xf32> to vector<2x1xf32>
    %28 = vector.extract_strided_slice %22 {offsets = [0, 0], sizes = [2, 32], strides = [1, 1]} : vector<2x128xf32> to vector<2x32xf32>
    %29 = arith.negf %28 : vector<2x32xf32>
    %30 = math.exp %29 : vector<2x32xf32>
    %cst_14 = arith.constant 1.000000e+00 : f32
    %31 = vector.broadcast %cst_14 : f32 to vector<2x32xf32>
    %32 = arith.addf %31, %30 : vector<2x32xf32>
    %33 = arith.divf %31, %32 : vector<2x32xf32>
    %34 = vector.extract_strided_slice %22 {offsets = [0, 32], sizes = [2, 32], strides = [1, 1]} : vector<2x128xf32> to vector<2x32xf32>
    %35 = arith.negf %34 : vector<2x32xf32>
    %36 = math.exp %35 : vector<2x32xf32>
    %cst_15 = arith.constant 1.000000e+00 : f32
    %37 = vector.broadcast %cst_15 : f32 to vector<2x32xf32>
    %38 = arith.addf %37, %36 : vector<2x32xf32>
    %39 = arith.divf %37, %38 : vector<2x32xf32>
    %40 = vector.extract_strided_slice %22 {offsets = [0, 64], sizes = [2, 32], strides = [1, 1]} : vector<2x128xf32> to vector<2x32xf32>
    %41 = math.tanh %40 : vector<2x32xf32>
    %42 = vector.extract_strided_slice %22 {offsets = [0, 96], sizes = [2, 32], strides = [1, 1]} : vector<2x128xf32> to vector<2x32xf32>
    %43 = arith.negf %42 : vector<2x32xf32>
    %44 = math.exp %43 : vector<2x32xf32>
    %cst_16 = arith.constant 1.000000e+00 : f32
    %45 = vector.broadcast %cst_16 : f32 to vector<2x32xf32>
    %46 = arith.addf %45, %44 : vector<2x32xf32>
    %47 = arith.divf %45, %46 : vector<2x32xf32>
    %48 = arith.mulf %39, %14 : vector<2x32xf32>
    %49 = arith.mulf %33, %41 : vector<2x32xf32>
    %50 = arith.addf %48, %49 : vector<2x32xf32>
    %51 = math.tanh %50 : vector<2x32xf32>
    %52 = arith.mulf %47, %51 : vector<2x32xf32>
    %53 = vector.extract_strided_slice %25 {offsets = [0, 0], sizes = [2, 32], strides = [1, 1]} : vector<2x128xf32> to vector<2x32xf32>
    %54 = arith.negf %53 : vector<2x32xf32>
    %55 = math.exp %54 : vector<2x32xf32>
    %cst_17 = arith.constant 1.000000e+00 : f32
    %56 = vector.broadcast %cst_17 : f32 to vector<2x32xf32>
    %57 = arith.addf %56, %55 : vector<2x32xf32>
    %58 = arith.divf %56, %57 : vector<2x32xf32>
    %59 = vector.extract_strided_slice %25 {offsets = [0, 32], sizes = [2, 32], strides = [1, 1]} : vector<2x128xf32> to vector<2x32xf32>
    %60 = arith.negf %59 : vector<2x32xf32>
    %61 = math.exp %60 : vector<2x32xf32>
    %cst_18 = arith.constant 1.000000e+00 : f32
    %62 = vector.broadcast %cst_18 : f32 to vector<2x32xf32>
    %63 = arith.addf %62, %61 : vector<2x32xf32>
    %64 = arith.divf %62, %63 : vector<2x32xf32>
    %65 = vector.extract_strided_slice %25 {offsets = [0, 64], sizes = [2, 32], strides = [1, 1]} : vector<2x128xf32> to vector<2x32xf32>
    %66 = math.tanh %65 : vector<2x32xf32>
    %67 = vector.extract_strided_slice %25 {offsets = [0, 96], sizes = [2, 32], strides = [1, 1]} : vector<2x128xf32> to vector<2x32xf32>
    %68 = arith.negf %67 : vector<2x32xf32>
    %69 = math.exp %68 : vector<2x32xf32>
    %cst_19 = arith.constant 1.000000e+00 : f32
    %70 = vector.broadcast %cst_19 : f32 to vector<2x32xf32>
    %71 = arith.addf %70, %69 : vector<2x32xf32>
    %72 = arith.divf %70, %71 : vector<2x32xf32>
    %73 = arith.mulf %64, %16 : vector<2x32xf32>
    %74 = arith.mulf %58, %66 : vector<2x32xf32>
    %75 = arith.addf %73, %74 : vector<2x32xf32>
    %76 = math.tanh %75 : vector<2x32xf32>
    %77 = arith.mulf %72, %76 : vector<2x32xf32>
    %78 = vector.broadcast %26 : vector<2x1xf32> to vector<2x32xf32>
    %79 = arith.mulf %78, %50 : vector<2x32xf32>
    %cst_20 = arith.constant 1.000000e+00 : f32
    %80 = vector.broadcast %cst_20 : f32 to vector<2x1xf32>
    %81 = arith.subf %80, %26 : vector<2x1xf32>
    %82 = vector.broadcast %81 : vector<2x1xf32> to vector<2x32xf32>
    %83 = arith.mulf %82, %14 : vector<2x32xf32>
    %84 = arith.addf %79, %83 : vector<2x32xf32>
    %85 = vector.broadcast %26 : vector<2x1xf32> to vector<2x32xf32>
    %86 = arith.mulf %85, %52 : vector<2x32xf32>
    %cst_21 = arith.constant 1.000000e+00 : f32
    %87 = vector.broadcast %cst_21 : f32 to vector<2x1xf32>
    %88 = arith.subf %87, %26 : vector<2x1xf32>
    %89 = vector.broadcast %88 : vector<2x1xf32> to vector<2x32xf32>
    %90 = arith.mulf %89, %13 : vector<2x32xf32>
    %91 = arith.addf %86, %90 : vector<2x32xf32>
    %92 = vector.broadcast %27 : vector<2x1xf32> to vector<2x32xf32>
    %93 = arith.mulf %92, %75 : vector<2x32xf32>
    %cst_22 = arith.constant 1.000000e+00 : f32
    %94 = vector.broadcast %cst_22 : f32 to vector<2x1xf32>
    %95 = arith.subf %94, %27 : vector<2x1xf32>
    %96 = vector.broadcast %95 : vector<2x1xf32> to vector<2x32xf32>
    %97 = arith.mulf %96, %16 : vector<2x32xf32>
    %98 = arith.addf %93, %97 : vector<2x32xf32>
    %99 = vector.broadcast %27 : vector<2x1xf32> to vector<2x32xf32>
    %100 = arith.mulf %99, %77 : vector<2x32xf32>
    %cst_23 = arith.constant 1.000000e+00 : f32
    %101 = vector.broadcast %cst_23 : f32 to vector<2x1xf32>
    %102 = arith.subf %101, %27 : vector<2x1xf32>
    %103 = vector.broadcast %102 : vector<2x1xf32> to vector<2x32xf32>
    %104 = arith.mulf %103, %15 : vector<2x32xf32>
    %105 = arith.addf %100, %104 : vector<2x32xf32>
    %106 = vector.broadcast %26 : vector<2x1xf32> to vector<2x32xf32>
    %107 = arith.mulf %106, %52 : vector<2x32xf32>
    %108 = vector.broadcast %27 : vector<2x1xf32> to vector<2x32xf32>
    %109 = arith.mulf %108, %77 : vector<2x32xf32>
    %110 = tpu.concatenate %91, %105 in 1 : vector<2x32xf32>, vector<2x32xf32> -> vector<2x64xf32>
    %111 = arith.truncf %110 : vector<2x64xf32> to vector<2x64xbf16>
    %cst_24 = arith.constant dense<0.000000e+00> : vector<2x256xf32>
    %112 = tpu.matmul %111, %12, %cst_24 {dimension_numbers = #tpu.dot_dimension_numbers<[1], [0], [0], [1], [0, 0, 1, 1], [], []>} : vector<2x64xbf16>, vector<64x256xbf16>, vector<2x256xf32> -> vector<2x256xf32>
    %113 = vector.extract_strided_slice %8 {offsets = [2, 0], sizes = [2, 128], strides = [1, 1]} : vector<16x128xf32> to vector<2x128xf32>
    %114 = vector.extract_strided_slice %112 {offsets = [0, 0], sizes = [2, 128], strides = [1, 1]} : vector<2x256xf32> to vector<2x128xf32>
    %115 = arith.addf %113, %114 : vector<2x128xf32>
    %116 = vector.extract_strided_slice %9 {offsets = [12, 0], sizes = [2, 128], strides = [1, 1]} : vector<16x128xf32> to vector<2x128xf32>
    %117 = vector.extract_strided_slice %112 {offsets = [0, 128], sizes = [2, 128], strides = [1, 1]} : vector<2x256xf32> to vector<2x128xf32>
    %118 = arith.addf %116, %117 : vector<2x128xf32>
    %119 = vector.extract_strided_slice %10 {offsets = [2, 0], sizes = [2, 1], strides = [1, 1]} : vector<16x1xf32> to vector<2x1xf32>
    %120 = vector.extract_strided_slice %10 {offsets = [12, 0], sizes = [2, 1], strides = [1, 1]} : vector<16x1xf32> to vector<2x1xf32>
    %121 = vector.extract_strided_slice %115 {offsets = [0, 0], sizes = [2, 32], strides = [1, 1]} : vector<2x128xf32> to vector<2x32xf32>
    %122 = arith.negf %121 : vector<2x32xf32>
    %123 = math.exp %122 : vector<2x32xf32>
    %cst_25 = arith.constant 1.000000e+00 : f32
    %124 = vector.broadcast %cst_25 : f32 to vector<2x32xf32>
    %125 = arith.addf %124, %123 : vector<2x32xf32>
    %126 = arith.divf %124, %125 : vector<2x32xf32>
    %127 = vector.extract_strided_slice %115 {offsets = [0, 32], sizes = [2, 32], strides = [1, 1]} : vector<2x128xf32> to vector<2x32xf32>
    %128 = arith.negf %127 : vector<2x32xf32>
    %129 = math.exp %128 : vector<2x32xf32>
    %cst_26 = arith.constant 1.000000e+00 : f32
    %130 = vector.broadcast %cst_26 : f32 to vector<2x32xf32>
    %131 = arith.addf %130, %129 : vector<2x32xf32>
    %132 = arith.divf %130, %131 : vector<2x32xf32>
    %133 = vector.extract_strided_slice %115 {offsets = [0, 64], sizes = [2, 32], strides = [1, 1]} : vector<2x128xf32> to vector<2x32xf32>
    %134 = math.tanh %133 : vector<2x32xf32>
    %135 = vector.extract_strided_slice %115 {offsets = [0, 96], sizes = [2, 32], strides = [1, 1]} : vector<2x128xf32> to vector<2x32xf32>
    %136 = arith.negf %135 : vector<2x32xf32>
    %137 = math.exp %136 : vector<2x32xf32>
    %cst_27 = arith.constant 1.000000e+00 : f32
    %138 = vector.broadcast %cst_27 : f32 to vector<2x32xf32>
    %139 = arith.addf %138, %137 : vector<2x32xf32>
    %140 = arith.divf %138, %139 : vector<2x32xf32>
    %141 = arith.mulf %132, %84 : vector<2x32xf32>
    %142 = arith.mulf %126, %134 : vector<2x32xf32>
    %143 = arith.addf %141, %142 : vector<2x32xf32>
    %144 = math.tanh %143 : vector<2x32xf32>
    %145 = arith.mulf %140, %144 : vector<2x32xf32>
    %146 = vector.extract_strided_slice %118 {offsets = [0, 0], sizes = [2, 32], strides = [1, 1]} : vector<2x128xf32> to vector<2x32xf32>
    %147 = arith.negf %146 : vector<2x32xf32>
    %148 = math.exp %147 : vector<2x32xf32>
    %cst_28 = arith.constant 1.000000e+00 : f32
    %149 = vector.broadcast %cst_28 : f32 to vector<2x32xf32>
    %150 = arith.addf %149, %148 : vector<2x32xf32>
    %151 = arith.divf %149, %150 : vector<2x32xf32>
    %152 = vector.extract_strided_slice %118 {offsets = [0, 32], sizes = [2, 32], strides = [1, 1]} : vector<2x128xf32> to vector<2x32xf32>
    %153 = arith.negf %152 : vector<2x32xf32>
    %154 = math.exp %153 : vector<2x32xf32>
    %cst_29 = arith.constant 1.000000e+00 : f32
    %155 = vector.broadcast %cst_29 : f32 to vector<2x32xf32>
    %156 = arith.addf %155, %154 : vector<2x32xf32>
    %157 = arith.divf %155, %156 : vector<2x32xf32>
    %158 = vector.extract_strided_slice %118 {offsets = [0, 64], sizes = [2, 32], strides = [1, 1]} : vector<2x128xf32> to vector<2x32xf32>
    %159 = math.tanh %158 : vector<2x32xf32>
    %160 = vector.extract_strided_slice %118 {offsets = [0, 96], sizes = [2, 32], strides = [1, 1]} : vector<2x128xf32> to vector<2x32xf32>
    %161 = arith.negf %160 : vector<2x32xf32>
    %162 = math.exp %161 : vector<2x32xf32>
    %cst_30 = arith.constant 1.000000e+00 : f32
    %163 = vector.broadcast %cst_30 : f32 to vector<2x32xf32>
    %164 = arith.addf %163, %162 : vector<2x32xf32>
    %165 = arith.divf %163, %164 : vector<2x32xf32>
    %166 = arith.mulf %157, %98 : vector<2x32xf32>
    %167 = arith.mulf %151, %159 : vector<2x32xf32>
    %168 = arith.addf %166, %167 : vector<2x32xf32>
    %169 = math.tanh %168 : vector<2x32xf32>
    %170 = arith.mulf %165, %169 : vector<2x32xf32>
    %171 = vector.broadcast %119 : vector<2x1xf32> to vector<2x32xf32>
    %172 = arith.mulf %171, %143 : vector<2x32xf32>
    %cst_31 = arith.constant 1.000000e+00 : f32
    %173 = vector.broadcast %cst_31 : f32 to vector<2x1xf32>
    %174 = arith.subf %173, %119 : vector<2x1xf32>
    %175 = vector.broadcast %174 : vector<2x1xf32> to vector<2x32xf32>
    %176 = arith.mulf %175, %84 : vector<2x32xf32>
    %177 = arith.addf %172, %176 : vector<2x32xf32>
    %178 = vector.broadcast %119 : vector<2x1xf32> to vector<2x32xf32>
    %179 = arith.mulf %178, %145 : vector<2x32xf32>
    %cst_32 = arith.constant 1.000000e+00 : f32
    %180 = vector.broadcast %cst_32 : f32 to vector<2x1xf32>
    %181 = arith.subf %180, %119 : vector<2x1xf32>
    %182 = vector.broadcast %181 : vector<2x1xf32> to vector<2x32xf32>
    %183 = arith.mulf %182, %91 : vector<2x32xf32>
    %184 = arith.addf %179, %183 : vector<2x32xf32>
    %185 = vector.broadcast %120 : vector<2x1xf32> to vector<2x32xf32>
    %186 = arith.mulf %185, %168 : vector<2x32xf32>
    %cst_33 = arith.constant 1.000000e+00 : f32
    %187 = vector.broadcast %cst_33 : f32 to vector<2x1xf32>
    %188 = arith.subf %187, %120 : vector<2x1xf32>
    %189 = vector.broadcast %188 : vector<2x1xf32> to vector<2x32xf32>
    %190 = arith.mulf %189, %98 : vector<2x32xf32>
    %191 = arith.addf %186, %190 : vector<2x32xf32>
    %192 = vector.broadcast %120 : vector<2x1xf32> to vector<2x32xf32>
    %193 = arith.mulf %192, %170 : vector<2x32xf32>
    %cst_34 = arith.constant 1.000000e+00 : f32
    %194 = vector.broadcast %cst_34 : f32 to vector<2x1xf32>
    %195 = arith.subf %194, %120 : vector<2x1xf32>
    %196 = vector.broadcast %195 : vector<2x1xf32> to vector<2x32xf32>
    %197 = arith.mulf %196, %105 : vector<2x32xf32>
    %198 = arith.addf %193, %197 : vector<2x32xf32>
    %199 = vector.broadcast %119 : vector<2x1xf32> to vector<2x32xf32>
    %200 = arith.mulf %199, %145 : vector<2x32xf32>
    %201 = vector.broadcast %120 : vector<2x1xf32> to vector<2x32xf32>
    %202 = arith.mulf %201, %170 : vector<2x32xf32>
    %203 = tpu.concatenate %184, %198 in 1 : vector<2x32xf32>, vector<2x32xf32> -> vector<2x64xf32>
    %204 = arith.truncf %203 : vector<2x64xf32> to vector<2x64xbf16>
    %cst_35 = arith.constant dense<0.000000e+00> : vector<2x256xf32>
    %205 = tpu.matmul %204, %12, %cst_35 {dimension_numbers = #tpu.dot_dimension_numbers<[1], [0], [0], [1], [0, 0, 1, 1], [], []>} : vector<2x64xbf16>, vector<64x256xbf16>, vector<2x256xf32> -> vector<2x256xf32>
    %206 = vector.extract_strided_slice %8 {offsets = [4, 0], sizes = [2, 128], strides = [1, 1]} : vector<16x128xf32> to vector<2x128xf32>
    %207 = vector.extract_strided_slice %205 {offsets = [0, 0], sizes = [2, 128], strides = [1, 1]} : vector<2x256xf32> to vector<2x128xf32>
    %208 = arith.addf %206, %207 : vector<2x128xf32>
    %209 = vector.extract_strided_slice %9 {offsets = [10, 0], sizes = [2, 128], strides = [1, 1]} : vector<16x128xf32> to vector<2x128xf32>
    %210 = vector.extract_strided_slice %205 {offsets = [0, 128], sizes = [2, 128], strides = [1, 1]} : vector<2x256xf32> to vector<2x128xf32>
    %211 = arith.addf %209, %210 : vector<2x128xf32>
    %212 = vector.extract_strided_slice %10 {offsets = [4, 0], sizes = [2, 1], strides = [1, 1]} : vector<16x1xf32> to vector<2x1xf32>
    %213 = vector.extract_strided_slice %10 {offsets = [10, 0], sizes = [2, 1], strides = [1, 1]} : vector<16x1xf32> to vector<2x1xf32>
    %214 = vector.extract_strided_slice %208 {offsets = [0, 0], sizes = [2, 32], strides = [1, 1]} : vector<2x128xf32> to vector<2x32xf32>
    %215 = arith.negf %214 : vector<2x32xf32>
    %216 = math.exp %215 : vector<2x32xf32>
    %cst_36 = arith.constant 1.000000e+00 : f32
    %217 = vector.broadcast %cst_36 : f32 to vector<2x32xf32>
    %218 = arith.addf %217, %216 : vector<2x32xf32>
    %219 = arith.divf %217, %218 : vector<2x32xf32>
    %220 = vector.extract_strided_slice %208 {offsets = [0, 32], sizes = [2, 32], strides = [1, 1]} : vector<2x128xf32> to vector<2x32xf32>
    %221 = arith.negf %220 : vector<2x32xf32>
    %222 = math.exp %221 : vector<2x32xf32>
    %cst_37 = arith.constant 1.000000e+00 : f32
    %223 = vector.broadcast %cst_37 : f32 to vector<2x32xf32>
    %224 = arith.addf %223, %222 : vector<2x32xf32>
    %225 = arith.divf %223, %224 : vector<2x32xf32>
    %226 = vector.extract_strided_slice %208 {offsets = [0, 64], sizes = [2, 32], strides = [1, 1]} : vector<2x128xf32> to vector<2x32xf32>
    %227 = math.tanh %226 : vector<2x32xf32>
    %228 = vector.extract_strided_slice %208 {offsets = [0, 96], sizes = [2, 32], strides = [1, 1]} : vector<2x128xf32> to vector<2x32xf32>
    %229 = arith.negf %228 : vector<2x32xf32>
    %230 = math.exp %229 : vector<2x32xf32>
    %cst_38 = arith.constant 1.000000e+00 : f32
    %231 = vector.broadcast %cst_38 : f32 to vector<2x32xf32>
    %232 = arith.addf %231, %230 : vector<2x32xf32>
    %233 = arith.divf %231, %232 : vector<2x32xf32>
    %234 = arith.mulf %225, %177 : vector<2x32xf32>
    %235 = arith.mulf %219, %227 : vector<2x32xf32>
    %236 = arith.addf %234, %235 : vector<2x32xf32>
    %237 = math.tanh %236 : vector<2x32xf32>
    %238 = arith.mulf %233, %237 : vector<2x32xf32>
    %239 = vector.extract_strided_slice %211 {offsets = [0, 0], sizes = [2, 32], strides = [1, 1]} : vector<2x128xf32> to vector<2x32xf32>
    %240 = arith.negf %239 : vector<2x32xf32>
    %241 = math.exp %240 : vector<2x32xf32>
    %cst_39 = arith.constant 1.000000e+00 : f32
    %242 = vector.broadcast %cst_39 : f32 to vector<2x32xf32>
    %243 = arith.addf %242, %241 : vector<2x32xf32>
    %244 = arith.divf %242, %243 : vector<2x32xf32>
    %245 = vector.extract_strided_slice %211 {offsets = [0, 32], sizes = [2, 32], strides = [1, 1]} : vector<2x128xf32> to vector<2x32xf32>
    %246 = arith.negf %245 : vector<2x32xf32>
    %247 = math.exp %246 : vector<2x32xf32>
    %cst_40 = arith.constant 1.000000e+00 : f32
    %248 = vector.broadcast %cst_40 : f32 to vector<2x32xf32>
    %249 = arith.addf %248, %247 : vector<2x32xf32>
    %250 = arith.divf %248, %249 : vector<2x32xf32>
    %251 = vector.extract_strided_slice %211 {offsets = [0, 64], sizes = [2, 32], strides = [1, 1]} : vector<2x128xf32> to vector<2x32xf32>
    %252 = math.tanh %251 : vector<2x32xf32>
    %253 = vector.extract_strided_slice %211 {offsets = [0, 96], sizes = [2, 32], strides = [1, 1]} : vector<2x128xf32> to vector<2x32xf32>
    %254 = arith.negf %253 : vector<2x32xf32>
    %255 = math.exp %254 : vector<2x32xf32>
    %cst_41 = arith.constant 1.000000e+00 : f32
    %256 = vector.broadcast %cst_41 : f32 to vector<2x32xf32>
    %257 = arith.addf %256, %255 : vector<2x32xf32>
    %258 = arith.divf %256, %257 : vector<2x32xf32>
    %259 = arith.mulf %250, %191 : vector<2x32xf32>
    %260 = arith.mulf %244, %252 : vector<2x32xf32>
    %261 = arith.addf %259, %260 : vector<2x32xf32>
    %262 = math.tanh %261 : vector<2x32xf32>
    %263 = arith.mulf %258, %262 : vector<2x32xf32>
    %264 = vector.broadcast %212 : vector<2x1xf32> to vector<2x32xf32>
    %265 = arith.mulf %264, %236 : vector<2x32xf32>
    %cst_42 = arith.constant 1.000000e+00 : f32
    %266 = vector.broadcast %cst_42 : f32 to vector<2x1xf32>
    %267 = arith.subf %266, %212 : vector<2x1xf32>
    %268 = vector.broadcast %267 : vector<2x1xf32> to vector<2x32xf32>
    %269 = arith.mulf %268, %177 : vector<2x32xf32>
    %270 = arith.addf %265, %269 : vector<2x32xf32>
    %271 = vector.broadcast %212 : vector<2x1xf32> to vector<2x32xf32>
    %272 = arith.mulf %271, %238 : vector<2x32xf32>
    %cst_43 = arith.constant 1.000000e+00 : f32
    %273 = vector.broadcast %cst_43 : f32 to vector<2x1xf32>
    %274 = arith.subf %273, %212 : vector<2x1xf32>
    %275 = vector.broadcast %274 : vector<2x1xf32> to vector<2x32xf32>
    %276 = arith.mulf %275, %184 : vector<2x32xf32>
    %277 = arith.addf %272, %276 : vector<2x32xf32>
    %278 = vector.broadcast %213 : vector<2x1xf32> to vector<2x32xf32>
    %279 = arith.mulf %278, %261 : vector<2x32xf32>
    %cst_44 = arith.constant 1.000000e+00 : f32
    %280 = vector.broadcast %cst_44 : f32 to vector<2x1xf32>
    %281 = arith.subf %280, %213 : vector<2x1xf32>
    %282 = vector.broadcast %281 : vector<2x1xf32> to vector<2x32xf32>
    %283 = arith.mulf %282, %191 : vector<2x32xf32>
    %284 = arith.addf %279, %283 : vector<2x32xf32>
    %285 = vector.broadcast %213 : vector<2x1xf32> to vector<2x32xf32>
    %286 = arith.mulf %285, %263 : vector<2x32xf32>
    %cst_45 = arith.constant 1.000000e+00 : f32
    %287 = vector.broadcast %cst_45 : f32 to vector<2x1xf32>
    %288 = arith.subf %287, %213 : vector<2x1xf32>
    %289 = vector.broadcast %288 : vector<2x1xf32> to vector<2x32xf32>
    %290 = arith.mulf %289, %198 : vector<2x32xf32>
    %291 = arith.addf %286, %290 : vector<2x32xf32>
    %292 = vector.broadcast %212 : vector<2x1xf32> to vector<2x32xf32>
    %293 = arith.mulf %292, %238 : vector<2x32xf32>
    %294 = vector.broadcast %213 : vector<2x1xf32> to vector<2x32xf32>
    %295 = arith.mulf %294, %263 : vector<2x32xf32>
    %296 = tpu.concatenate %277, %291 in 1 : vector<2x32xf32>, vector<2x32xf32> -> vector<2x64xf32>
    %297 = arith.truncf %296 : vector<2x64xf32> to vector<2x64xbf16>
    %cst_46 = arith.constant dense<0.000000e+00> : vector<2x256xf32>
    %298 = tpu.matmul %297, %12, %cst_46 {dimension_numbers = #tpu.dot_dimension_numbers<[1], [0], [0], [1], [0, 0, 1, 1], [], []>} : vector<2x64xbf16>, vector<64x256xbf16>, vector<2x256xf32> -> vector<2x256xf32>
    %299 = vector.extract_strided_slice %8 {offsets = [6, 0], sizes = [2, 128], strides = [1, 1]} : vector<16x128xf32> to vector<2x128xf32>
    %300 = vector.extract_strided_slice %298 {offsets = [0, 0], sizes = [2, 128], strides = [1, 1]} : vector<2x256xf32> to vector<2x128xf32>
    %301 = arith.addf %299, %300 : vector<2x128xf32>
    %302 = vector.extract_strided_slice %9 {offsets = [8, 0], sizes = [2, 128], strides = [1, 1]} : vector<16x128xf32> to vector<2x128xf32>
    %303 = vector.extract_strided_slice %298 {offsets = [0, 128], sizes = [2, 128], strides = [1, 1]} : vector<2x256xf32> to vector<2x128xf32>
    %304 = arith.addf %302, %303 : vector<2x128xf32>
    %305 = vector.extract_strided_slice %10 {offsets = [6, 0], sizes = [2, 1], strides = [1, 1]} : vector<16x1xf32> to vector<2x1xf32>
    %306 = vector.extract_strided_slice %10 {offsets = [8, 0], sizes = [2, 1], strides = [1, 1]} : vector<16x1xf32> to vector<2x1xf32>
    %307 = vector.extract_strided_slice %301 {offsets = [0, 0], sizes = [2, 32], strides = [1, 1]} : vector<2x128xf32> to vector<2x32xf32>
    %308 = arith.negf %307 : vector<2x32xf32>
    %309 = math.exp %308 : vector<2x32xf32>
    %cst_47 = arith.constant 1.000000e+00 : f32
    %310 = vector.broadcast %cst_47 : f32 to vector<2x32xf32>
    %311 = arith.addf %310, %309 : vector<2x32xf32>
    %312 = arith.divf %310, %311 : vector<2x32xf32>
    %313 = vector.extract_strided_slice %301 {offsets = [0, 32], sizes = [2, 32], strides = [1, 1]} : vector<2x128xf32> to vector<2x32xf32>
    %314 = arith.negf %313 : vector<2x32xf32>
    %315 = math.exp %314 : vector<2x32xf32>
    %cst_48 = arith.constant 1.000000e+00 : f32
    %316 = vector.broadcast %cst_48 : f32 to vector<2x32xf32>
    %317 = arith.addf %316, %315 : vector<2x32xf32>
    %318 = arith.divf %316, %317 : vector<2x32xf32>
    %319 = vector.extract_strided_slice %301 {offsets = [0, 64], sizes = [2, 32], strides = [1, 1]} : vector<2x128xf32> to vector<2x32xf32>
    %320 = math.tanh %319 : vector<2x32xf32>
    %321 = vector.extract_strided_slice %301 {offsets = [0, 96], sizes = [2, 32], strides = [1, 1]} : vector<2x128xf32> to vector<2x32xf32>
    %322 = arith.negf %321 : vector<2x32xf32>
    %323 = math.exp %322 : vector<2x32xf32>
    %cst_49 = arith.constant 1.000000e+00 : f32
    %324 = vector.broadcast %cst_49 : f32 to vector<2x32xf32>
    %325 = arith.addf %324, %323 : vector<2x32xf32>
    %326 = arith.divf %324, %325 : vector<2x32xf32>
    %327 = arith.mulf %318, %270 : vector<2x32xf32>
    %328 = arith.mulf %312, %320 : vector<2x32xf32>
    %329 = arith.addf %327, %328 : vector<2x32xf32>
    %330 = math.tanh %329 : vector<2x32xf32>
    %331 = arith.mulf %326, %330 : vector<2x32xf32>
    %332 = vector.extract_strided_slice %304 {offsets = [0, 0], sizes = [2, 32], strides = [1, 1]} : vector<2x128xf32> to vector<2x32xf32>
    %333 = arith.negf %332 : vector<2x32xf32>
    %334 = math.exp %333 : vector<2x32xf32>
    %cst_50 = arith.constant 1.000000e+00 : f32
    %335 = vector.broadcast %cst_50 : f32 to vector<2x32xf32>
    %336 = arith.addf %335, %334 : vector<2x32xf32>
    %337 = arith.divf %335, %336 : vector<2x32xf32>
    %338 = vector.extract_strided_slice %304 {offsets = [0, 32], sizes = [2, 32], strides = [1, 1]} : vector<2x128xf32> to vector<2x32xf32>
    %339 = arith.negf %338 : vector<2x32xf32>
    %340 = math.exp %339 : vector<2x32xf32>
    %cst_51 = arith.constant 1.000000e+00 : f32
    %341 = vector.broadcast %cst_51 : f32 to vector<2x32xf32>
    %342 = arith.addf %341, %340 : vector<2x32xf32>
    %343 = arith.divf %341, %342 : vector<2x32xf32>
    %344 = vector.extract_strided_slice %304 {offsets = [0, 64], sizes = [2, 32], strides = [1, 1]} : vector<2x128xf32> to vector<2x32xf32>
    %345 = math.tanh %344 : vector<2x32xf32>
    %346 = vector.extract_strided_slice %304 {offsets = [0, 96], sizes = [2, 32], strides = [1, 1]} : vector<2x128xf32> to vector<2x32xf32>
    %347 = arith.negf %346 : vector<2x32xf32>
    %348 = math.exp %347 : vector<2x32xf32>
    %cst_52 = arith.constant 1.000000e+00 : f32
    %349 = vector.broadcast %cst_52 : f32 to vector<2x32xf32>
    %350 = arith.addf %349, %348 : vector<2x32xf32>
    %351 = arith.divf %349, %350 : vector<2x32xf32>
    %352 = arith.mulf %343, %284 : vector<2x32xf32>
    %353 = arith.mulf %337, %345 : vector<2x32xf32>
    %354 = arith.addf %352, %353 : vector<2x32xf32>
    %355 = math.tanh %354 : vector<2x32xf32>
    %356 = arith.mulf %351, %355 : vector<2x32xf32>
    %357 = vector.broadcast %305 : vector<2x1xf32> to vector<2x32xf32>
    %358 = arith.mulf %357, %329 : vector<2x32xf32>
    %cst_53 = arith.constant 1.000000e+00 : f32
    %359 = vector.broadcast %cst_53 : f32 to vector<2x1xf32>
    %360 = arith.subf %359, %305 : vector<2x1xf32>
    %361 = vector.broadcast %360 : vector<2x1xf32> to vector<2x32xf32>
    %362 = arith.mulf %361, %270 : vector<2x32xf32>
    %363 = arith.addf %358, %362 : vector<2x32xf32>
    %364 = vector.broadcast %305 : vector<2x1xf32> to vector<2x32xf32>
    %365 = arith.mulf %364, %331 : vector<2x32xf32>
    %cst_54 = arith.constant 1.000000e+00 : f32
    %366 = vector.broadcast %cst_54 : f32 to vector<2x1xf32>
    %367 = arith.subf %366, %305 : vector<2x1xf32>
    %368 = vector.broadcast %367 : vector<2x1xf32> to vector<2x32xf32>
    %369 = arith.mulf %368, %277 : vector<2x32xf32>
    %370 = arith.addf %365, %369 : vector<2x32xf32>
    %371 = vector.broadcast %306 : vector<2x1xf32> to vector<2x32xf32>
    %372 = arith.mulf %371, %354 : vector<2x32xf32>
    %cst_55 = arith.constant 1.000000e+00 : f32
    %373 = vector.broadcast %cst_55 : f32 to vector<2x1xf32>
    %374 = arith.subf %373, %306 : vector<2x1xf32>
    %375 = vector.broadcast %374 : vector<2x1xf32> to vector<2x32xf32>
    %376 = arith.mulf %375, %284 : vector<2x32xf32>
    %377 = arith.addf %372, %376 : vector<2x32xf32>
    %378 = vector.broadcast %306 : vector<2x1xf32> to vector<2x32xf32>
    %379 = arith.mulf %378, %356 : vector<2x32xf32>
    %cst_56 = arith.constant 1.000000e+00 : f32
    %380 = vector.broadcast %cst_56 : f32 to vector<2x1xf32>
    %381 = arith.subf %380, %306 : vector<2x1xf32>
    %382 = vector.broadcast %381 : vector<2x1xf32> to vector<2x32xf32>
    %383 = arith.mulf %382, %291 : vector<2x32xf32>
    %384 = arith.addf %379, %383 : vector<2x32xf32>
    %385 = vector.broadcast %305 : vector<2x1xf32> to vector<2x32xf32>
    %386 = arith.mulf %385, %331 : vector<2x32xf32>
    %387 = vector.broadcast %306 : vector<2x1xf32> to vector<2x32xf32>
    %388 = arith.mulf %387, %356 : vector<2x32xf32>
    %389 = tpu.concatenate %370, %384 in 1 : vector<2x32xf32>, vector<2x32xf32> -> vector<2x64xf32>
    %390 = arith.truncf %389 : vector<2x64xf32> to vector<2x64xbf16>
    %cst_57 = arith.constant dense<0.000000e+00> : vector<2x256xf32>
    %391 = tpu.matmul %390, %12, %cst_57 {dimension_numbers = #tpu.dot_dimension_numbers<[1], [0], [0], [1], [0, 0, 1, 1], [], []>} : vector<2x64xbf16>, vector<64x256xbf16>, vector<2x256xf32> -> vector<2x256xf32>
    %392 = vector.extract_strided_slice %8 {offsets = [8, 0], sizes = [2, 128], strides = [1, 1]} : vector<16x128xf32> to vector<2x128xf32>
    %393 = vector.extract_strided_slice %391 {offsets = [0, 0], sizes = [2, 128], strides = [1, 1]} : vector<2x256xf32> to vector<2x128xf32>
    %394 = arith.addf %392, %393 : vector<2x128xf32>
    %395 = vector.extract_strided_slice %9 {offsets = [6, 0], sizes = [2, 128], strides = [1, 1]} : vector<16x128xf32> to vector<2x128xf32>
    %396 = vector.extract_strided_slice %391 {offsets = [0, 128], sizes = [2, 128], strides = [1, 1]} : vector<2x256xf32> to vector<2x128xf32>
    %397 = arith.addf %395, %396 : vector<2x128xf32>
    %398 = vector.extract_strided_slice %10 {offsets = [8, 0], sizes = [2, 1], strides = [1, 1]} : vector<16x1xf32> to vector<2x1xf32>
    %399 = vector.extract_strided_slice %10 {offsets = [6, 0], sizes = [2, 1], strides = [1, 1]} : vector<16x1xf32> to vector<2x1xf32>
    %400 = vector.extract_strided_slice %394 {offsets = [0, 0], sizes = [2, 32], strides = [1, 1]} : vector<2x128xf32> to vector<2x32xf32>
    %401 = arith.negf %400 : vector<2x32xf32>
    %402 = math.exp %401 : vector<2x32xf32>
    %cst_58 = arith.constant 1.000000e+00 : f32
    %403 = vector.broadcast %cst_58 : f32 to vector<2x32xf32>
    %404 = arith.addf %403, %402 : vector<2x32xf32>
    %405 = arith.divf %403, %404 : vector<2x32xf32>
    %406 = vector.extract_strided_slice %394 {offsets = [0, 32], sizes = [2, 32], strides = [1, 1]} : vector<2x128xf32> to vector<2x32xf32>
    %407 = arith.negf %406 : vector<2x32xf32>
    %408 = math.exp %407 : vector<2x32xf32>
    %cst_59 = arith.constant 1.000000e+00 : f32
    %409 = vector.broadcast %cst_59 : f32 to vector<2x32xf32>
    %410 = arith.addf %409, %408 : vector<2x32xf32>
    %411 = arith.divf %409, %410 : vector<2x32xf32>
    %412 = vector.extract_strided_slice %394 {offsets = [0, 64], sizes = [2, 32], strides = [1, 1]} : vector<2x128xf32> to vector<2x32xf32>
    %413 = math.tanh %412 : vector<2x32xf32>
    %414 = vector.extract_strided_slice %394 {offsets = [0, 96], sizes = [2, 32], strides = [1, 1]} : vector<2x128xf32> to vector<2x32xf32>
    %415 = arith.negf %414 : vector<2x32xf32>
    %416 = math.exp %415 : vector<2x32xf32>
    %cst_60 = arith.constant 1.000000e+00 : f32
    %417 = vector.broadcast %cst_60 : f32 to vector<2x32xf32>
    %418 = arith.addf %417, %416 : vector<2x32xf32>
    %419 = arith.divf %417, %418 : vector<2x32xf32>
    %420 = arith.mulf %411, %363 : vector<2x32xf32>
    %421 = arith.mulf %405, %413 : vector<2x32xf32>
    %422 = arith.addf %420, %421 : vector<2x32xf32>
    %423 = math.tanh %422 : vector<2x32xf32>
    %424 = arith.mulf %419, %423 : vector<2x32xf32>
    %425 = vector.extract_strided_slice %397 {offsets = [0, 0], sizes = [2, 32], strides = [1, 1]} : vector<2x128xf32> to vector<2x32xf32>
    %426 = arith.negf %425 : vector<2x32xf32>
    %427 = math.exp %426 : vector<2x32xf32>
    %cst_61 = arith.constant 1.000000e+00 : f32
    %428 = vector.broadcast %cst_61 : f32 to vector<2x32xf32>
    %429 = arith.addf %428, %427 : vector<2x32xf32>
    %430 = arith.divf %428, %429 : vector<2x32xf32>
    %431 = vector.extract_strided_slice %397 {offsets = [0, 32], sizes = [2, 32], strides = [1, 1]} : vector<2x128xf32> to vector<2x32xf32>
    %432 = arith.negf %431 : vector<2x32xf32>
    %433 = math.exp %432 : vector<2x32xf32>
    %cst_62 = arith.constant 1.000000e+00 : f32
    %434 = vector.broadcast %cst_62 : f32 to vector<2x32xf32>
    %435 = arith.addf %434, %433 : vector<2x32xf32>
    %436 = arith.divf %434, %435 : vector<2x32xf32>
    %437 = vector.extract_strided_slice %397 {offsets = [0, 64], sizes = [2, 32], strides = [1, 1]} : vector<2x128xf32> to vector<2x32xf32>
    %438 = math.tanh %437 : vector<2x32xf32>
    %439 = vector.extract_strided_slice %397 {offsets = [0, 96], sizes = [2, 32], strides = [1, 1]} : vector<2x128xf32> to vector<2x32xf32>
    %440 = arith.negf %439 : vector<2x32xf32>
    %441 = math.exp %440 : vector<2x32xf32>
    %cst_63 = arith.constant 1.000000e+00 : f32
    %442 = vector.broadcast %cst_63 : f32 to vector<2x32xf32>
    %443 = arith.addf %442, %441 : vector<2x32xf32>
    %444 = arith.divf %442, %443 : vector<2x32xf32>
    %445 = arith.mulf %436, %377 : vector<2x32xf32>
    %446 = arith.mulf %430, %438 : vector<2x32xf32>
    %447 = arith.addf %445, %446 : vector<2x32xf32>
    %448 = math.tanh %447 : vector<2x32xf32>
    %449 = arith.mulf %444, %448 : vector<2x32xf32>
    %450 = vector.broadcast %398 : vector<2x1xf32> to vector<2x32xf32>
    %451 = arith.mulf %450, %422 : vector<2x32xf32>
    %cst_64 = arith.constant 1.000000e+00 : f32
    %452 = vector.broadcast %cst_64 : f32 to vector<2x1xf32>
    %453 = arith.subf %452, %398 : vector<2x1xf32>
    %454 = vector.broadcast %453 : vector<2x1xf32> to vector<2x32xf32>
    %455 = arith.mulf %454, %363 : vector<2x32xf32>
    %456 = arith.addf %451, %455 : vector<2x32xf32>
    %457 = vector.broadcast %398 : vector<2x1xf32> to vector<2x32xf32>
    %458 = arith.mulf %457, %424 : vector<2x32xf32>
    %cst_65 = arith.constant 1.000000e+00 : f32
    %459 = vector.broadcast %cst_65 : f32 to vector<2x1xf32>
    %460 = arith.subf %459, %398 : vector<2x1xf32>
    %461 = vector.broadcast %460 : vector<2x1xf32> to vector<2x32xf32>
    %462 = arith.mulf %461, %370 : vector<2x32xf32>
    %463 = arith.addf %458, %462 : vector<2x32xf32>
    %464 = vector.broadcast %399 : vector<2x1xf32> to vector<2x32xf32>
    %465 = arith.mulf %464, %447 : vector<2x32xf32>
    %cst_66 = arith.constant 1.000000e+00 : f32
    %466 = vector.broadcast %cst_66 : f32 to vector<2x1xf32>
    %467 = arith.subf %466, %399 : vector<2x1xf32>
    %468 = vector.broadcast %467 : vector<2x1xf32> to vector<2x32xf32>
    %469 = arith.mulf %468, %377 : vector<2x32xf32>
    %470 = arith.addf %465, %469 : vector<2x32xf32>
    %471 = vector.broadcast %399 : vector<2x1xf32> to vector<2x32xf32>
    %472 = arith.mulf %471, %449 : vector<2x32xf32>
    %cst_67 = arith.constant 1.000000e+00 : f32
    %473 = vector.broadcast %cst_67 : f32 to vector<2x1xf32>
    %474 = arith.subf %473, %399 : vector<2x1xf32>
    %475 = vector.broadcast %474 : vector<2x1xf32> to vector<2x32xf32>
    %476 = arith.mulf %475, %384 : vector<2x32xf32>
    %477 = arith.addf %472, %476 : vector<2x32xf32>
    %478 = vector.broadcast %398 : vector<2x1xf32> to vector<2x32xf32>
    %479 = arith.mulf %478, %424 : vector<2x32xf32>
    %480 = vector.broadcast %399 : vector<2x1xf32> to vector<2x32xf32>
    %481 = arith.mulf %480, %449 : vector<2x32xf32>
    %482 = tpu.concatenate %463, %477 in 1 : vector<2x32xf32>, vector<2x32xf32> -> vector<2x64xf32>
    %483 = arith.truncf %482 : vector<2x64xf32> to vector<2x64xbf16>
    %cst_68 = arith.constant dense<0.000000e+00> : vector<2x256xf32>
    %484 = tpu.matmul %483, %12, %cst_68 {dimension_numbers = #tpu.dot_dimension_numbers<[1], [0], [0], [1], [0, 0, 1, 1], [], []>} : vector<2x64xbf16>, vector<64x256xbf16>, vector<2x256xf32> -> vector<2x256xf32>
    %485 = vector.extract_strided_slice %8 {offsets = [10, 0], sizes = [2, 128], strides = [1, 1]} : vector<16x128xf32> to vector<2x128xf32>
    %486 = vector.extract_strided_slice %484 {offsets = [0, 0], sizes = [2, 128], strides = [1, 1]} : vector<2x256xf32> to vector<2x128xf32>
    %487 = arith.addf %485, %486 : vector<2x128xf32>
    %488 = vector.extract_strided_slice %9 {offsets = [4, 0], sizes = [2, 128], strides = [1, 1]} : vector<16x128xf32> to vector<2x128xf32>
    %489 = vector.extract_strided_slice %484 {offsets = [0, 128], sizes = [2, 128], strides = [1, 1]} : vector<2x256xf32> to vector<2x128xf32>
    %490 = arith.addf %488, %489 : vector<2x128xf32>
    %491 = vector.extract_strided_slice %10 {offsets = [10, 0], sizes = [2, 1], strides = [1, 1]} : vector<16x1xf32> to vector<2x1xf32>
    %492 = vector.extract_strided_slice %10 {offsets = [4, 0], sizes = [2, 1], strides = [1, 1]} : vector<16x1xf32> to vector<2x1xf32>
    %493 = vector.extract_strided_slice %487 {offsets = [0, 0], sizes = [2, 32], strides = [1, 1]} : vector<2x128xf32> to vector<2x32xf32>
    %494 = arith.negf %493 : vector<2x32xf32>
    %495 = math.exp %494 : vector<2x32xf32>
    %cst_69 = arith.constant 1.000000e+00 : f32
    %496 = vector.broadcast %cst_69 : f32 to vector<2x32xf32>
    %497 = arith.addf %496, %495 : vector<2x32xf32>
    %498 = arith.divf %496, %497 : vector<2x32xf32>
    %499 = vector.extract_strided_slice %487 {offsets = [0, 32], sizes = [2, 32], strides = [1, 1]} : vector<2x128xf32> to vector<2x32xf32>
    %500 = arith.negf %499 : vector<2x32xf32>
    %501 = math.exp %500 : vector<2x32xf32>
    %cst_70 = arith.constant 1.000000e+00 : f32
    %502 = vector.broadcast %cst_70 : f32 to vector<2x32xf32>
    %503 = arith.addf %502, %501 : vector<2x32xf32>
    %504 = arith.divf %502, %503 : vector<2x32xf32>
    %505 = vector.extract_strided_slice %487 {offsets = [0, 64], sizes = [2, 32], strides = [1, 1]} : vector<2x128xf32> to vector<2x32xf32>
    %506 = math.tanh %505 : vector<2x32xf32>
    %507 = vector.extract_strided_slice %487 {offsets = [0, 96], sizes = [2, 32], strides = [1, 1]} : vector<2x128xf32> to vector<2x32xf32>
    %508 = arith.negf %507 : vector<2x32xf32>
    %509 = math.exp %508 : vector<2x32xf32>
    %cst_71 = arith.constant 1.000000e+00 : f32
    %510 = vector.broadcast %cst_71 : f32 to vector<2x32xf32>
    %511 = arith.addf %510, %509 : vector<2x32xf32>
    %512 = arith.divf %510, %511 : vector<2x32xf32>
    %513 = arith.mulf %504, %456 : vector<2x32xf32>
    %514 = arith.mulf %498, %506 : vector<2x32xf32>
    %515 = arith.addf %513, %514 : vector<2x32xf32>
    %516 = math.tanh %515 : vector<2x32xf32>
    %517 = arith.mulf %512, %516 : vector<2x32xf32>
    %518 = vector.extract_strided_slice %490 {offsets = [0, 0], sizes = [2, 32], strides = [1, 1]} : vector<2x128xf32> to vector<2x32xf32>
    %519 = arith.negf %518 : vector<2x32xf32>
    %520 = math.exp %519 : vector<2x32xf32>
    %cst_72 = arith.constant 1.000000e+00 : f32
    %521 = vector.broadcast %cst_72 : f32 to vector<2x32xf32>
    %522 = arith.addf %521, %520 : vector<2x32xf32>
    %523 = arith.divf %521, %522 : vector<2x32xf32>
    %524 = vector.extract_strided_slice %490 {offsets = [0, 32], sizes = [2, 32], strides = [1, 1]} : vector<2x128xf32> to vector<2x32xf32>
    %525 = arith.negf %524 : vector<2x32xf32>
    %526 = math.exp %525 : vector<2x32xf32>
    %cst_73 = arith.constant 1.000000e+00 : f32
    %527 = vector.broadcast %cst_73 : f32 to vector<2x32xf32>
    %528 = arith.addf %527, %526 : vector<2x32xf32>
    %529 = arith.divf %527, %528 : vector<2x32xf32>
    %530 = vector.extract_strided_slice %490 {offsets = [0, 64], sizes = [2, 32], strides = [1, 1]} : vector<2x128xf32> to vector<2x32xf32>
    %531 = math.tanh %530 : vector<2x32xf32>
    %532 = vector.extract_strided_slice %490 {offsets = [0, 96], sizes = [2, 32], strides = [1, 1]} : vector<2x128xf32> to vector<2x32xf32>
    %533 = arith.negf %532 : vector<2x32xf32>
    %534 = math.exp %533 : vector<2x32xf32>
    %cst_74 = arith.constant 1.000000e+00 : f32
    %535 = vector.broadcast %cst_74 : f32 to vector<2x32xf32>
    %536 = arith.addf %535, %534 : vector<2x32xf32>
    %537 = arith.divf %535, %536 : vector<2x32xf32>
    %538 = arith.mulf %529, %470 : vector<2x32xf32>
    %539 = arith.mulf %523, %531 : vector<2x32xf32>
    %540 = arith.addf %538, %539 : vector<2x32xf32>
    %541 = math.tanh %540 : vector<2x32xf32>
    %542 = arith.mulf %537, %541 : vector<2x32xf32>
    %543 = vector.broadcast %491 : vector<2x1xf32> to vector<2x32xf32>
    %544 = arith.mulf %543, %515 : vector<2x32xf32>
    %cst_75 = arith.constant 1.000000e+00 : f32
    %545 = vector.broadcast %cst_75 : f32 to vector<2x1xf32>
    %546 = arith.subf %545, %491 : vector<2x1xf32>
    %547 = vector.broadcast %546 : vector<2x1xf32> to vector<2x32xf32>
    %548 = arith.mulf %547, %456 : vector<2x32xf32>
    %549 = arith.addf %544, %548 : vector<2x32xf32>
    %550 = vector.broadcast %491 : vector<2x1xf32> to vector<2x32xf32>
    %551 = arith.mulf %550, %517 : vector<2x32xf32>
    %cst_76 = arith.constant 1.000000e+00 : f32
    %552 = vector.broadcast %cst_76 : f32 to vector<2x1xf32>
    %553 = arith.subf %552, %491 : vector<2x1xf32>
    %554 = vector.broadcast %553 : vector<2x1xf32> to vector<2x32xf32>
    %555 = arith.mulf %554, %463 : vector<2x32xf32>
    %556 = arith.addf %551, %555 : vector<2x32xf32>
    %557 = vector.broadcast %492 : vector<2x1xf32> to vector<2x32xf32>
    %558 = arith.mulf %557, %540 : vector<2x32xf32>
    %cst_77 = arith.constant 1.000000e+00 : f32
    %559 = vector.broadcast %cst_77 : f32 to vector<2x1xf32>
    %560 = arith.subf %559, %492 : vector<2x1xf32>
    %561 = vector.broadcast %560 : vector<2x1xf32> to vector<2x32xf32>
    %562 = arith.mulf %561, %470 : vector<2x32xf32>
    %563 = arith.addf %558, %562 : vector<2x32xf32>
    %564 = vector.broadcast %492 : vector<2x1xf32> to vector<2x32xf32>
    %565 = arith.mulf %564, %542 : vector<2x32xf32>
    %cst_78 = arith.constant 1.000000e+00 : f32
    %566 = vector.broadcast %cst_78 : f32 to vector<2x1xf32>
    %567 = arith.subf %566, %492 : vector<2x1xf32>
    %568 = vector.broadcast %567 : vector<2x1xf32> to vector<2x32xf32>
    %569 = arith.mulf %568, %477 : vector<2x32xf32>
    %570 = arith.addf %565, %569 : vector<2x32xf32>
    %571 = vector.broadcast %491 : vector<2x1xf32> to vector<2x32xf32>
    %572 = arith.mulf %571, %517 : vector<2x32xf32>
    %573 = vector.broadcast %492 : vector<2x1xf32> to vector<2x32xf32>
    %574 = arith.mulf %573, %542 : vector<2x32xf32>
    %575 = tpu.concatenate %556, %570 in 1 : vector<2x32xf32>, vector<2x32xf32> -> vector<2x64xf32>
    %576 = arith.truncf %575 : vector<2x64xf32> to vector<2x64xbf16>
    %cst_79 = arith.constant dense<0.000000e+00> : vector<2x256xf32>
    %577 = tpu.matmul %576, %12, %cst_79 {dimension_numbers = #tpu.dot_dimension_numbers<[1], [0], [0], [1], [0, 0, 1, 1], [], []>} : vector<2x64xbf16>, vector<64x256xbf16>, vector<2x256xf32> -> vector<2x256xf32>
    %578 = vector.extract_strided_slice %8 {offsets = [12, 0], sizes = [2, 128], strides = [1, 1]} : vector<16x128xf32> to vector<2x128xf32>
    %579 = vector.extract_strided_slice %577 {offsets = [0, 0], sizes = [2, 128], strides = [1, 1]} : vector<2x256xf32> to vector<2x128xf32>
    %580 = arith.addf %578, %579 : vector<2x128xf32>
    %581 = vector.extract_strided_slice %9 {offsets = [2, 0], sizes = [2, 128], strides = [1, 1]} : vector<16x128xf32> to vector<2x128xf32>
    %582 = vector.extract_strided_slice %577 {offsets = [0, 128], sizes = [2, 128], strides = [1, 1]} : vector<2x256xf32> to vector<2x128xf32>
    %583 = arith.addf %581, %582 : vector<2x128xf32>
    %584 = vector.extract_strided_slice %10 {offsets = [12, 0], sizes = [2, 1], strides = [1, 1]} : vector<16x1xf32> to vector<2x1xf32>
    %585 = vector.extract_strided_slice %10 {offsets = [2, 0], sizes = [2, 1], strides = [1, 1]} : vector<16x1xf32> to vector<2x1xf32>
    %586 = vector.extract_strided_slice %580 {offsets = [0, 0], sizes = [2, 32], strides = [1, 1]} : vector<2x128xf32> to vector<2x32xf32>
    %587 = arith.negf %586 : vector<2x32xf32>
    %588 = math.exp %587 : vector<2x32xf32>
    %cst_80 = arith.constant 1.000000e+00 : f32
    %589 = vector.broadcast %cst_80 : f32 to vector<2x32xf32>
    %590 = arith.addf %589, %588 : vector<2x32xf32>
    %591 = arith.divf %589, %590 : vector<2x32xf32>
    %592 = vector.extract_strided_slice %580 {offsets = [0, 32], sizes = [2, 32], strides = [1, 1]} : vector<2x128xf32> to vector<2x32xf32>
    %593 = arith.negf %592 : vector<2x32xf32>
    %594 = math.exp %593 : vector<2x32xf32>
    %cst_81 = arith.constant 1.000000e+00 : f32
    %595 = vector.broadcast %cst_81 : f32 to vector<2x32xf32>
    %596 = arith.addf %595, %594 : vector<2x32xf32>
    %597 = arith.divf %595, %596 : vector<2x32xf32>
    %598 = vector.extract_strided_slice %580 {offsets = [0, 64], sizes = [2, 32], strides = [1, 1]} : vector<2x128xf32> to vector<2x32xf32>
    %599 = math.tanh %598 : vector<2x32xf32>
    %600 = vector.extract_strided_slice %580 {offsets = [0, 96], sizes = [2, 32], strides = [1, 1]} : vector<2x128xf32> to vector<2x32xf32>
    %601 = arith.negf %600 : vector<2x32xf32>
    %602 = math.exp %601 : vector<2x32xf32>
    %cst_82 = arith.constant 1.000000e+00 : f32
    %603 = vector.broadcast %cst_82 : f32 to vector<2x32xf32>
    %604 = arith.addf %603, %602 : vector<2x32xf32>
    %605 = arith.divf %603, %604 : vector<2x32xf32>
    %606 = arith.mulf %597, %549 : vector<2x32xf32>
    %607 = arith.mulf %591, %599 : vector<2x32xf32>
    %608 = arith.addf %606, %607 : vector<2x32xf32>
    %609 = math.tanh %608 : vector<2x32xf32>
    %610 = arith.mulf %605, %609 : vector<2x32xf32>
    %611 = vector.extract_strided_slice %583 {offsets = [0, 0], sizes = [2, 32], strides = [1, 1]} : vector<2x128xf32> to vector<2x32xf32>
    %612 = arith.negf %611 : vector<2x32xf32>
    %613 = math.exp %612 : vector<2x32xf32>
    %cst_83 = arith.constant 1.000000e+00 : f32
    %614 = vector.broadcast %cst_83 : f32 to vector<2x32xf32>
    %615 = arith.addf %614, %613 : vector<2x32xf32>
    %616 = arith.divf %614, %615 : vector<2x32xf32>
    %617 = vector.extract_strided_slice %583 {offsets = [0, 32], sizes = [2, 32], strides = [1, 1]} : vector<2x128xf32> to vector<2x32xf32>
    %618 = arith.negf %617 : vector<2x32xf32>
    %619 = math.exp %618 : vector<2x32xf32>
    %cst_84 = arith.constant 1.000000e+00 : f32
    %620 = vector.broadcast %cst_84 : f32 to vector<2x32xf32>
    %621 = arith.addf %620, %619 : vector<2x32xf32>
    %622 = arith.divf %620, %621 : vector<2x32xf32>
    %623 = vector.extract_strided_slice %583 {offsets = [0, 64], sizes = [2, 32], strides = [1, 1]} : vector<2x128xf32> to vector<2x32xf32>
    %624 = math.tanh %623 : vector<2x32xf32>
    %625 = vector.extract_strided_slice %583 {offsets = [0, 96], sizes = [2, 32], strides = [1, 1]} : vector<2x128xf32> to vector<2x32xf32>
    %626 = arith.negf %625 : vector<2x32xf32>
    %627 = math.exp %626 : vector<2x32xf32>
    %cst_85 = arith.constant 1.000000e+00 : f32
    %628 = vector.broadcast %cst_85 : f32 to vector<2x32xf32>
    %629 = arith.addf %628, %627 : vector<2x32xf32>
    %630 = arith.divf %628, %629 : vector<2x32xf32>
    %631 = arith.mulf %622, %563 : vector<2x32xf32>
    %632 = arith.mulf %616, %624 : vector<2x32xf32>
    %633 = arith.addf %631, %632 : vector<2x32xf32>
    %634 = math.tanh %633 : vector<2x32xf32>
    %635 = arith.mulf %630, %634 : vector<2x32xf32>
    %636 = vector.broadcast %584 : vector<2x1xf32> to vector<2x32xf32>
    %637 = arith.mulf %636, %608 : vector<2x32xf32>
    %cst_86 = arith.constant 1.000000e+00 : f32
    %638 = vector.broadcast %cst_86 : f32 to vector<2x1xf32>
    %639 = arith.subf %638, %584 : vector<2x1xf32>
    %640 = vector.broadcast %639 : vector<2x1xf32> to vector<2x32xf32>
    %641 = arith.mulf %640, %549 : vector<2x32xf32>
    %642 = arith.addf %637, %641 : vector<2x32xf32>
    %643 = vector.broadcast %584 : vector<2x1xf32> to vector<2x32xf32>
    %644 = arith.mulf %643, %610 : vector<2x32xf32>
    %cst_87 = arith.constant 1.000000e+00 : f32
    %645 = vector.broadcast %cst_87 : f32 to vector<2x1xf32>
    %646 = arith.subf %645, %584 : vector<2x1xf32>
    %647 = vector.broadcast %646 : vector<2x1xf32> to vector<2x32xf32>
    %648 = arith.mulf %647, %556 : vector<2x32xf32>
    %649 = arith.addf %644, %648 : vector<2x32xf32>
    %650 = vector.broadcast %585 : vector<2x1xf32> to vector<2x32xf32>
    %651 = arith.mulf %650, %633 : vector<2x32xf32>
    %cst_88 = arith.constant 1.000000e+00 : f32
    %652 = vector.broadcast %cst_88 : f32 to vector<2x1xf32>
    %653 = arith.subf %652, %585 : vector<2x1xf32>
    %654 = vector.broadcast %653 : vector<2x1xf32> to vector<2x32xf32>
    %655 = arith.mulf %654, %563 : vector<2x32xf32>
    %656 = arith.addf %651, %655 : vector<2x32xf32>
    %657 = vector.broadcast %585 : vector<2x1xf32> to vector<2x32xf32>
    %658 = arith.mulf %657, %635 : vector<2x32xf32>
    %cst_89 = arith.constant 1.000000e+00 : f32
    %659 = vector.broadcast %cst_89 : f32 to vector<2x1xf32>
    %660 = arith.subf %659, %585 : vector<2x1xf32>
    %661 = vector.broadcast %660 : vector<2x1xf32> to vector<2x32xf32>
    %662 = arith.mulf %661, %570 : vector<2x32xf32>
    %663 = arith.addf %658, %662 : vector<2x32xf32>
    %664 = vector.broadcast %584 : vector<2x1xf32> to vector<2x32xf32>
    %665 = arith.mulf %664, %610 : vector<2x32xf32>
    %666 = vector.broadcast %585 : vector<2x1xf32> to vector<2x32xf32>
    %667 = arith.mulf %666, %635 : vector<2x32xf32>
    %668 = tpu.concatenate %649, %663 in 1 : vector<2x32xf32>, vector<2x32xf32> -> vector<2x64xf32>
    %669 = arith.truncf %668 : vector<2x64xf32> to vector<2x64xbf16>
    %cst_90 = arith.constant dense<0.000000e+00> : vector<2x256xf32>
    %670 = tpu.matmul %669, %12, %cst_90 {dimension_numbers = #tpu.dot_dimension_numbers<[1], [0], [0], [1], [0, 0, 1, 1], [], []>} : vector<2x64xbf16>, vector<64x256xbf16>, vector<2x256xf32> -> vector<2x256xf32>
    %671 = vector.extract_strided_slice %8 {offsets = [14, 0], sizes = [2, 128], strides = [1, 1]} : vector<16x128xf32> to vector<2x128xf32>
    %672 = vector.extract_strided_slice %670 {offsets = [0, 0], sizes = [2, 128], strides = [1, 1]} : vector<2x256xf32> to vector<2x128xf32>
    %673 = arith.addf %671, %672 : vector<2x128xf32>
    %674 = vector.extract_strided_slice %9 {offsets = [0, 0], sizes = [2, 128], strides = [1, 1]} : vector<16x128xf32> to vector<2x128xf32>
    %675 = vector.extract_strided_slice %670 {offsets = [0, 128], sizes = [2, 128], strides = [1, 1]} : vector<2x256xf32> to vector<2x128xf32>
    %676 = arith.addf %674, %675 : vector<2x128xf32>
    %677 = vector.extract_strided_slice %10 {offsets = [14, 0], sizes = [2, 1], strides = [1, 1]} : vector<16x1xf32> to vector<2x1xf32>
    %678 = vector.extract_strided_slice %10 {offsets = [0, 0], sizes = [2, 1], strides = [1, 1]} : vector<16x1xf32> to vector<2x1xf32>
    %679 = vector.extract_strided_slice %673 {offsets = [0, 0], sizes = [2, 32], strides = [1, 1]} : vector<2x128xf32> to vector<2x32xf32>
    %680 = arith.negf %679 : vector<2x32xf32>
    %681 = math.exp %680 : vector<2x32xf32>
    %cst_91 = arith.constant 1.000000e+00 : f32
    %682 = vector.broadcast %cst_91 : f32 to vector<2x32xf32>
    %683 = arith.addf %682, %681 : vector<2x32xf32>
    %684 = arith.divf %682, %683 : vector<2x32xf32>
    %685 = vector.extract_strided_slice %673 {offsets = [0, 32], sizes = [2, 32], strides = [1, 1]} : vector<2x128xf32> to vector<2x32xf32>
    %686 = arith.negf %685 : vector<2x32xf32>
    %687 = math.exp %686 : vector<2x32xf32>
    %cst_92 = arith.constant 1.000000e+00 : f32
    %688 = vector.broadcast %cst_92 : f32 to vector<2x32xf32>
    %689 = arith.addf %688, %687 : vector<2x32xf32>
    %690 = arith.divf %688, %689 : vector<2x32xf32>
    %691 = vector.extract_strided_slice %673 {offsets = [0, 64], sizes = [2, 32], strides = [1, 1]} : vector<2x128xf32> to vector<2x32xf32>
    %692 = math.tanh %691 : vector<2x32xf32>
    %693 = vector.extract_strided_slice %673 {offsets = [0, 96], sizes = [2, 32], strides = [1, 1]} : vector<2x128xf32> to vector<2x32xf32>
    %694 = arith.negf %693 : vector<2x32xf32>
    %695 = math.exp %694 : vector<2x32xf32>
    %cst_93 = arith.constant 1.000000e+00 : f32
    %696 = vector.broadcast %cst_93 : f32 to vector<2x32xf32>
    %697 = arith.addf %696, %695 : vector<2x32xf32>
    %698 = arith.divf %696, %697 : vector<2x32xf32>
    %699 = arith.mulf %690, %642 : vector<2x32xf32>
    %700 = arith.mulf %684, %692 : vector<2x32xf32>
    %701 = arith.addf %699, %700 : vector<2x32xf32>
    %702 = math.tanh %701 : vector<2x32xf32>
    %703 = arith.mulf %698, %702 : vector<2x32xf32>
    %704 = vector.extract_strided_slice %676 {offsets = [0, 0], sizes = [2, 32], strides = [1, 1]} : vector<2x128xf32> to vector<2x32xf32>
    %705 = arith.negf %704 : vector<2x32xf32>
    %706 = math.exp %705 : vector<2x32xf32>
    %cst_94 = arith.constant 1.000000e+00 : f32
    %707 = vector.broadcast %cst_94 : f32 to vector<2x32xf32>
    %708 = arith.addf %707, %706 : vector<2x32xf32>
    %709 = arith.divf %707, %708 : vector<2x32xf32>
    %710 = vector.extract_strided_slice %676 {offsets = [0, 32], sizes = [2, 32], strides = [1, 1]} : vector<2x128xf32> to vector<2x32xf32>
    %711 = arith.negf %710 : vector<2x32xf32>
    %712 = math.exp %711 : vector<2x32xf32>
    %cst_95 = arith.constant 1.000000e+00 : f32
    %713 = vector.broadcast %cst_95 : f32 to vector<2x32xf32>
    %714 = arith.addf %713, %712 : vector<2x32xf32>
    %715 = arith.divf %713, %714 : vector<2x32xf32>
    %716 = vector.extract_strided_slice %676 {offsets = [0, 64], sizes = [2, 32], strides = [1, 1]} : vector<2x128xf32> to vector<2x32xf32>
    %717 = math.tanh %716 : vector<2x32xf32>
    %718 = vector.extract_strided_slice %676 {offsets = [0, 96], sizes = [2, 32], strides = [1, 1]} : vector<2x128xf32> to vector<2x32xf32>
    %719 = arith.negf %718 : vector<2x32xf32>
    %720 = math.exp %719 : vector<2x32xf32>
    %cst_96 = arith.constant 1.000000e+00 : f32
    %721 = vector.broadcast %cst_96 : f32 to vector<2x32xf32>
    %722 = arith.addf %721, %720 : vector<2x32xf32>
    %723 = arith.divf %721, %722 : vector<2x32xf32>
    %724 = arith.mulf %715, %656 : vector<2x32xf32>
    %725 = arith.mulf %709, %717 : vector<2x32xf32>
    %726 = arith.addf %724, %725 : vector<2x32xf32>
    %727 = math.tanh %726 : vector<2x32xf32>
    %728 = arith.mulf %723, %727 : vector<2x32xf32>
    %729 = vector.broadcast %677 : vector<2x1xf32> to vector<2x32xf32>
    %730 = arith.mulf %729, %703 : vector<2x32xf32>
    %731 = vector.broadcast %678 : vector<2x1xf32> to vector<2x32xf32>
    %732 = arith.mulf %731, %728 : vector<2x32xf32>
    %733 = arith.addf %107, %732 : vector<2x32xf32>
    %734 = vector.extract_strided_slice %733 {offsets = [0, 0], sizes = [1, 32], strides = [1, 1]} : vector<2x32xf32> to vector<1x32xf32>
    %c0_97 = arith.constant 0 : index
    %c0_98 = arith.constant 0 : index
    %735 = vector.load %arg11[%c0_97, %c0_98] : memref<16x32xf32, #tpu.memory_space<vmem>>, vector<1x32xf32>
    tpu.vector_store %arg11[%c0_97, %c0_98], %734 {strides = array<i32>} : memref<16x32xf32, #tpu.memory_space<vmem>>, vector<1x32xf32>,
    %736 = vector.extract_strided_slice %733 {offsets = [1, 0], sizes = [1, 32], strides = [1, 1]} : vector<2x32xf32> to vector<1x32xf32>
    %c8 = arith.constant 8 : index
    %c0_99 = arith.constant 0 : index
    %737 = vector.load %arg11[%c8, %c0_99] : memref<16x32xf32, #tpu.memory_space<vmem>>, vector<1x32xf32>
    tpu.vector_store %arg11[%c8, %c0_99], %736 {strides = array<i32>} : memref<16x32xf32, #tpu.memory_space<vmem>>, vector<1x32xf32>,
    %738 = arith.addf %200, %667 : vector<2x32xf32>
    %739 = vector.extract_strided_slice %738 {offsets = [0, 0], sizes = [1, 32], strides = [1, 1]} : vector<2x32xf32> to vector<1x32xf32>
    %c1 = arith.constant 1 : index
    %c0_100 = arith.constant 0 : index
    %740 = vector.load %arg11[%c1, %c0_100] : memref<16x32xf32, #tpu.memory_space<vmem>>, vector<1x32xf32>
    tpu.vector_store %arg11[%c1, %c0_100], %739 {strides = array<i32>} : memref<16x32xf32, #tpu.memory_space<vmem>>, vector<1x32xf32>,
    %741 = vector.extract_strided_slice %738 {offsets = [1, 0], sizes = [1, 32], strides = [1, 1]} : vector<2x32xf32> to vector<1x32xf32>
    %c9 = arith.constant 9 : index
    %c0_101 = arith.constant 0 : index
    %742 = vector.load %arg11[%c9, %c0_101] : memref<16x32xf32, #tpu.memory_space<vmem>>, vector<1x32xf32>
    tpu.vector_store %arg11[%c9, %c0_101], %741 {strides = array<i32>} : memref<16x32xf32, #tpu.memory_space<vmem>>, vector<1x32xf32>,
    %743 = arith.addf %293, %574 : vector<2x32xf32>
    %744 = vector.extract_strided_slice %743 {offsets = [0, 0], sizes = [1, 32], strides = [1, 1]} : vector<2x32xf32> to vector<1x32xf32>
    %c2 = arith.constant 2 : index
    %c0_102 = arith.constant 0 : index
    %745 = vector.load %arg11[%c2, %c0_102] : memref<16x32xf32, #tpu.memory_space<vmem>>, vector<1x32xf32>
    tpu.vector_store %arg11[%c2, %c0_102], %744 {strides = array<i32>} : memref<16x32xf32, #tpu.memory_space<vmem>>, vector<1x32xf32>,
    %746 = vector.extract_strided_slice %743 {offsets = [1, 0], sizes = [1, 32], strides = [1, 1]} : vector<2x32xf32> to vector<1x32xf32>
    %c10 = arith.constant 10 : index
    %c0_103 = arith.constant 0 : index
    %747 = vector.load %arg11[%c10, %c0_103] : memref<16x32xf32, #tpu.memory_space<vmem>>, vector<1x32xf32>
    tpu.vector_store %arg11[%c10, %c0_103], %746 {strides = array<i32>} : memref<16x32xf32, #tpu.memory_space<vmem>>, vector<1x32xf32>,
    %748 = arith.addf %386, %481 : vector<2x32xf32>
    %749 = vector.extract_strided_slice %748 {offsets = [0, 0], sizes = [1, 32], strides = [1, 1]} : vector<2x32xf32> to vector<1x32xf32>
    %c3 = arith.constant 3 : index
    %c0_104 = arith.constant 0 : index
    %750 = vector.load %arg11[%c3, %c0_104] : memref<16x32xf32, #tpu.memory_space<vmem>>, vector<1x32xf32>
    tpu.vector_store %arg11[%c3, %c0_104], %749 {strides = array<i32>} : memref<16x32xf32, #tpu.memory_space<vmem>>, vector<1x32xf32>,
    %751 = vector.extract_strided_slice %748 {offsets = [1, 0], sizes = [1, 32], strides = [1, 1]} : vector<2x32xf32> to vector<1x32xf32>
    %c11 = arith.constant 11 : index
    %c0_105 = arith.constant 0 : index
    %752 = vector.load %arg11[%c11, %c0_105] : memref<16x32xf32, #tpu.memory_space<vmem>>, vector<1x32xf32>
    tpu.vector_store %arg11[%c11, %c0_105], %751 {strides = array<i32>} : memref<16x32xf32, #tpu.memory_space<vmem>>, vector<1x32xf32>,
    %753 = arith.addf %479, %388 : vector<2x32xf32>
    %754 = vector.extract_strided_slice %753 {offsets = [0, 0], sizes = [1, 32], strides = [1, 1]} : vector<2x32xf32> to vector<1x32xf32>
    %c4 = arith.constant 4 : index
    %c0_106 = arith.constant 0 : index
    %755 = vector.load %arg11[%c4, %c0_106] : memref<16x32xf32, #tpu.memory_space<vmem>>, vector<1x32xf32>
    tpu.vector_store %arg11[%c4, %c0_106], %754 {strides = array<i32>} : memref<16x32xf32, #tpu.memory_space<vmem>>, vector<1x32xf32>,
    %756 = vector.extract_strided_slice %753 {offsets = [1, 0], sizes = [1, 32], strides = [1, 1]} : vector<2x32xf32> to vector<1x32xf32>
    %c12 = arith.constant 12 : index
    %c0_107 = arith.constant 0 : index
    %757 = vector.load %arg11[%c12, %c0_107] : memref<16x32xf32, #tpu.memory_space<vmem>>, vector<1x32xf32>
    tpu.vector_store %arg11[%c12, %c0_107], %756 {strides = array<i32>} : memref<16x32xf32, #tpu.memory_space<vmem>>, vector<1x32xf32>,
    %758 = arith.addf %572, %295 : vector<2x32xf32>
    %759 = vector.extract_strided_slice %758 {offsets = [0, 0], sizes = [1, 32], strides = [1, 1]} : vector<2x32xf32> to vector<1x32xf32>
    %c5 = arith.constant 5 : index
    %c0_108 = arith.constant 0 : index
    %760 = vector.load %arg11[%c5, %c0_108] : memref<16x32xf32, #tpu.memory_space<vmem>>, vector<1x32xf32>
    tpu.vector_store %arg11[%c5, %c0_108], %759 {strides = array<i32>} : memref<16x32xf32, #tpu.memory_space<vmem>>, vector<1x32xf32>,
    %761 = vector.extract_strided_slice %758 {offsets = [1, 0], sizes = [1, 32], strides = [1, 1]} : vector<2x32xf32> to vector<1x32xf32>
    %c13 = arith.constant 13 : index
    %c0_109 = arith.constant 0 : index
    %762 = vector.load %arg11[%c13, %c0_109] : memref<16x32xf32, #tpu.memory_space<vmem>>, vector<1x32xf32>
    tpu.vector_store %arg11[%c13, %c0_109], %761 {strides = array<i32>} : memref<16x32xf32, #tpu.memory_space<vmem>>, vector<1x32xf32>,
    %763 = arith.addf %665, %202 : vector<2x32xf32>
    %764 = vector.extract_strided_slice %763 {offsets = [0, 0], sizes = [1, 32], strides = [1, 1]} : vector<2x32xf32> to vector<1x32xf32>
    %c6 = arith.constant 6 : index
    %c0_110 = arith.constant 0 : index
    %765 = vector.load %arg11[%c6, %c0_110] : memref<16x32xf32, #tpu.memory_space<vmem>>, vector<1x32xf32>
    tpu.vector_store %arg11[%c6, %c0_110], %764 {strides = array<i32>} : memref<16x32xf32, #tpu.memory_space<vmem>>, vector<1x32xf32>,
    %766 = vector.extract_strided_slice %763 {offsets = [1, 0], sizes = [1, 32], strides = [1, 1]} : vector<2x32xf32> to vector<1x32xf32>
    %c14 = arith.constant 14 : index
    %c0_111 = arith.constant 0 : index
    %767 = vector.load %arg11[%c14, %c0_111] : memref<16x32xf32, #tpu.memory_space<vmem>>, vector<1x32xf32>
    tpu.vector_store %arg11[%c14, %c0_111], %766 {strides = array<i32>} : memref<16x32xf32, #tpu.memory_space<vmem>>, vector<1x32xf32>,
    %768 = arith.addf %730, %109 : vector<2x32xf32>
    %769 = vector.extract_strided_slice %768 {offsets = [0, 0], sizes = [1, 32], strides = [1, 1]} : vector<2x32xf32> to vector<1x32xf32>
    %c7 = arith.constant 7 : index
    %c0_112 = arith.constant 0 : index
    %770 = vector.load %arg11[%c7, %c0_112] : memref<16x32xf32, #tpu.memory_space<vmem>>, vector<1x32xf32>
    tpu.vector_store %arg11[%c7, %c0_112], %769 {strides = array<i32>} : memref<16x32xf32, #tpu.memory_space<vmem>>, vector<1x32xf32>,
    %771 = vector.extract_strided_slice %768 {offsets = [1, 0], sizes = [1, 32], strides = [1, 1]} : vector<2x32xf32> to vector<1x32xf32>
    %c15 = arith.constant 15 : index
    %c0_113 = arith.constant 0 : index
    %772 = vector.load %arg11[%c15, %c0_113] : memref<16x32xf32, #tpu.memory_space<vmem>>, vector<1x32xf32>
    tpu.vector_store %arg11[%c15, %c0_113], %771 {strides = array<i32>} : memref<16x32xf32, #tpu.memory_space<vmem>>, vector<1x32xf32>,
    %c0_114 = arith.constant 0 : index
    %c0_115 = arith.constant 0 : index
    %773 = vector.load %arg11[%c0_114, %c0_115] : memref<16x32xf32, #tpu.memory_space<vmem>>, vector<16x32xf32>
    %774 = arith.truncf %773 : vector<16x32xf32> to vector<16x32xbf16>
    %c0_116 = arith.constant 0 : index
    %c0_117 = arith.constant 0 : index
    %775 = vector.load %arg6[%c0_116, %c0_117] : memref<32x96xf32, #tpu.memory_space<vmem>>, vector<32x96xf32>
    %776 = arith.truncf %775 : vector<32x96xf32> to vector<32x96xbf16>
    %cst_118 = arith.constant dense<0.000000e+00> : vector<16x96xf32>
    %777 = tpu.matmul %774, %776, %cst_118 {dimension_numbers = #tpu.dot_dimension_numbers<[1], [0], [0], [1], [0, 0, 1, 1], [], []>} : vector<16x32xbf16>, vector<32x96xbf16>, vector<16x96xf32> -> vector<16x96xf32>
    %c0_119 = arith.constant 0 : index
    %c0_120 = arith.constant 0 : index
    %778 = vector.load %arg2[%c0_119, %c0_120] : memref<2x8xf32, #tpu.memory_space<vmem>>, vector<2x8xf32>
    %779 = vector.extract_strided_slice %778 {offsets = [0, 0], sizes = [1, 8], strides = [1, 1]} : vector<2x8xf32> to vector<1x8xf32>
    %cst_121 = arith.constant 5.000000e-01 : f32
    %780 = vector.broadcast %cst_121 : f32 to vector<1x8xf32>
    %781 = arith.cmpf ogt, %779, %780 : vector<1x8xf32>
    %782 = vector.extract_strided_slice %777 {offsets = [0, 0], sizes = [8, 8], strides = [1, 1]} : vector<16x96xf32> to vector<8x8xf32>
    %cst_122 = arith.constant 0.353553385 : f32
    %783 = vector.broadcast %cst_122 : f32 to vector<8x8xf32>
    %784 = arith.mulf %782, %783 : vector<8x8xf32>
    %785 = vector.extract_strided_slice %777 {offsets = [0, 32], sizes = [8, 8], strides = [1, 1]} : vector<16x96xf32> to vector<8x8xf32>
    %786 = vector.extract_strided_slice %777 {offsets = [0, 64], sizes = [8, 8], strides = [1, 1]} : vector<16x96xf32> to vector<8x8xf32>
    %787 = arith.truncf %784 : vector<8x8xf32> to vector<8x8xbf16>
    %788 = arith.truncf %785 : vector<8x8xf32> to vector<8x8xbf16>
    %cst_123 = arith.constant dense<0.000000e+00> : vector<8x8xf32>
    %789 = tpu.matmul %787, %788, %cst_123 {dimension_numbers = #tpu.dot_dimension_numbers<[1], [1], [0], [0], [0, 0, 1, 0], [], []>} : vector<8x8xbf16>, vector<8x8xbf16>, vector<8x8xf32> -> vector<8x8xf32>
    %cst_124 = arith.constant -1.000000e+09 : f32
    %790 = vector.shape_cast %781 : vector<1x8xi1> to vector<1x8xi1>
    %791 = vector.broadcast %790 : vector<1x8xi1> to vector<8x8xi1>
    %792 = vector.broadcast %cst_124 : f32 to vector<8x8xf32>
    %793 = arith.select %791, %792, %789 : vector<8x8xi1>, vector<8x8xf32>
    %cst_125 = arith.constant dense<0xFF800000> : vector<8xf32>
    %794 = vector.multi_reduction <maximumf>, %793, %cst_125 [1] : vector<8x8xf32> to vector<8xf32>
    %795 = vector.shape_cast %794 : vector<8xf32> to vector<8x1xf32>
    %796 = vector.broadcast %795 : vector<8x1xf32> to vector<8x8xf32>
    %797 = arith.subf %793, %796 : vector<8x8xf32>
    %798 = math.exp %797 : vector<8x8xf32>
    %cst_126 = arith.constant dense<0.000000e+00> : vector<8xf32>
    %799 = vector.multi_reduction <add>, %798, %cst_126 [1] : vector<8x8xf32> to vector<8xf32>
    %800 = vector.shape_cast %799 : vector<8xf32> to vector<8x1xf32>
    %801 = tpu.reciprocal %800 {approx = true} : vector<8x1xf32> -> vector<8x1xf32>
    %802 = vector.broadcast %801 : vector<8x1xf32> to vector<8x8xf32>
    %803 = arith.mulf %798, %802 : vector<8x8xf32>
    %804 = arith.truncf %803 : vector<8x8xf32> to vector<8x8xbf16>
    %805 = arith.truncf %786 : vector<8x8xf32> to vector<8x8xbf16>
    %cst_127 = arith.constant dense<0.000000e+00> : vector<8x8xf32>
    %806 = tpu.matmul %804, %805, %cst_127 {dimension_numbers = #tpu.dot_dimension_numbers<[1], [0], [0], [1], [0, 0, 1, 1], [], []>} : vector<8x8xbf16>, vector<8x8xbf16>, vector<8x8xf32> -> vector<8x8xf32>
    %c0_128 = arith.constant 0 : index
    %c0_129 = arith.constant 0 : index
    %807 = vector.load %arg12[%c0_128, %c0_129] : memref<16x32xf32, #tpu.memory_space<vmem>>, vector<8x8xf32>
    tpu.vector_store %arg12[%c0_128, %c0_129], %806 {strides = array<i32>} : memref<16x32xf32, #tpu.memory_space<vmem>>, vector<8x8xf32>,
    %808 = vector.extract_strided_slice %777 {offsets = [0, 8], sizes = [8, 8], strides = [1, 1]} : vector<16x96xf32> to vector<8x8xf32>
    %cst_130 = arith.constant 0.353553385 : f32
    %809 = vector.broadcast %cst_130 : f32 to vector<8x8xf32>
    %810 = arith.mulf %808, %809 : vector<8x8xf32>
    %811 = vector.extract_strided_slice %777 {offsets = [0, 40], sizes = [8, 8], strides = [1, 1]} : vector<16x96xf32> to vector<8x8xf32>
    %812 = vector.extract_strided_slice %777 {offsets = [0, 72], sizes = [8, 8], strides = [1, 1]} : vector<16x96xf32> to vector<8x8xf32>
    %813 = arith.truncf %810 : vector<8x8xf32> to vector<8x8xbf16>
    %814 = arith.truncf %811 : vector<8x8xf32> to vector<8x8xbf16>
    %cst_131 = arith.constant dense<0.000000e+00> : vector<8x8xf32>
    %815 = tpu.matmul %813, %814, %cst_131 {dimension_numbers = #tpu.dot_dimension_numbers<[1], [1], [0], [0], [0, 0, 1, 0], [], []>} : vector<8x8xbf16>, vector<8x8xbf16>, vector<8x8xf32> -> vector<8x8xf32>
    %cst_132 = arith.constant -1.000000e+09 : f32
    %816 = vector.shape_cast %781 : vector<1x8xi1> to vector<1x8xi1>
    %817 = vector.broadcast %816 : vector<1x8xi1> to vector<8x8xi1>
    %818 = vector.broadcast %cst_132 : f32 to vector<8x8xf32>
    %819 = arith.select %817, %818, %815 : vector<8x8xi1>, vector<8x8xf32>
    %cst_133 = arith.constant dense<0xFF800000> : vector<8xf32>
    %820 = vector.multi_reduction <maximumf>, %819, %cst_133 [1] : vector<8x8xf32> to vector<8xf32>
    %821 = vector.shape_cast %820 : vector<8xf32> to vector<8x1xf32>
    %822 = vector.broadcast %821 : vector<8x1xf32> to vector<8x8xf32>
    %823 = arith.subf %819, %822 : vector<8x8xf32>
    %824 = math.exp %823 : vector<8x8xf32>
    %cst_134 = arith.constant dense<0.000000e+00> : vector<8xf32>
    %825 = vector.multi_reduction <add>, %824, %cst_134 [1] : vector<8x8xf32> to vector<8xf32>
    %826 = vector.shape_cast %825 : vector<8xf32> to vector<8x1xf32>
    %827 = tpu.reciprocal %826 {approx = true} : vector<8x1xf32> -> vector<8x1xf32>
    %828 = vector.broadcast %827 : vector<8x1xf32> to vector<8x8xf32>
    %829 = arith.mulf %824, %828 : vector<8x8xf32>
    %830 = arith.truncf %829 : vector<8x8xf32> to vector<8x8xbf16>
    %831 = arith.truncf %812 : vector<8x8xf32> to vector<8x8xbf16>
    %cst_135 = arith.constant dense<0.000000e+00> : vector<8x8xf32>
    %832 = tpu.matmul %830, %831, %cst_135 {dimension_numbers = #tpu.dot_dimension_numbers<[1], [0], [0], [1], [0, 0, 1, 1], [], []>} : vector<8x8xbf16>, vector<8x8xbf16>, vector<8x8xf32> -> vector<8x8xf32>
    %c0_136 = arith.constant 0 : index
    %c8_137 = arith.constant 8 : index
    %833 = vector.load %arg12[%c0_136, %c8_137] : memref<16x32xf32, #tpu.memory_space<vmem>>, vector<8x8xf32>
    tpu.vector_store %arg12[%c0_136, %c8_137], %832 {strides = array<i32>} : memref<16x32xf32, #tpu.memory_space<vmem>>, vector<8x8xf32>,
    %834 = vector.extract_strided_slice %777 {offsets = [0, 16], sizes = [8, 8], strides = [1, 1]} : vector<16x96xf32> to vector<8x8xf32>
    %cst_138 = arith.constant 0.353553385 : f32
    %835 = vector.broadcast %cst_138 : f32 to vector<8x8xf32>
    %836 = arith.mulf %834, %835 : vector<8x8xf32>
    %837 = vector.extract_strided_slice %777 {offsets = [0, 48], sizes = [8, 8], strides = [1, 1]} : vector<16x96xf32> to vector<8x8xf32>
    %838 = vector.extract_strided_slice %777 {offsets = [0, 80], sizes = [8, 8], strides = [1, 1]} : vector<16x96xf32> to vector<8x8xf32>
    %839 = arith.truncf %836 : vector<8x8xf32> to vector<8x8xbf16>
    %840 = arith.truncf %837 : vector<8x8xf32> to vector<8x8xbf16>
    %cst_139 = arith.constant dense<0.000000e+00> : vector<8x8xf32>
    %841 = tpu.matmul %839, %840, %cst_139 {dimension_numbers = #tpu.dot_dimension_numbers<[1], [1], [0], [0], [0, 0, 1, 0], [], []>} : vector<8x8xbf16>, vector<8x8xbf16>, vector<8x8xf32> -> vector<8x8xf32>
    %cst_140 = arith.constant -1.000000e+09 : f32
    %842 = vector.shape_cast %781 : vector<1x8xi1> to vector<1x8xi1>
    %843 = vector.broadcast %842 : vector<1x8xi1> to vector<8x8xi1>
    %844 = vector.broadcast %cst_140 : f32 to vector<8x8xf32>
    %845 = arith.select %843, %844, %841 : vector<8x8xi1>, vector<8x8xf32>
    %cst_141 = arith.constant dense<0xFF800000> : vector<8xf32>
    %846 = vector.multi_reduction <maximumf>, %845, %cst_141 [1] : vector<8x8xf32> to vector<8xf32>
    %847 = vector.shape_cast %846 : vector<8xf32> to vector<8x1xf32>
    %848 = vector.broadcast %847 : vector<8x1xf32> to vector<8x8xf32>
    %849 = arith.subf %845, %848 : vector<8x8xf32>
    %850 = math.exp %849 : vector<8x8xf32>
    %cst_142 = arith.constant dense<0.000000e+00> : vector<8xf32>
    %851 = vector.multi_reduction <add>, %850, %cst_142 [1] : vector<8x8xf32> to vector<8xf32>
    %852 = vector.shape_cast %851 : vector<8xf32> to vector<8x1xf32>
    %853 = tpu.reciprocal %852 {approx = true} : vector<8x1xf32> -> vector<8x1xf32>
    %854 = vector.broadcast %853 : vector<8x1xf32> to vector<8x8xf32>
    %855 = arith.mulf %850, %854 : vector<8x8xf32>
    %856 = arith.truncf %855 : vector<8x8xf32> to vector<8x8xbf16>
    %857 = arith.truncf %838 : vector<8x8xf32> to vector<8x8xbf16>
    %cst_143 = arith.constant dense<0.000000e+00> : vector<8x8xf32>
    %858 = tpu.matmul %856, %857, %cst_143 {dimension_numbers = #tpu.dot_dimension_numbers<[1], [0], [0], [1], [0, 0, 1, 1], [], []>} : vector<8x8xbf16>, vector<8x8xbf16>, vector<8x8xf32> -> vector<8x8xf32>
    %c0_144 = arith.constant 0 : index
    %c16 = arith.constant 16 : index
    %859 = vector.load %arg12[%c0_144, %c16] : memref<16x32xf32, #tpu.memory_space<vmem>>, vector<8x8xf32>
    tpu.vector_store %arg12[%c0_144, %c16], %858 {strides = array<i32>} : memref<16x32xf32, #tpu.memory_space<vmem>>, vector<8x8xf32>,
    %860 = vector.extract_strided_slice %777 {offsets = [0, 24], sizes = [8, 8], strides = [1, 1]} : vector<16x96xf32> to vector<8x8xf32>
    %cst_145 = arith.constant 0.353553385 : f32
    %861 = vector.broadcast %cst_145 : f32 to vector<8x8xf32>
    %862 = arith.mulf %860, %861 : vector<8x8xf32>
    %863 = vector.extract_strided_slice %777 {offsets = [0, 56], sizes = [8, 8], strides = [1, 1]} : vector<16x96xf32> to vector<8x8xf32>
    %864 = vector.extract_strided_slice %777 {offsets = [0, 88], sizes = [8, 8], strides = [1, 1]} : vector<16x96xf32> to vector<8x8xf32>
    %865 = arith.truncf %862 : vector<8x8xf32> to vector<8x8xbf16>
    %866 = arith.truncf %863 : vector<8x8xf32> to vector<8x8xbf16>
    %cst_146 = arith.constant dense<0.000000e+00> : vector<8x8xf32>
    %867 = tpu.matmul %865, %866, %cst_146 {dimension_numbers = #tpu.dot_dimension_numbers<[1], [1], [0], [0], [0, 0, 1, 0], [], []>} : vector<8x8xbf16>, vector<8x8xbf16>, vector<8x8xf32> -> vector<8x8xf32>
    %cst_147 = arith.constant -1.000000e+09 : f32
    %868 = vector.shape_cast %781 : vector<1x8xi1> to vector<1x8xi1>
    %869 = vector.broadcast %868 : vector<1x8xi1> to vector<8x8xi1>
    %870 = vector.broadcast %cst_147 : f32 to vector<8x8xf32>
    %871 = arith.select %869, %870, %867 : vector<8x8xi1>, vector<8x8xf32>
    %cst_148 = arith.constant dense<0xFF800000> : vector<8xf32>
    %872 = vector.multi_reduction <maximumf>, %871, %cst_148 [1] : vector<8x8xf32> to vector<8xf32>
    %873 = vector.shape_cast %872 : vector<8xf32> to vector<8x1xf32>
    %874 = vector.broadcast %873 : vector<8x1xf32> to vector<8x8xf32>
    %875 = arith.subf %871, %874 : vector<8x8xf32>
    %876 = math.exp %875 : vector<8x8xf32>
    %cst_149 = arith.constant dense<0.000000e+00> : vector<8xf32>
    %877 = vector.multi_reduction <add>, %876, %cst_149 [1] : vector<8x8xf32> to vector<8xf32>
    %878 = vector.shape_cast %877 : vector<8xf32> to vector<8x1xf32>
    %879 = tpu.reciprocal %878 {approx = true} : vector<8x1xf32> -> vector<8x1xf32>
    %880 = vector.broadcast %879 : vector<8x1xf32> to vector<8x8xf32>
    %881 = arith.mulf %876, %880 : vector<8x8xf32>
    %882 = arith.truncf %881 : vector<8x8xf32> to vector<8x8xbf16>
    %883 = arith.truncf %864 : vector<8x8xf32> to vector<8x8xbf16>
    %cst_150 = arith.constant dense<0.000000e+00> : vector<8x8xf32>
    %884 = tpu.matmul %882, %883, %cst_150 {dimension_numbers = #tpu.dot_dimension_numbers<[1], [0], [0], [1], [0, 0, 1, 1], [], []>} : vector<8x8xbf16>, vector<8x8xbf16>, vector<8x8xf32> -> vector<8x8xf32>
    %c0_151 = arith.constant 0 : index
    %c24 = arith.constant 24 : index
    %885 = vector.load %arg12[%c0_151, %c24] : memref<16x32xf32, #tpu.memory_space<vmem>>, vector<8x8xf32>
    tpu.vector_store %arg12[%c0_151, %c24], %884 {strides = array<i32>} : memref<16x32xf32, #tpu.memory_space<vmem>>, vector<8x8xf32>,
    %886 = vector.extract_strided_slice %778 {offsets = [1, 0], sizes = [1, 8], strides = [1, 1]} : vector<2x8xf32> to vector<1x8xf32>
    %cst_152 = arith.constant 5.000000e-01 : f32
    %887 = vector.broadcast %cst_152 : f32 to vector<1x8xf32>
    %888 = arith.cmpf ogt, %886, %887 : vector<1x8xf32>
    %889 = vector.extract_strided_slice %777 {offsets = [8, 0], sizes = [8, 8], strides = [1, 1]} : vector<16x96xf32> to vector<8x8xf32>
    %cst_153 = arith.constant 0.353553385 : f32
    %890 = vector.broadcast %cst_153 : f32 to vector<8x8xf32>
    %891 = arith.mulf %889, %890 : vector<8x8xf32>
    %892 = vector.extract_strided_slice %777 {offsets = [8, 32], sizes = [8, 8], strides = [1, 1]} : vector<16x96xf32> to vector<8x8xf32>
    %893 = vector.extract_strided_slice %777 {offsets = [8, 64], sizes = [8, 8], strides = [1, 1]} : vector<16x96xf32> to vector<8x8xf32>
    %894 = arith.truncf %891 : vector<8x8xf32> to vector<8x8xbf16>
    %895 = arith.truncf %892 : vector<8x8xf32> to vector<8x8xbf16>
    %cst_154 = arith.constant dense<0.000000e+00> : vector<8x8xf32>
    %896 = tpu.matmul %894, %895, %cst_154 {dimension_numbers = #tpu.dot_dimension_numbers<[1], [1], [0], [0], [0, 0, 1, 0], [], []>} : vector<8x8xbf16>, vector<8x8xbf16>, vector<8x8xf32> -> vector<8x8xf32>
    %cst_155 = arith.constant -1.000000e+09 : f32
    %897 = vector.shape_cast %888 : vector<1x8xi1> to vector<1x8xi1>
    %898 = vector.broadcast %897 : vector<1x8xi1> to vector<8x8xi1>
    %899 = vector.broadcast %cst_155 : f32 to vector<8x8xf32>
    %900 = arith.select %898, %899, %896 : vector<8x8xi1>, vector<8x8xf32>
    %cst_156 = arith.constant dense<0xFF800000> : vector<8xf32>
    %901 = vector.multi_reduction <maximumf>, %900, %cst_156 [1] : vector<8x8xf32> to vector<8xf32>
    %902 = vector.shape_cast %901 : vector<8xf32> to vector<8x1xf32>
    %903 = vector.broadcast %902 : vector<8x1xf32> to vector<8x8xf32>
    %904 = arith.subf %900, %903 : vector<8x8xf32>
    %905 = math.exp %904 : vector<8x8xf32>
    %cst_157 = arith.constant dense<0.000000e+00> : vector<8xf32>
    %906 = vector.multi_reduction <add>, %905, %cst_157 [1] : vector<8x8xf32> to vector<8xf32>
    %907 = vector.shape_cast %906 : vector<8xf32> to vector<8x1xf32>
    %908 = tpu.reciprocal %907 {approx = true} : vector<8x1xf32> -> vector<8x1xf32>
    %909 = vector.broadcast %908 : vector<8x1xf32> to vector<8x8xf32>
    %910 = arith.mulf %905, %909 : vector<8x8xf32>
    %911 = arith.truncf %910 : vector<8x8xf32> to vector<8x8xbf16>
    %912 = arith.truncf %893 : vector<8x8xf32> to vector<8x8xbf16>
    %cst_158 = arith.constant dense<0.000000e+00> : vector<8x8xf32>
    %913 = tpu.matmul %911, %912, %cst_158 {dimension_numbers = #tpu.dot_dimension_numbers<[1], [0], [0], [1], [0, 0, 1, 1], [], []>} : vector<8x8xbf16>, vector<8x8xbf16>, vector<8x8xf32> -> vector<8x8xf32>
    %c8_159 = arith.constant 8 : index
    %c0_160 = arith.constant 0 : index
    %914 = vector.load %arg12[%c8_159, %c0_160] : memref<16x32xf32, #tpu.memory_space<vmem>>, vector<8x8xf32>
    tpu.vector_store %arg12[%c8_159, %c0_160], %913 {strides = array<i32>} : memref<16x32xf32, #tpu.memory_space<vmem>>, vector<8x8xf32>,
    %915 = vector.extract_strided_slice %777 {offsets = [8, 8], sizes = [8, 8], strides = [1, 1]} : vector<16x96xf32> to vector<8x8xf32>
    %cst_161 = arith.constant 0.353553385 : f32
    %916 = vector.broadcast %cst_161 : f32 to vector<8x8xf32>
    %917 = arith.mulf %915, %916 : vector<8x8xf32>
    %918 = vector.extract_strided_slice %777 {offsets = [8, 40], sizes = [8, 8], strides = [1, 1]} : vector<16x96xf32> to vector<8x8xf32>
    %919 = vector.extract_strided_slice %777 {offsets = [8, 72], sizes = [8, 8], strides = [1, 1]} : vector<16x96xf32> to vector<8x8xf32>
    %920 = arith.truncf %917 : vector<8x8xf32> to vector<8x8xbf16>
    %921 = arith.truncf %918 : vector<8x8xf32> to vector<8x8xbf16>
    %cst_162 = arith.constant dense<0.000000e+00> : vector<8x8xf32>
    %922 = tpu.matmul %920, %921, %cst_162 {dimension_numbers = #tpu.dot_dimension_numbers<[1], [1], [0], [0], [0, 0, 1, 0], [], []>} : vector<8x8xbf16>, vector<8x8xbf16>, vector<8x8xf32> -> vector<8x8xf32>
    %cst_163 = arith.constant -1.000000e+09 : f32
    %923 = vector.shape_cast %888 : vector<1x8xi1> to vector<1x8xi1>
    %924 = vector.broadcast %923 : vector<1x8xi1> to vector<8x8xi1>
    %925 = vector.broadcast %cst_163 : f32 to vector<8x8xf32>
    %926 = arith.select %924, %925, %922 : vector<8x8xi1>, vector<8x8xf32>
    %cst_164 = arith.constant dense<0xFF800000> : vector<8xf32>
    %927 = vector.multi_reduction <maximumf>, %926, %cst_164 [1] : vector<8x8xf32> to vector<8xf32>
    %928 = vector.shape_cast %927 : vector<8xf32> to vector<8x1xf32>
    %929 = vector.broadcast %928 : vector<8x1xf32> to vector<8x8xf32>
    %930 = arith.subf %926, %929 : vector<8x8xf32>
    %931 = math.exp %930 : vector<8x8xf32>
    %cst_165 = arith.constant dense<0.000000e+00> : vector<8xf32>
    %932 = vector.multi_reduction <add>, %931, %cst_165 [1] : vector<8x8xf32> to vector<8xf32>
    %933 = vector.shape_cast %932 : vector<8xf32> to vector<8x1xf32>
    %934 = tpu.reciprocal %933 {approx = true} : vector<8x1xf32> -> vector<8x1xf32>
    %935 = vector.broadcast %934 : vector<8x1xf32> to vector<8x8xf32>
    %936 = arith.mulf %931, %935 : vector<8x8xf32>
    %937 = arith.truncf %936 : vector<8x8xf32> to vector<8x8xbf16>
    %938 = arith.truncf %919 : vector<8x8xf32> to vector<8x8xbf16>
    %cst_166 = arith.constant dense<0.000000e+00> : vector<8x8xf32>
    %939 = tpu.matmul %937, %938, %cst_166 {dimension_numbers = #tpu.dot_dimension_numbers<[1], [0], [0], [1], [0, 0, 1, 1], [], []>} : vector<8x8xbf16>, vector<8x8xbf16>, vector<8x8xf32> -> vector<8x8xf32>
    %c8_167 = arith.constant 8 : index
    %c8_168 = arith.constant 8 : index
    %940 = vector.load %arg12[%c8_167, %c8_168] : memref<16x32xf32, #tpu.memory_space<vmem>>, vector<8x8xf32>
    tpu.vector_store %arg12[%c8_167, %c8_168], %939 {strides = array<i32>} : memref<16x32xf32, #tpu.memory_space<vmem>>, vector<8x8xf32>,
    %941 = vector.extract_strided_slice %777 {offsets = [8, 16], sizes = [8, 8], strides = [1, 1]} : vector<16x96xf32> to vector<8x8xf32>
    %cst_169 = arith.constant 0.353553385 : f32
    %942 = vector.broadcast %cst_169 : f32 to vector<8x8xf32>
    %943 = arith.mulf %941, %942 : vector<8x8xf32>
    %944 = vector.extract_strided_slice %777 {offsets = [8, 48], sizes = [8, 8], strides = [1, 1]} : vector<16x96xf32> to vector<8x8xf32>
    %945 = vector.extract_strided_slice %777 {offsets = [8, 80], sizes = [8, 8], strides = [1, 1]} : vector<16x96xf32> to vector<8x8xf32>
    %946 = arith.truncf %943 : vector<8x8xf32> to vector<8x8xbf16>
    %947 = arith.truncf %944 : vector<8x8xf32> to vector<8x8xbf16>
    %cst_170 = arith.constant dense<0.000000e+00> : vector<8x8xf32>
    %948 = tpu.matmul %946, %947, %cst_170 {dimension_numbers = #tpu.dot_dimension_numbers<[1], [1], [0], [0], [0, 0, 1, 0], [], []>} : vector<8x8xbf16>, vector<8x8xbf16>, vector<8x8xf32> -> vector<8x8xf32>
    %cst_171 = arith.constant -1.000000e+09 : f32
    %949 = vector.shape_cast %888 : vector<1x8xi1> to vector<1x8xi1>
    %950 = vector.broadcast %949 : vector<1x8xi1> to vector<8x8xi1>
    %951 = vector.broadcast %cst_171 : f32 to vector<8x8xf32>
    %952 = arith.select %950, %951, %948 : vector<8x8xi1>, vector<8x8xf32>
    %cst_172 = arith.constant dense<0xFF800000> : vector<8xf32>
    %953 = vector.multi_reduction <maximumf>, %952, %cst_172 [1] : vector<8x8xf32> to vector<8xf32>
    %954 = vector.shape_cast %953 : vector<8xf32> to vector<8x1xf32>
    %955 = vector.broadcast %954 : vector<8x1xf32> to vector<8x8xf32>
    %956 = arith.subf %952, %955 : vector<8x8xf32>
    %957 = math.exp %956 : vector<8x8xf32>
    %cst_173 = arith.constant dense<0.000000e+00> : vector<8xf32>
    %958 = vector.multi_reduction <add>, %957, %cst_173 [1] : vector<8x8xf32> to vector<8xf32>
    %959 = vector.shape_cast %958 : vector<8xf32> to vector<8x1xf32>
    %960 = tpu.reciprocal %959 {approx = true} : vector<8x1xf32> -> vector<8x1xf32>
    %961 = vector.broadcast %960 : vector<8x1xf32> to vector<8x8xf32>
    %962 = arith.mulf %957, %961 : vector<8x8xf32>
    %963 = arith.truncf %962 : vector<8x8xf32> to vector<8x8xbf16>
    %964 = arith.truncf %945 : vector<8x8xf32> to vector<8x8xbf16>
    %cst_174 = arith.constant dense<0.000000e+00> : vector<8x8xf32>
    %965 = tpu.matmul %963, %964, %cst_174 {dimension_numbers = #tpu.dot_dimension_numbers<[1], [0], [0], [1], [0, 0, 1, 1], [], []>} : vector<8x8xbf16>, vector<8x8xbf16>, vector<8x8xf32> -> vector<8x8xf32>
    %c8_175 = arith.constant 8 : index
    %c16_176 = arith.constant 16 : index
    %966 = vector.load %arg12[%c8_175, %c16_176] : memref<16x32xf32, #tpu.memory_space<vmem>>, vector<8x8xf32>
    tpu.vector_store %arg12[%c8_175, %c16_176], %965 {strides = array<i32>} : memref<16x32xf32, #tpu.memory_space<vmem>>, vector<8x8xf32>,
    %967 = vector.extract_strided_slice %777 {offsets = [8, 24], sizes = [8, 8], strides = [1, 1]} : vector<16x96xf32> to vector<8x8xf32>
    %cst_177 = arith.constant 0.353553385 : f32
    %968 = vector.broadcast %cst_177 : f32 to vector<8x8xf32>
    %969 = arith.mulf %967, %968 : vector<8x8xf32>
    %970 = vector.extract_strided_slice %777 {offsets = [8, 56], sizes = [8, 8], strides = [1, 1]} : vector<16x96xf32> to vector<8x8xf32>
    %971 = vector.extract_strided_slice %777 {offsets = [8, 88], sizes = [8, 8], strides = [1, 1]} : vector<16x96xf32> to vector<8x8xf32>
    %972 = arith.truncf %969 : vector<8x8xf32> to vector<8x8xbf16>
    %973 = arith.truncf %970 : vector<8x8xf32> to vector<8x8xbf16>
    %cst_178 = arith.constant dense<0.000000e+00> : vector<8x8xf32>
    %974 = tpu.matmul %972, %973, %cst_178 {dimension_numbers = #tpu.dot_dimension_numbers<[1], [1], [0], [0], [0, 0, 1, 0], [], []>} : vector<8x8xbf16>, vector<8x8xbf16>, vector<8x8xf32> -> vector<8x8xf32>
    %cst_179 = arith.constant -1.000000e+09 : f32
    %975 = vector.shape_cast %888 : vector<1x8xi1> to vector<1x8xi1>
    %976 = vector.broadcast %975 : vector<1x8xi1> to vector<8x8xi1>
    %977 = vector.broadcast %cst_179 : f32 to vector<8x8xf32>
    %978 = arith.select %976, %977, %974 : vector<8x8xi1>, vector<8x8xf32>
    %cst_180 = arith.constant dense<0xFF800000> : vector<8xf32>
    %979 = vector.multi_reduction <maximumf>, %978, %cst_180 [1] : vector<8x8xf32> to vector<8xf32>
    %980 = vector.shape_cast %979 : vector<8xf32> to vector<8x1xf32>
    %981 = vector.broadcast %980 : vector<8x1xf32> to vector<8x8xf32>
    %982 = arith.subf %978, %981 : vector<8x8xf32>
    %983 = math.exp %982 : vector<8x8xf32>
    %cst_181 = arith.constant dense<0.000000e+00> : vector<8xf32>
    %984 = vector.multi_reduction <add>, %983, %cst_181 [1] : vector<8x8xf32> to vector<8xf32>
    %985 = vector.shape_cast %984 : vector<8xf32> to vector<8x1xf32>
    %986 = tpu.reciprocal %985 {approx = true} : vector<8x1xf32> -> vector<8x1xf32>
    %987 = vector.broadcast %986 : vector<8x1xf32> to vector<8x8xf32>
    %988 = arith.mulf %983, %987 : vector<8x8xf32>
    %989 = arith.truncf %988 : vector<8x8xf32> to vector<8x8xbf16>
    %990 = arith.truncf %971 : vector<8x8xf32> to vector<8x8xbf16>
    %cst_182 = arith.constant dense<0.000000e+00> : vector<8x8xf32>
    %991 = tpu.matmul %989, %990, %cst_182 {dimension_numbers = #tpu.dot_dimension_numbers<[1], [0], [0], [1], [0, 0, 1, 1], [], []>} : vector<8x8xbf16>, vector<8x8xbf16>, vector<8x8xf32> -> vector<8x8xf32>
    %c8_183 = arith.constant 8 : index
    %c24_184 = arith.constant 24 : index
    %992 = vector.load %arg12[%c8_183, %c24_184] : memref<16x32xf32, #tpu.memory_space<vmem>>, vector<8x8xf32>
    tpu.vector_store %arg12[%c8_183, %c24_184], %991 {strides = array<i32>} : memref<16x32xf32, #tpu.memory_space<vmem>>, vector<8x8xf32>,
    %c0_185 = arith.constant 0 : index
    %c0_186 = arith.constant 0 : index
    %993 = vector.load %arg12[%c0_185, %c0_186] : memref<16x32xf32, #tpu.memory_space<vmem>>, vector<16x32xf32>
    %994 = arith.truncf %993 : vector<16x32xf32> to vector<16x32xbf16>
    %c0_187 = arith.constant 0 : index
    %c0_188 = arith.constant 0 : index
    %995 = vector.load %arg7[%c0_187, %c0_188] : memref<32x32xf32, #tpu.memory_space<vmem>>, vector<32x32xf32>
    %996 = arith.truncf %995 : vector<32x32xf32> to vector<32x32xbf16>
    %cst_189 = arith.constant dense<0.000000e+00> : vector<16x32xf32>
    %997 = tpu.matmul %994, %996, %cst_189 {dimension_numbers = #tpu.dot_dimension_numbers<[1], [0], [0], [1], [0, 0, 1, 1], [], []>} : vector<16x32xbf16>, vector<32x32xbf16>, vector<16x32xf32> -> vector<16x32xf32>
    %998 = vector.extract_strided_slice %997 {offsets = [0, 0], sizes = [1, 32], strides = [1, 1]} : vector<16x32xf32> to vector<1x32xf32>
    %c0_190 = arith.constant 0 : index
    %c0_191 = arith.constant 0 : index
    %999 = vector.load %arg13[%c0_190, %c0_191] : memref<2x256xf32, #tpu.memory_space<vmem>>, vector<1x32xf32>
    tpu.vector_store %arg13[%c0_190, %c0_191], %998 {strides = array<i32>} : memref<2x256xf32, #tpu.memory_space<vmem>>, vector<1x32xf32>,
    %1000 = vector.extract_strided_slice %997 {offsets = [1, 0], sizes = [1, 32], strides = [1, 1]} : vector<16x32xf32> to vector<1x32xf32>
    %c0_192 = arith.constant 0 : index
    %c32 = arith.constant 32 : index
    %1001 = vector.load %arg13[%c0_192, %c32] : memref<2x256xf32, #tpu.memory_space<vmem>>, vector<1x32xf32>
    tpu.vector_store %arg13[%c0_192, %c32], %1000 {strides = array<i32>} : memref<2x256xf32, #tpu.memory_space<vmem>>, vector<1x32xf32>,
    %1002 = vector.extract_strided_slice %997 {offsets = [2, 0], sizes = [1, 32], strides = [1, 1]} : vector<16x32xf32> to vector<1x32xf32>
    %c0_193 = arith.constant 0 : index
    %c64 = arith.constant 64 : index
    %1003 = vector.load %arg13[%c0_193, %c64] : memref<2x256xf32, #tpu.memory_space<vmem>>, vector<1x32xf32>
    tpu.vector_store %arg13[%c0_193, %c64], %1002 {strides = array<i32>} : memref<2x256xf32, #tpu.memory_space<vmem>>, vector<1x32xf32>,
    %1004 = vector.extract_strided_slice %997 {offsets = [3, 0], sizes = [1, 32], strides = [1, 1]} : vector<16x32xf32> to vector<1x32xf32>
    %c0_194 = arith.constant 0 : index
    %c96 = arith.constant 96 : index
    %1005 = vector.load %arg13[%c0_194, %c96] : memref<2x256xf32, #tpu.memory_space<vmem>>, vector<1x32xf32>
    tpu.vector_store %arg13[%c0_194, %c96], %1004 {strides = array<i32>} : memref<2x256xf32, #tpu.memory_space<vmem>>, vector<1x32xf32>,
    %1006 = vector.extract_strided_slice %997 {offsets = [4, 0], sizes = [1, 32], strides = [1, 1]} : vector<16x32xf32> to vector<1x32xf32>
    %c0_195 = arith.constant 0 : index
    %c128 = arith.constant 128 : index
    %1007 = vector.load %arg13[%c0_195, %c128] : memref<2x256xf32, #tpu.memory_space<vmem>>, vector<1x32xf32>
    tpu.vector_store %arg13[%c0_195, %c128], %1006 {strides = array<i32>} : memref<2x256xf32, #tpu.memory_space<vmem>>, vector<1x32xf32>,
    %1008 = vector.extract_strided_slice %997 {offsets = [5, 0], sizes = [1, 32], strides = [1, 1]} : vector<16x32xf32> to vector<1x32xf32>
    %c0_196 = arith.constant 0 : index
    %c160 = arith.constant 160 : index
    %1009 = vector.load %arg13[%c0_196, %c160] : memref<2x256xf32, #tpu.memory_space<vmem>>, vector<1x32xf32>
    tpu.vector_store %arg13[%c0_196, %c160], %1008 {strides = array<i32>} : memref<2x256xf32, #tpu.memory_space<vmem>>, vector<1x32xf32>,
    %1010 = vector.extract_strided_slice %997 {offsets = [6, 0], sizes = [1, 32], strides = [1, 1]} : vector<16x32xf32> to vector<1x32xf32>
    %c0_197 = arith.constant 0 : index
    %c192 = arith.constant 192 : index
    %1011 = vector.load %arg13[%c0_197, %c192] : memref<2x256xf32, #tpu.memory_space<vmem>>, vector<1x32xf32>
    tpu.vector_store %arg13[%c0_197, %c192], %1010 {strides = array<i32>} : memref<2x256xf32, #tpu.memory_space<vmem>>, vector<1x32xf32>,
    %1012 = vector.extract_strided_slice %997 {offsets = [7, 0], sizes = [1, 32], strides = [1, 1]} : vector<16x32xf32> to vector<1x32xf32>
    %c0_198 = arith.constant 0 : index
    %c224 = arith.constant 224 : index
    %1013 = vector.load %arg13[%c0_198, %c224] : memref<2x256xf32, #tpu.memory_space<vmem>>, vector<1x32xf32>
    tpu.vector_store %arg13[%c0_198, %c224], %1012 {strides = array<i32>} : memref<2x256xf32, #tpu.memory_space<vmem>>, vector<1x32xf32>,
    %1014 = vector.extract_strided_slice %997 {offsets = [8, 0], sizes = [1, 32], strides = [1, 1]} : vector<16x32xf32> to vector<1x32xf32>
    %c1_199 = arith.constant 1 : index
    %c0_200 = arith.constant 0 : index
    %1015 = vector.load %arg13[%c1_199, %c0_200] : memref<2x256xf32, #tpu.memory_space<vmem>>, vector<1x32xf32>
    tpu.vector_store %arg13[%c1_199, %c0_200], %1014 {strides = array<i32>} : memref<2x256xf32, #tpu.memory_space<vmem>>, vector<1x32xf32>,
    %1016 = vector.extract_strided_slice %997 {offsets = [9, 0], sizes = [1, 32], strides = [1, 1]} : vector<16x32xf32> to vector<1x32xf32>
    %c1_201 = arith.constant 1 : index
    %c32_202 = arith.constant 32 : index
    %1017 = vector.load %arg13[%c1_201, %c32_202] : memref<2x256xf32, #tpu.memory_space<vmem>>, vector<1x32xf32>
    tpu.vector_store %arg13[%c1_201, %c32_202], %1016 {strides = array<i32>} : memref<2x256xf32, #tpu.memory_space<vmem>>, vector<1x32xf32>,
    %1018 = vector.extract_strided_slice %997 {offsets = [10, 0], sizes = [1, 32], strides = [1, 1]} : vector<16x32xf32> to vector<1x32xf32>
    %c1_203 = arith.constant 1 : index
    %c64_204 = arith.constant 64 : index
    %1019 = vector.load %arg13[%c1_203, %c64_204] : memref<2x256xf32, #tpu.memory_space<vmem>>, vector<1x32xf32>
    tpu.vector_store %arg13[%c1_203, %c64_204], %1018 {strides = array<i32>} : memref<2x256xf32, #tpu.memory_space<vmem>>, vector<1x32xf32>,
    %1020 = vector.extract_strided_slice %997 {offsets = [11, 0], sizes = [1, 32], strides = [1, 1]} : vector<16x32xf32> to vector<1x32xf32>
    %c1_205 = arith.constant 1 : index
    %c96_206 = arith.constant 96 : index
    %1021 = vector.load %arg13[%c1_205, %c96_206] : memref<2x256xf32, #tpu.memory_space<vmem>>, vector<1x32xf32>
    tpu.vector_store %arg13[%c1_205, %c96_206], %1020 {strides = array<i32>} : memref<2x256xf32, #tpu.memory_space<vmem>>, vector<1x32xf32>,
    %1022 = vector.extract_strided_slice %997 {offsets = [12, 0], sizes = [1, 32], strides = [1, 1]} : vector<16x32xf32> to vector<1x32xf32>
    %c1_207 = arith.constant 1 : index
    %c128_208 = arith.constant 128 : index
    %1023 = vector.load %arg13[%c1_207, %c128_208] : memref<2x256xf32, #tpu.memory_space<vmem>>, vector<1x32xf32>
    tpu.vector_store %arg13[%c1_207, %c128_208], %1022 {strides = array<i32>} : memref<2x256xf32, #tpu.memory_space<vmem>>, vector<1x32xf32>,
    %1024 = vector.extract_strided_slice %997 {offsets = [13, 0], sizes = [1, 32], strides = [1, 1]} : vector<16x32xf32> to vector<1x32xf32>
    %c1_209 = arith.constant 1 : index
    %c160_210 = arith.constant 160 : index
    %1025 = vector.load %arg13[%c1_209, %c160_210] : memref<2x256xf32, #tpu.memory_space<vmem>>, vector<1x32xf32>
    tpu.vector_store %arg13[%c1_209, %c160_210], %1024 {strides = array<i32>} : memref<2x256xf32, #tpu.memory_space<vmem>>, vector<1x32xf32>,
    %1026 = vector.extract_strided_slice %997 {offsets = [14, 0], sizes = [1, 32], strides = [1, 1]} : vector<16x32xf32> to vector<1x32xf32>
    %c1_211 = arith.constant 1 : index
    %c192_212 = arith.constant 192 : index
    %1027 = vector.load %arg13[%c1_211, %c192_212] : memref<2x256xf32, #tpu.memory_space<vmem>>, vector<1x32xf32>
    tpu.vector_store %arg13[%c1_211, %c192_212], %1026 {strides = array<i32>} : memref<2x256xf32, #tpu.memory_space<vmem>>, vector<1x32xf32>,
    %1028 = vector.extract_strided_slice %997 {offsets = [15, 0], sizes = [1, 32], strides = [1, 1]} : vector<16x32xf32> to vector<1x32xf32>
    %c1_213 = arith.constant 1 : index
    %c224_214 = arith.constant 224 : index
    %1029 = vector.load %arg13[%c1_213, %c224_214] : memref<2x256xf32, #tpu.memory_space<vmem>>, vector<1x32xf32>
    tpu.vector_store %arg13[%c1_213, %c224_214], %1028 {strides = array<i32>} : memref<2x256xf32, #tpu.memory_space<vmem>>, vector<1x32xf32>,
    %c0_215 = arith.constant 0 : index
    %c0_216 = arith.constant 0 : index
    %1030 = vector.load %arg13[%c0_215, %c0_216] : memref<2x256xf32, #tpu.memory_space<vmem>>, vector<2x256xf32>
    %1031 = arith.truncf %1030 : vector<2x256xf32> to vector<2x256xbf16>
    %c0_217 = arith.constant 0 : index
    %c0_218 = arith.constant 0 : index
    %1032 = vector.load %arg8[%c0_217, %c0_218] : memref<256x5xf32, #tpu.memory_space<vmem>>, vector<256x5xf32>
    %1033 = arith.truncf %1032 : vector<256x5xf32> to vector<256x5xbf16>
    %cst_219 = arith.constant dense<0.000000e+00> : vector<2x5xf32>
    %1034 = tpu.matmul %1031, %1033, %cst_219 {dimension_numbers = #tpu.dot_dimension_numbers<[1], [0], [0], [1], [0, 0, 1, 1], [], []>} : vector<2x256xbf16>, vector<256x5xbf16>, vector<2x5xf32> -> vector<2x5xf32>
    %c0_220 = arith.constant 0 : index
    %c0_221 = arith.constant 0 : index
    %1035 = vector.load %arg9[%c0_220, %c0_221] : memref<1x5xf32, #tpu.memory_space<vmem>>, vector<1x5xf32>
    %1036 = vector.broadcast %1035 : vector<1x5xf32> to vector<2x5xf32>
    %1037 = arith.addf %1034, %1036 : vector<2x5xf32>
    %c0_222 = arith.constant 0 : index
    %c0_223 = arith.constant 0 : index
    %1038 = vector.load %arg10[%c0_222, %c0_223] : memref<2x5xf32, #tpu.memory_space<vmem>>, vector<2x5xf32>
    tpu.vector_store %arg10[%c0_222, %c0_223], %1037 {strides = array<i32>} : memref<2x5xf32, #tpu.memory_space<vmem>>, vector<2x5xf32>,
    return
  }
}

</mosaic_0001>

<llo_original>
// kernel: textcnn_forward.1
$region0: #{textcnn_forward.1}
  #allocation0 [shape = 'u32[]', space=smem, size = 0x4, offset = 0x4, fixed_abs, tag = 'smem constant byte address 0x4 - core index']
  #allocation1 [shape = 'u32[144,128]{1,0:T(1,128)}', space=vmem, size = 0x12000, scoped, tag = 'internal scratch']
  #allocation2 [shape = 'f32[16,32]{1,0:T(8,128)}', space=vmem, size = 0x2000, scoped, tag = 'scratch operand']
  #allocation3 [shape = 'f32[16,32]{1,0:T(8,128)}', space=vmem, size = 0x2000, scoped, tag = 'scratch operand']
  #allocation4 [shape = 'f32[2,256]{1,0:T(2,128)}', space=vmem, size = 0x800, scoped, tag = 'scratch operand']
  %s0 = inlined_call_operand.vmem [shape: f32[16,32], index: 0, kind: input, shape index: {}]
  %s1 = inlined_call_operand.vmem [shape: f32[16,1], index: 1, kind: input, shape index: {}]
  %s2 = inlined_call_operand.vmem [shape: f32[2,8], index: 2, kind: input, shape index: {}]
  %s3 = inlined_call_operand.vmem [shape: f32[32,256], index: 3, kind: input, shape index: {}]
  %s4 = inlined_call_operand.vmem [shape: f32[1,256], index: 4, kind: input, shape index: {}]
  %s5 = inlined_call_operand.vmem [shape: f32[64,256], index: 5, kind: input, shape index: {}]
  %s6 = inlined_call_operand.vmem [shape: f32[32,96], index: 6, kind: input, shape index: {}]
  %s7 = inlined_call_operand.vmem [shape: f32[32,32], index: 7, kind: input, shape index: {}]
  %s8 = inlined_call_operand.vmem [shape: f32[256,5], index: 8, kind: input, shape index: {}]
  %s9 = inlined_call_operand.vmem [shape: f32[1,5], index: 9, kind: input, shape index: {}]
  %s10 = inlined_call_operand.hbm [shape: f32[2,5], index: 10, kind: output, shape index: {}]
  %s11 = sld [smem:[#allocation0]]
  $region50: #{textcnn_forward.1} parent=0
    _
  %s13 = ssub.s32 1, %s11
  %s14 = scalar_select 0, %s13, %s11
  $region1: #{textcnn_forward.1} parent=0
    #allocation5 [shape = 'u8[1024]{0}', space=vmem, size = 0x400, scoped, tag = 'output window, operand 0, single buffered']
    #allocation6 [shape = 's32[1]{0}', space=sflag, size = 0x4, scoped, tag = 'scoped memory for textcnn_forward.1']
    %15 = vsyncpa [#allocation6], 0
    // Predicated region
    $region2: #{textcnn_forward.1} parent=1 // pred_check
      _
    $region3: #{textcnn_forward.1} parent=1 // pred_check_branch
      %17 = sbr.rel (0) target = $region5
    $region4: #{textcnn_forward.1} parent=1 // pred_region
      _
    $region5: #{textcnn_forward.1} parent=1 // pred_fallthru
      _
    // Predicated region
    $region6: #{textcnn_forward.1} parent=1 // pred_check
      _
    $region7: #{textcnn_forward.1} parent=1 // pred_check_branch
      %19 = sbr.rel (0) target = $region9
    $region8: #{textcnn_forward.1} parent=1 // pred_region
      _
    $region9: #{textcnn_forward.1} parent=1 // pred_fallthru
      _
    // Predicated region
    $region10: #{textcnn_forward.1} parent=1 // pred_check
      _
    $region11: #{textcnn_forward.1} parent=1 // pred_check_branch
      %21 = sbr.rel (0) target = $region13
    $region12: #{textcnn_forward.1} parent=1 // pred_region
      _
    $region13: #{textcnn_forward.1} parent=1 // pred_fallthru
      _
    // Predicated region
    $region14: #{textcnn_forward.1} parent=1 // pred_check
      _
    $region15: #{textcnn_forward.1} parent=1 // pred_check_branch
      %23 = sbr.rel (0) target = $region17
    $region16: #{textcnn_forward.1} parent=1 // pred_region
      _
    $region17: #{textcnn_forward.1} parent=1 // pred_fallthru
      _
    // Predicated region
    $region18: #{textcnn_forward.1} parent=1 // pred_check
      _
    $region19: #{textcnn_forward.1} parent=1 // pred_check_branch
      %25 = sbr.rel (0) target = $region21
    $region20: #{textcnn_forward.1} parent=1 // pred_region
      _
    $region21: #{textcnn_forward.1} parent=1 // pred_fallthru
      _
    // Predicated region
    $region22: #{textcnn_forward.1} parent=1 // pred_check
      _
    $region23: #{textcnn_forward.1} parent=1 // pred_check_branch
      %27 = sbr.rel (0) target = $region25
    $region24: #{textcnn_forward.1} parent=1 // pred_region
      _
    $region25: #{textcnn_forward.1} parent=1 // pred_fallthru
      _
    // Predicated region
    $region26: #{textcnn_forward.1} parent=1 // pred_check
      _
    $region27: #{textcnn_forward.1} parent=1 // pred_check_branch
      %29 = sbr.rel (0) target = $region29
    $region28: #{textcnn_forward.1} parent=1 // pred_region
      _
    $region29: #{textcnn_forward.1} parent=1 // pred_fallthru
      _
    // Predicated region
    $region30: #{textcnn_forward.1} parent=1 // pred_check
      _
    $region31: #{textcnn_forward.1} parent=1 // pred_check_branch
      %31 = sbr.rel (0) target = $region33
    $region32: #{textcnn_forward.1} parent=1 // pred_region
      _
    $region33: #{textcnn_forward.1} parent=1 // pred_fallthru
      _
    // Predicated region
    $region34: #{textcnn_forward.1} parent=1 // pred_check
      _
    $region35: #{textcnn_forward.1} parent=1 // pred_check_branch
      %33 = sbr.rel (0) target = $region37
    $region36: #{textcnn_forward.1} parent=1 // pred_region
      _
    $region37: #{textcnn_forward.1} parent=1 // pred_fallthru
      _
    // Predicated region
    $region38: #{textcnn_forward.1} parent=1 // pred_check
      _
    $region39: #{textcnn_forward.1} parent=1 // pred_check_branch
      %35 = sbr.rel (0) target = $region41
    $region40: #{textcnn_forward.1} parent=1 // pred_region
      _
    $region41: #{textcnn_forward.1} parent=1 // pred_fallthru
      _
    %v37 = vld [vmem:[%s0] sm:$0xff]
    %v38 = vld [vmem:[%s0 + $0x8] sm:$0xff]
    %v39 = vpack.c.bf16 %v38, %v37
    %v40 = vld [vmem:[%s3] sm:$0xff]
    %v41 = vld [vmem:[%s3 + $0x8] sm:$0xff]
    %v42 = vld [vmem:[%s3 + $0x10] sm:$0xff]
    %v43 = vld [vmem:[%s3 + $0x18] sm:$0xff]
    %v44 = vld [vmem:[%s3 + $0x20] sm:$0xff]
    %v45 = vld [vmem:[%s3 + $0x28] sm:$0xff]
    %v46 = vld [vmem:[%s3 + $0x30] sm:$0xff]
    %v47 = vld [vmem:[%s3 + $0x38] sm:$0xff]
    %v48 = vpack.c.bf16 %v42, %v40
    %v49 = vpack.c.bf16 %v43, %v41
    %v50 = vpack.c.bf16 %v46, %v44
    %v51 = vpack.c.bf16 %v47, %v45
    %v52 = vld [vmem:[%s4] sm:$0x3]
    %v54 = vlaneseq
    %v55 = vshrl.u32 %v54, 7
    %v56 = vsub.s32 0, %v55
    %v57 = vrot.slane %v52, %v56
    %v58 = vlaneseq
    %v59 = vshrl.u32 %v58, 7
    %v60 = vsub.s32 1, %v59
    %v61 = vrot.slane %v52, %v60
    %vm64 = vcmask 261120
    %v66 = vsel %vm64, %v39, 0
    %68 = vmatprep.subr.bf16.mxu0 %v49
    %69 = vmatpush1.bf16.msra.mxu0 %v48
    %70 = vmatprep.subr.bf16.mxu0 %v51
    %71 = vmatpush1.bf16.msra.mxu0 %v50
    %72 = vmatprep.subr.bf16.mxu0 0
    %73 = vmatpush1.bf16.msra.mxu0 0
    %74 = vmatprep.subr.bf16.mxu0 0
    %75 = vmatpush1.bf16.msra.mxu0 0
    %76 = vmatprep.subr.bf16.mxu0 0
    %77 = vmatpush1.bf16.msra.mxu0 0
    %78 = vmatprep.subr.bf16.mxu0 0
    %79 = vmatpush1.bf16.msra.mxu0 0
    %80 = vmatprep.subr.bf16.mxu0 0
    %81 = vmatpush1.bf16.msra.mxu0 0
    %82 = vmatprep.subr.bf16.mxu0 0
    %83 = vmatpush1.bf16.msra.mxu0 0
    %84 = vmatprep.subr.bf16.mxu0 0
    %85 = vmatpush1.bf16.msra.mxu0 0
    %86 = vmatprep.subr.bf16.mxu0 0
    %87 = vmatpush1.bf16.msra.mxu0 0
    %88 = vmatprep.subr.bf16.mxu0 0
    %89 = vmatpush1.bf16.msra.mxu0 0
    %90 = vmatprep.subr.bf16.mxu0 0
    %91 = vmatpush1.bf16.msra.mxu0 0
    %92 = vmatprep.subr.bf16.mxu0 0
    %93 = vmatpush1.bf16.msra.mxu0 0
    %94 = vmatprep.subr.bf16.mxu0 0
    %95 = vmatpush1.bf16.msra.mxu0 0
    %96 = vmatprep.subr.bf16.mxu0 0
    %97 = vmatpush1.bf16.msra.mxu0 0
    %98 = vmatprep.subr.bf16.mxu0 0
    %99 = vmatpush1.bf16.msra.mxu0 0
    %100 = vmatprep.mubr.bf16.mxu0 0
    %101 = vmatmul.mubr.bf16.gmra.mrb[0].mxu0 %v66
    %v102 = vpop.f32.mrb[0].mxu0
    %v103 = vadd.f32 %v57, %v102
    %v104 = vpop.f32.mrb[0].mxu0
    %v105 = vadd.f32 %v61, %v104
    %v106 = vpop.f32.mrb[0].mxu0
    %v107 = vadd.f32 %v57, %v106
    %v108 = vpop.f32.mrb[0].mxu0
    %v109 = vadd.f32 %v61, %v108
    %110 = vdwg.mxu0
    %v111 = vld [vmem:[%s1] sm:$0xff]
    %v112 = vld [vmem:[%s1 + $0x8] sm:$0xff]
    %v113 = vld [vmem:[%s5] sm:$0xff]
    %v114 = vld [vmem:[%s5 + $0x8] sm:$0xff]
    %v115 = vld [vmem:[%s5 + $0x10] sm:$0xff]
    %v116 = vld [vmem:[%s5 + $0x18] sm:$0xff]
    %v117 = vld [vmem:[%s5 + $0x20] sm:$0xff]
    %v118 = vld [vmem:[%s5 + $0x28] sm:$0xff]
    %v119 = vld [vmem:[%s5 + $0x30] sm:$0xff]
    %v120 = vld [vmem:[%s5 + $0x38] sm:$0xff]
    %v121 = vld [vmem:[%s5 + $0x40] sm:$0xff]
    %v122 = vld [vmem:[%s5 + $0x48] sm:$0xff]
    %v123 = vld [vmem:[%s5 + $0x50] sm:$0xff]
    %v124 = vld [vmem:[%s5 + $0x58] sm:$0xff]
    %v125 = vld [vmem:[%s5 + $0x60] sm:$0xff]
    %v126 = vld [vmem:[%s5 + $0x68] sm:$0xff]
    %v127 = vld [vmem:[%s5 + $0x70] sm:$0xff]
    %v128 = vld [vmem:[%s5 + $0x78] sm:$0xff]
    %v129 = vpack.c.bf16 %v115, %v113
    %v130 = vpack.c.bf16 %v116, %v114
    %v131 = vpack.c.bf16 %v119, %v117
    %v132 = vpack.c.bf16 %v120, %v118
    %v133 = vpack.c.bf16 %v123, %v121
    %v134 = vpack.c.bf16 %v124, %v122
    %v135 = vpack.c.bf16 %v127, %v125
    %v136 = vpack.c.bf16 %v128, %v126
    %v137 = vpack.c.bf16 0.0, 0.0
    %vm138 = vcmask 523264
    %v140 = vsel %vm138, %v137, 0
    %142 = vmatprep.subr.bf16.mxu0 %v130
    %143 = vmatpush1.bf16.msra.mxu0 %v129
    %144 = vmatprep.subr.bf16.mxu0 %v132
    %145 = vmatpush1.bf16.msra.mxu0 %v131
    %146 = vmatprep.subr.bf16.mxu0 %v134
    %147 = vmatpush1.bf16.msra.mxu0 %v133
    %148 = vmatprep.subr.bf16.mxu0 %v136
    %149 = vmatpush1.bf16.msra.mxu0 %v135
    %150 = vmatprep.subr.bf16.mxu0 0
    %151 = vmatpush1.bf16.msra.mxu0 0
    %152 = vmatprep.subr.bf16.mxu0 0
    %153 = vmatpush1.bf16.msra.mxu0 0
    %154 = vmatprep.subr.bf16.mxu0 0
    %155 = vmatpush1.bf16.msra.mxu0 0
    %156 = vmatprep.subr.bf16.mxu0 0
    %157 = vmatpush1.bf16.msra.mxu0 0
    %158 = vmatprep.subr.bf16.mxu0 0
    %159 = vmatpush1.bf16.msra.mxu0 0
    %160 = vmatprep.subr.bf16.mxu0 0
    %161 = vmatpush1.bf16.msra.mxu0 0
    %162 = vmatprep.subr.bf16.mxu0 0
    %163 = vmatpush1.bf16.msra.mxu0 0
    %164 = vmatprep.subr.bf16.mxu0 0
    %165 = vmatpush1.bf16.msra.mxu0 0
    %166 = vmatprep.subr.bf16.mxu0 0
    %167 = vmatpush1.bf16.msra.mxu0 0
    %168 = vmatprep.subr.bf16.mxu0 0
    %169 = vmatpush1.bf16.msra.mxu0 0
    %170 = vmatprep.subr.bf16.mxu0 0
    %171 = vmatpush1.bf16.msra.mxu0 0
    %172 = vmatprep.subr.bf16.mxu0 0
    %173 = vmatpush1.bf16.msra.mxu0 0
    %174 = vmatprep.mubr.bf16.mxu0 0
    %175 = vmatmul.mubr.bf16.gmra.mrb[0].mxu0 %v140
    %v176 = vpop.f32.mrb[0].mxu0
    %v177 = vadd.f32 0.0, %v176
    %v178 = vpop.f32.mrb[0].mxu0
    %v179 = vadd.f32 0.0, %v178
    %v180 = vpop.f32.mrb[0].mxu0
    %v181 = vpop.f32.mrb[0].mxu0
    %182 = vdwg.mxu0
    %v183 = vadd.f32 %v103, %v177
    %v185 = vrot.slane %v179, 2
    %v187 = vadd.f32 %v109, %v185
    %v188 = vxor.u32 %v183, 2147483648
    %v189 = vmul.f32 %v188, 1.442695
    %v190 = vpow.pop %v189
    %v191 = vadd.f32 %v190, 1.0
    %v192 = vrcp.pop %v191
    %v193 = vmul.f32 1.0, %v192
    %v194 = vtanh.pop %v183
    %v195 = vmul.f32 %v193, 0.0
    %197 = vrot.lane.b32.xlu0 %v194, 64
    %v198 = vpop.permute.xlu0 %197
    %v200 = vmul.f32 %v193, %v198
    %202 = vrot.lane.b32.xlu0 %v200, 32
    %v203 = vpop.permute.xlu0 %202
    %v205 = vadd.f32 %v195, %v203
    %v206 = vtanh.pop %v205
    %208 = vrot.lane.b32.xlu0 %v206, 64
    %v209 = vpop.permute.xlu0 %208
    %v211 = vmul.f32 %v193, %v209
    %v212 = vxor.u32 %v187, 2147483648
    %v213 = vmul.f32 %v212, 1.442695
    %v214 = vpow.pop %v213
    %v215 = vadd.f32 %v214, 1.0
    %v216 = vrcp.pop %v215
    %v217 = vmul.f32 1.0, %v216
    %v218 = vtanh.pop %v187
    %v219 = vmul.f32 %v217, 0.0
    %221 = vrot.lane.b32.xlu0 %v218, 64
    %v222 = vpop.permute.xlu0 %221
    %v224 = vmul.f32 %v217, %v222
    %226 = vrot.lane.b32.xlu0 %v224, 32
    %v227 = vpop.permute.xlu0 %226
    %v229 = vadd.f32 %v219, %v227
    %v230 = vtanh.pop %v229
    %232 = vrot.lane.b32.xlu0 %v230, 64
    %v233 = vpop.permute.xlu0 %232
    %v235 = vmul.f32 %v217, %v233
    %237 = vset.pattern.permute.xlu0 0
    %238 = vperm.xlu0 %237, %v111
    %v239 = vpop.permute.xlu0 %238
    %v241 = vmul.f32 %v239, %v205
    %v242 = vsub.f32 1.0, %v111
    %244 = vset.pattern.permute.xlu0 0
    %245 = vperm.xlu0 %244, %v242
    %v246 = vpop.permute.xlu0 %245
    %v248 = vmul.f32 %v246, 0.0
    %v249 = vadd.f32 %v241, %v248
    %v250 = vmul.f32 %v239, %v211
    %v251 = vadd.f32 %v250, %v248
    %253 = vset.pattern.permute.xlu0 0
    %254 = vperm.xlu0 %253, %v112
    %v255 = vpop.permute.xlu0 %254
    %v257 = vmul.f32 %v255, %v229
    %v258 = vsub.f32 1.0, %v112
    %260 = vset.pattern.permute.xlu0 0
    %261 = vperm.xlu0 %260, %v258
    %v262 = vpop.permute.xlu0 %261
    %v264 = vmul.f32 %v262, 0.0
    %v265 = vadd.f32 %v257, %v264
    %v266 = vmul.f32 %v255, %v235
    %v267 = vadd.f32 %v266, %v264
    %269 = vrot.lane.b32.xlu0 %v251, 32
    %v270 = vpop.permute.xlu0 %269
    %v273 = vrot.slane %v267, 6
    %274 = vrot.lane.b32.xlu0 %v273, 64
    %v275 = vpop.permute.xlu0 %274
    %v277 = vsel %vm64, %v270, %v275
    %v278 = vpack.c.bf16 %v277, %v277
    %v280 = vsel %vm138, %v278, 0
    %282 = vmatprep.subr.bf16.mxu0 %v130
    %283 = vmatpush1.bf16.msra.mxu0 %v129
    %284 = vmatprep.subr.bf16.mxu0 %v132
    %285 = vmatpush1.bf16.msra.mxu0 %v131
    %286 = vmatprep.subr.bf16.mxu0 %v134
    %287 = vmatpush1.bf16.msra.mxu0 %v133
    %288 = vmatprep.subr.bf16.mxu0 %v136
    %289 = vmatpush1.bf16.msra.mxu0 %v135
    %290 = vmatprep.subr.bf16.mxu0 0
    %291 = vmatpush1.bf16.msra.mxu0 0
    %292 = vmatprep.subr.bf16.mxu0 0
    %293 = vmatpush1.bf16.msra.mxu0 0
    %294 = vmatprep.subr.bf16.mxu0 0
    %295 = vmatpush1.bf16.msra.mxu0 0
    %296 = vmatprep.subr.bf16.mxu0 0
    %297 = vmatpush1.bf16.msra.mxu0 0
    %298 = vmatprep.subr.bf16.mxu0 0
    %299 = vmatpush1.bf16.msra.mxu0 0
    %300 = vmatprep.subr.bf16.mxu0 0
    %301 = vmatpush1.bf16.msra.mxu0 0
    %302 = vmatprep.subr.bf16.mxu0 0
    %303 = vmatpush1.bf16.msra.mxu0 0
    %304 = vmatprep.subr.bf16.mxu0 0
    %305 = vmatpush1.bf16.msra.mxu0 0
    %306 = vmatprep.subr.bf16.mxu0 0
    %307 = vmatpush1.bf16.msra.mxu0 0
    %308 = vmatprep.subr.bf16.mxu0 0
    %309 = vmatpush1.bf16.msra.mxu0 0
    %310 = vmatprep.subr.bf16.mxu0 0
    %311 = vmatpush1.bf16.msra.mxu0 0
    %312 = vmatprep.subr.bf16.mxu0 0
    %313 = vmatpush1.bf16.msra.mxu0 0
    %314 = vmatprep.mubr.bf16.mxu0 0
    %315 = vmatmul.mubr.bf16.gmra.mrb[0].mxu0 %v280
    %v316 = vpop.f32.mrb[0].mxu0
    %v317 = vadd.f32 0.0, %v316
    %v318 = vpop.f32.mrb[0].mxu0
    %v319 = vadd.f32 0.0, %v318
    %v320 = vpop.f32.mrb[0].mxu0
    %v321 = vpop.f32.mrb[0].mxu0
    %322 = vdwg.mxu0
    %v324 = vrot.slane %v317, 6
    %v326 = vadd.f32 %v103, %v324
    %v328 = vrot.slane %v319, 4
    %v330 = vadd.f32 %v109, %v328
    %v331 = vxor.u32 %v326, 2147483648
    %v332 = vmul.f32 %v331, 1.442695
    %v333 = vpow.pop %v332
    %v334 = vadd.f32 %v333, 1.0
    %v335 = vrcp.pop %v334
    %v336 = vmul.f32 1.0, %v335
    %v337 = vtanh.pop %v326
    %v339 = vrot.slane %v249, 6
    %v341 = vmul.f32 %v336, %v339
    %343 = vrot.lane.b32.xlu0 %v337, 64
    %v344 = vpop.permute.xlu0 %343
    %v346 = vmul.f32 %v336, %v344
    %348 = vrot.lane.b32.xlu0 %v346, 32
    %v349 = vpop.permute.xlu0 %348
    %v351 = vadd.f32 %v341, %v349
    %v352 = vtanh.pop %v351
    %354 = vrot.lane.b32.xlu0 %v352, 64
    %v355 = vpop.permute.xlu0 %354
    %v357 = vmul.f32 %v336, %v355
    %v358 = vxor.u32 %v330, 2147483648
    %v359 = vmul.f32 %v358, 1.442695
    %v360 = vpow.pop %v359
    %v361 = vadd.f32 %v360, 1.0
    %v362 = vrcp.pop %v361
    %v363 = vmul.f32 1.0, %v362
    %v364 = vtanh.pop %v330
    %v366 = vrot.slane %v265, 2
    %v368 = vmul.f32 %v363, %v366
    %370 = vrot.lane.b32.xlu0 %v364, 64
    %v371 = vpop.permute.xlu0 %370
    %v373 = vmul.f32 %v363, %v371
    %375 = vrot.lane.b32.xlu0 %v373, 32
    %v376 = vpop.permute.xlu0 %375
    %v378 = vadd.f32 %v368, %v376
    %v379 = vtanh.pop %v378
    %381 = vrot.lane.b32.xlu0 %v379, 64
    %v382 = vpop.permute.xlu0 %381
    %v384 = vmul.f32 %v363, %v382
    %v385 = vmul.f32 %v239, %v351
    %386 = vrot.lane.b32.xlu0 %v339, 96
    %v387 = vpop.permute.xlu0 %386
    %v389 = vmul.f32 %v246, %v387
    %391 = vrot.lane.b32.xlu0 %v389, 32
    %v392 = vpop.permute.xlu0 %391
    %v394 = vadd.f32 %v385, %v392
    %v395 = vmul.f32 %v239, %v357
    %v396 = vrot.slane %v251, 6
    %397 = vrot.lane.b32.xlu0 %v396, 32
    %v398 = vpop.permute.xlu0 %397
    %v400 = vmul.f32 %v246, %v398
    %402 = vrot.lane.b32.xlu0 %v400, 96
    %v403 = vpop.permute.xlu0 %402
    %v405 = vadd.f32 %v395, %v403
    %v406 = vmul.f32 %v255, %v378
    %407 = vrot.lane.b32.xlu0 %v366, 96
    %v408 = vpop.permute.xlu0 %407
    %v410 = vmul.f32 %v262, %v408
    %412 = vrot.lane.b32.xlu0 %v410, 32
    %v413 = vpop.permute.xlu0 %412
    %v415 = vadd.f32 %v406, %v413
    %v416 = vmul.f32 %v255, %v384
    %v417 = vrot.slane %v267, 2
    %418 = vrot.lane.b32.xlu0 %v417, 32
    %v419 = vpop.permute.xlu0 %418
    %v421 = vmul.f32 %v262, %v419
    %423 = vrot.lane.b32.xlu0 %v421, 96
    %v424 = vpop.permute.xlu0 %423
    %v426 = vadd.f32 %v416, %v424
    %428 = vrot.lane.b32.xlu0 %v405, 32
    %v429 = vpop.permute.xlu0 %428
    %v432 = vrot.slane %v426, 2
    %433 = vrot.lane.b32.xlu0 %v432, 64
    %v434 = vpop.permute.xlu0 %433
    %v436 = vsel %vm64, %v429, %v434
    %v437 = vpack.c.bf16 %v436, %v436
    %v439 = vrot.slane %v437, 1
    %v441 = vsel %vm138, %v439, 0
    %443 = vmatprep.subr.bf16.mxu0 %v130
    %444 = vmatpush1.bf16.msra.mxu0 %v129
    %445 = vmatprep.subr.bf16.mxu0 %v132
    %446 = vmatpush1.bf16.msra.mxu0 %v131
    %447 = vmatprep.subr.bf16.mxu0 %v134
    %448 = vmatpush1.bf16.msra.mxu0 %v133
    %449 = vmatprep.subr.bf16.mxu0 %v136
    %450 = vmatpush1.bf16.msra.mxu0 %v135
    %451 = vmatprep.subr.bf16.mxu0 0
    %452 = vmatpush1.bf16.msra.mxu0 0
    %453 = vmatprep.subr.bf16.mxu0 0
    %454 = vmatpush1.bf16.msra.mxu0 0
    %455 = vmatprep.subr.bf16.mxu0 0
    %456 = vmatpush1.bf16.msra.mxu0 0
    %457 = vmatprep.subr.bf16.mxu0 0
    %458 = vmatpush1.bf16.msra.mxu0 0
    %459 = vmatprep.subr.bf16.mxu0 0
    %460 = vmatpush1.bf16.msra.mxu0 0
    %461 = vmatprep.subr.bf16.mxu0 0
    %462 = vmatpush1.bf16.msra.mxu0 0
    %463 = vmatprep.subr.bf16.mxu0 0
    %464 = vmatpush1.bf16.msra.mxu0 0
    %465 = vmatprep.subr.bf16.mxu0 0
    %466 = vmatpush1.bf16.msra.mxu0 0
    %467 = vmatprep.subr.bf16.mxu0 0
    %468 = vmatpush1.bf16.msra.mxu0 0
    %469 = vmatprep.subr.bf16.mxu0 0
    %470 = vmatpush1.bf16.msra.mxu0 0
    %471 = vmatprep.subr.bf16.mxu0 0
    %472 = vmatpush1.bf16.msra.mxu0 0
    %473 = vmatprep.subr.bf16.mxu0 0
    %474 = vmatpush1.bf16.msra.mxu0 0
    %475 = vmatprep.mubr.bf16.mxu0 0
    %476 = vmatmul.mubr.bf16.gmra.mrb[0].mxu0 %v441
    %v477 = vpop.f32.mrb[0].mxu0
    %v478 = vadd.f32 0.0, %v477
    %v479 = vpop.f32.mrb[0].mxu0
    %v480 = vadd.f32 0.0, %v479
    %v481 = vpop.f32.mrb[0].mxu0
    %v482 = vpop.f32.mrb[0].mxu0
    %483 = vdwg.mxu0
    %v485 = vrot.slane %v478, 4
    %v487 = vadd.f32 %v103, %v485
    %v489 = vrot.slane %v480, 6
    %v491 = vadd.f32 %v109, %v489
    %v492 = vxor.u32 %v487, 2147483648
    %v493 = vmul.f32 %v492, 1.442695
    %v494 = vpow.pop %v493
    %v495 = vadd.f32 %v494, 1.0
    %v496 = vrcp.pop %v495
    %v497 = vmul.f32 1.0, %v496
    %v498 = vtanh.pop %v487
    %v500 = vrot.slane %v394, 6
    %v502 = vmul.f32 %v497, %v500
    %504 = vrot.lane.b32.xlu0 %v498, 64
    %v505 = vpop.permute.xlu0 %504
    %v507 = vmul.f32 %v497, %v505
    %509 = vrot.lane.b32.xlu0 %v507, 32
    %v510 = vpop.permute.xlu0 %509
    %v512 = vadd.f32 %v502, %v510
    %v513 = vtanh.pop %v512
    %515 = vrot.lane.b32.xlu0 %v513, 64
    %v516 = vpop.permute.xlu0 %515
    %v518 = vmul.f32 %v497, %v516
    %v519 = vxor.u32 %v491, 2147483648
    %v520 = vmul.f32 %v519, 1.442695
    %v521 = vpow.pop %v520
    %v522 = vadd.f32 %v521, 1.0
    %v523 = vrcp.pop %v522
    %v524 = vmul.f32 1.0, %v523
    %v525 = vtanh.pop %v491
    %v527 = vrot.slane %v415, 2
    %v529 = vmul.f32 %v524, %v527
    %531 = vrot.lane.b32.xlu0 %v525, 64
    %v532 = vpop.permute.xlu0 %531
    %v534 = vmul.f32 %v524, %v532
    %536 = vrot.lane.b32.xlu0 %v534, 32
    %v537 = vpop.permute.xlu0 %536
    %v539 = vadd.f32 %v529, %v537
    %v540 = vtanh.pop %v539
    %542 = vrot.lane.b32.xlu0 %v540, 64
    %v543 = vpop.permute.xlu0 %542
    %v545 = vmul.f32 %v524, %v543
    %v546 = vmul.f32 %v239, %v512
    %547 = vrot.lane.b32.xlu0 %v500, 96
    %v548 = vpop.permute.xlu0 %547
    %v550 = vmul.f32 %v246, %v548
    %552 = vrot.lane.b32.xlu0 %v550, 32
    %v553 = vpop.permute.xlu0 %552
    %v555 = vadd.f32 %v546, %v553
    %v556 = vmul.f32 %v239, %v518
    %v557 = vrot.slane %v405, 6
    %558 = vrot.lane.b32.xlu0 %v557, 32
    %v559 = vpop.permute.xlu0 %558
    %v561 = vmul.f32 %v246, %v559
    %563 = vrot.lane.b32.xlu0 %v561, 96
    %v564 = vpop.permute.xlu0 %563
    %v566 = vadd.f32 %v556, %v564
    %v567 = vmul.f32 %v255, %v539
    %568 = vrot.lane.b32.xlu0 %v527, 96
    %v569 = vpop.permute.xlu0 %568
    %v571 = vmul.f32 %v262, %v569
    %573 = vrot.lane.b32.xlu0 %v571, 32
    %v574 = vpop.permute.xlu0 %573
    %v576 = vadd.f32 %v567, %v574
    %v577 = vmul.f32 %v255, %v545
    %578 = vrot.lane.b32.xlu0 %v432, 32
    %v579 = vpop.permute.xlu0 %578
    %v581 = vmul.f32 %v262, %v579
    %583 = vrot.lane.b32.xlu0 %v581, 96
    %v584 = vpop.permute.xlu0 %583
    %v586 = vadd.f32 %v577, %v584
    %588 = vrot.lane.b32.xlu0 %v566, 32
    %v589 = vpop.permute.xlu0 %588
    %v592 = vrot.slane %v586, 6
    %593 = vrot.lane.b32.xlu0 %v592, 64
    %v594 = vpop.permute.xlu0 %593
    %v596 = vsel %vm64, %v589, %v594
    %v597 = vpack.c.bf16 %v596, %v596
    %v599 = vrot.slane %v597, 2
    %v601 = vsel %vm138, %v599, 0
    %603 = vmatprep.subr.bf16.mxu0 %v130
    %604 = vmatpush1.bf16.msra.mxu0 %v129
    %605 = vmatprep.subr.bf16.mxu0 %v132
    %606 = vmatpush1.bf16.msra.mxu0 %v131
    %607 = vmatprep.subr.bf16.mxu0 %v134
    %608 = vmatpush1.bf16.msra.mxu0 %v133
    %609 = vmatprep.subr.bf16.mxu0 %v136
    %610 = vmatpush1.bf16.msra.mxu0 %v135
    %611 = vmatprep.subr.bf16.mxu0 0
    %612 = vmatpush1.bf16.msra.mxu0 0
    %613 = vmatprep.subr.bf16.mxu0 0
    %614 = vmatpush1.bf16.msra.mxu0 0
    %615 = vmatprep.subr.bf16.mxu0 0
    %616 = vmatpush1.bf16.msra.mxu0 0
    %617 = vmatprep.subr.bf16.mxu0 0
    %618 = vmatpush1.bf16.msra.mxu0 0
    %619 = vmatprep.subr.bf16.mxu0 0
    %620 = vmatpush1.bf16.msra.mxu0 0
    %621 = vmatprep.subr.bf16.mxu0 0
    %622 = vmatpush1.bf16.msra.mxu0 0
    %623 = vmatprep.subr.bf16.mxu0 0
    %624 = vmatpush1.bf16.msra.mxu0 0
    %625 = vmatprep.subr.bf16.mxu0 0
    %626 = vmatpush1.bf16.msra.mxu0 0
    %627 = vmatprep.subr.bf16.mxu0 0
    %628 = vmatpush1.bf16.msra.mxu0 0
    %629 = vmatprep.subr.bf16.mxu0 0
    %630 = vmatpush1.bf16.msra.mxu0 0
    %631 = vmatprep.subr.bf16.mxu0 0
    %632 = vmatpush1.bf16.msra.mxu0 0
    %633 = vmatprep.subr.bf16.mxu0 0
    %634 = vmatpush1.bf16.msra.mxu0 0
    %635 = vmatprep.mubr.bf16.mxu0 0
    %636 = vmatmul.mubr.bf16.gmra.mrb[0].mxu0 %v601
    %v637 = vpop.f32.mrb[0].mxu0
    %v638 = vadd.f32 0.0, %v637
    %v639 = vpop.f32.mrb[0].mxu0
    %v640 = vadd.f32 0.0, %v639
    %v641 = vpop.f32.mrb[0].mxu0
    %v642 = vpop.f32.mrb[0].mxu0
    %643 = vdwg.mxu0
    %v645 = vrot.slane %v638, 2
    %v647 = vadd.f32 %v103, %v645
    %v648 = vadd.f32 %v109, %v640
    %v649 = vxor.u32 %v647, 2147483648
    %v650 = vmul.f32 %v649, 1.442695
    %v651 = vpow.pop %v650
    %v652 = vadd.f32 %v651, 1.0
    %v653 = vrcp.pop %v652
    %v654 = vmul.f32 1.0, %v653
    %v655 = vtanh.pop %v647
    %v657 = vrot.slane %v555, 6
    %v659 = vmul.f32 %v654, %v657
    %661 = vrot.lane.b32.xlu0 %v655, 64
    %v662 = vpop.permute.xlu0 %661
    %v664 = vmul.f32 %v654, %v662
    %666 = vrot.lane.b32.xlu0 %v664, 32
    %v667 = vpop.permute.xlu0 %666
    %v669 = vadd.f32 %v659, %v667
    %v670 = vtanh.pop %v669
    %672 = vrot.lane.b32.xlu0 %v670, 64
    %v673 = vpop.permute.xlu0 %672
    %v675 = vmul.f32 %v654, %v673
    %v676 = vxor.u32 %v648, 2147483648
    %v677 = vmul.f32 %v676, 1.442695
    %v678 = vpow.pop %v677
    %v679 = vadd.f32 %v678, 1.0
    %v680 = vrcp.pop %v679
    %v681 = vmul.f32 1.0, %v680
    %v682 = vtanh.pop %v648
    %v684 = vrot.slane %v576, 2
    %v686 = vmul.f32 %v681, %v684
    %688 = vrot.lane.b32.xlu0 %v682, 64
    %v689 = vpop.permute.xlu0 %688
    %v691 = vmul.f32 %v681, %v689
    %693 = vrot.lane.b32.xlu0 %v691, 32
    %v694 = vpop.permute.xlu0 %693
    %v696 = vadd.f32 %v686, %v694
    %v697 = vtanh.pop %v696
    %699 = vrot.lane.b32.xlu0 %v697, 64
    %v700 = vpop.permute.xlu0 %699
    %v702 = vmul.f32 %v681, %v700
    %v703 = vmul.f32 %v239, %v669
    %704 = vrot.lane.b32.xlu0 %v657, 96
    %v705 = vpop.permute.xlu0 %704
    %v707 = vmul.f32 %v246, %v705
    %709 = vrot.lane.b32.xlu0 %v707, 32
    %v710 = vpop.permute.xlu0 %709
    %v712 = vadd.f32 %v703, %v710
    %v713 = vmul.f32 %v239, %v675
    %v714 = vrot.slane %v566, 6
    %715 = vrot.lane.b32.xlu0 %v714, 32
    %v716 = vpop.permute.xlu0 %715
    %v718 = vmul.f32 %v246, %v716
    %720 = vrot.lane.b32.xlu0 %v718, 96
    %v721 = vpop.permute.xlu0 %720
    %v723 = vadd.f32 %v713, %v721
    %v724 = vmul.f32 %v255, %v696
    %725 = vrot.lane.b32.xlu0 %v684, 96
    %v726 = vpop.permute.xlu0 %725
    %v728 = vmul.f32 %v262, %v726
    %730 = vrot.lane.b32.xlu0 %v728, 32
    %v731 = vpop.permute.xlu0 %730
    %v733 = vadd.f32 %v724, %v731
    %v734 = vmul.f32 %v255, %v702
    %v735 = vrot.slane %v586, 2
    %736 = vrot.lane.b32.xlu0 %v735, 32
    %v737 = vpop.permute.xlu0 %736
    %v739 = vmul.f32 %v262, %v737
    %741 = vrot.lane.b32.xlu0 %v739, 96
    %v742 = vpop.permute.xlu0 %741
    %v744 = vadd.f32 %v734, %v742
    %746 = vrot.lane.b32.xlu0 %v723, 32
    %v747 = vpop.permute.xlu0 %746
    %v750 = vrot.slane %v744, 2
    %751 = vrot.lane.b32.xlu0 %v750, 64
    %v752 = vpop.permute.xlu0 %751
    %v754 = vsel %vm64, %v747, %v752
    %v755 = vpack.c.bf16 %v754, %v754
    %v757 = vrot.slane %v755, 3
    %v759 = vsel %vm138, %v757, 0
    %761 = vmatprep.subr.bf16.mxu0 %v130
    %762 = vmatpush1.bf16.msra.mxu0 %v129
    %763 = vmatprep.subr.bf16.mxu0 %v132
    %764 = vmatpush1.bf16.msra.mxu0 %v131
    %765 = vmatprep.subr.bf16.mxu0 %v134
    %766 = vmatpush1.bf16.msra.mxu0 %v133
    %767 = vmatprep.subr.bf16.mxu0 %v136
    %768 = vmatpush1.bf16.msra.mxu0 %v135
    %769 = vmatprep.subr.bf16.mxu0 0
    %770 = vmatpush1.bf16.msra.mxu0 0
    %771 = vmatprep.subr.bf16.mxu0 0
    %772 = vmatpush1.bf16.msra.mxu0 0
    %773 = vmatprep.subr.bf16.mxu0 0
    %774 = vmatpush1.bf16.msra.mxu0 0
    %775 = vmatprep.subr.bf16.mxu0 0
    %776 = vmatpush1.bf16.msra.mxu0 0
    %777 = vmatprep.subr.bf16.mxu0 0
    %778 = vmatpush1.bf16.msra.mxu0 0
    %779 = vmatprep.subr.bf16.mxu0 0
    %780 = vmatpush1.bf16.msra.mxu0 0
    %781 = vmatprep.subr.bf16.mxu0 0
    %782 = vmatpush1.bf16.msra.mxu0 0
    %783 = vmatprep.subr.bf16.mxu0 0
    %784 = vmatpush1.bf16.msra.mxu0 0
    %785 = vmatprep.subr.bf16.mxu0 0
    %786 = vmatpush1.bf16.msra.mxu0 0
    %787 = vmatprep.subr.bf16.mxu0 0
    %788 = vmatpush1.bf16.msra.mxu0 0
    %789 = vmatprep.subr.bf16.mxu0 0
    %790 = vmatpush1.bf16.msra.mxu0 0
    %791 = vmatprep.subr.bf16.mxu0 0
    %792 = vmatpush1.bf16.msra.mxu0 0
    %793 = vmatprep.mubr.bf16.mxu0 0
    %794 = vmatmul.mubr.bf16.gmra.mrb[0].mxu0 %v759
    %v795 = vpop.f32.mrb[0].mxu0
    %v796 = vadd.f32 0.0, %v795
    %v797 = vpop.f32.mrb[0].mxu0
    %v798 = vadd.f32 0.0, %v797
    %v799 = vpop.f32.mrb[0].mxu0
    %v800 = vpop.f32.mrb[0].mxu0
    %801 = vdwg.mxu0
    %v802 = vadd.f32 %v107, %v796
    %v804 = vrot.slane %v798, 2
    %v806 = vadd.f32 %v105, %v804
    %v807 = vxor.u32 %v802, 2147483648
    %v808 = vmul.f32 %v807, 1.442695
    %v809 = vpow.pop %v808
    %v810 = vadd.f32 %v809, 1.0
    %v811 = vrcp.pop %v810
    %v812 = vmul.f32 1.0, %v811
    %v813 = vtanh.pop %v802
    %v815 = vrot.slane %v712, 6
    %v817 = vmul.f32 %v812, %v815
    %819 = vrot.lane.b32.xlu0 %v813, 64
    %v820 = vpop.permute.xlu0 %819
    %v822 = vmul.f32 %v812, %v820
    %824 = vrot.lane.b32.xlu0 %v822, 32
    %v825 = vpop.permute.xlu0 %824
    %v827 = vadd.f32 %v817, %v825
    %v828 = vtanh.pop %v827
    %830 = vrot.lane.b32.xlu0 %v828, 64
    %v831 = vpop.permute.xlu0 %830
    %v833 = vmul.f32 %v812, %v831
    %v834 = vxor.u32 %v806, 2147483648
    %v835 = vmul.f32 %v834, 1.442695
    %v836 = vpow.pop %v835
    %v837 = vadd.f32 %v836, 1.0
    %v838 = vrcp.pop %v837
    %v839 = vmul.f32 1.0, %v838
    %v840 = vtanh.pop %v806
    %v842 = vrot.slane %v733, 2
    %v844 = vmul.f32 %v839, %v842
    %846 = vrot.lane.b32.xlu0 %v840, 64
    %v847 = vpop.permute.xlu0 %846
    %v849 = vmul.f32 %v839, %v847
    %851 = vrot.lane.b32.xlu0 %v849, 32
    %v852 = vpop.permute.xlu0 %851
    %v854 = vadd.f32 %v844, %v852
    %v855 = vtanh.pop %v854
    %857 = vrot.lane.b32.xlu0 %v855, 64
    %v858 = vpop.permute.xlu0 %857
    %v860 = vmul.f32 %v839, %v858
    %v861 = vmul.f32 %v255, %v827
    %862 = vrot.lane.b32.xlu0 %v815, 96
    %v863 = vpop.permute.xlu0 %862
    %v865 = vmul.f32 %v262, %v863
    %867 = vrot.lane.b32.xlu0 %v865, 32
    %v868 = vpop.permute.xlu0 %867
    %v870 = vadd.f32 %v861, %v868
    %v871 = vmul.f32 %v255, %v833
    %v872 = vrot.slane %v723, 6
    %873 = vrot.lane.b32.xlu0 %v872, 32
    %v874 = vpop.permute.xlu0 %873
    %v876 = vmul.f32 %v262, %v874
    %878 = vrot.lane.b32.xlu0 %v876, 96
    %v879 = vpop.permute.xlu0 %878
    %v881 = vadd.f32 %v871, %v879
    %v882 = vmul.f32 %v239, %v854
    %883 = vrot.lane.b32.xlu0 %v842, 96
    %v884 = vpop.permute.xlu0 %883
    %v886 = vmul.f32 %v246, %v884
    %888 = vrot.lane.b32.xlu0 %v886, 32
    %v889 = vpop.permute.xlu0 %888
    %v891 = vadd.f32 %v882, %v889
    %v892 = vmul.f32 %v239, %v860
    %893 = vrot.lane.b32.xlu0 %v750, 32
    %v894 = vpop.permute.xlu0 %893
    %v896 = vmul.f32 %v246, %v894
    %898 = vrot.lane.b32.xlu0 %v896, 96
    %v899 = vpop.permute.xlu0 %898
    %v901 = vadd.f32 %v892, %v899
    %903 = vrot.lane.b32.xlu0 %v881, 32
    %v904 = vpop.permute.xlu0 %903
    %v907 = vrot.slane %v901, 6
    %908 = vrot.lane.b32.xlu0 %v907, 64
    %v909 = vpop.permute.xlu0 %908
    %v911 = vsel %vm64, %v904, %v909
    %v912 = vpack.c.bf16 %v911, %v911
    %v914 = vsel %vm138, %v912, 0
    %916 = vmatprep.subr.bf16.mxu0 %v130
    %917 = vmatpush1.bf16.msra.mxu0 %v129
    %918 = vmatprep.subr.bf16.mxu0 %v132
    %919 = vmatpush1.bf16.msra.mxu0 %v131
    %920 = vmatprep.subr.bf16.mxu0 %v134
    %921 = vmatpush1.bf16.msra.mxu0 %v133
    %922 = vmatprep.subr.bf16.mxu0 %v136
    %923 = vmatpush1.bf16.msra.mxu0 %v135
    %924 = vmatprep.subr.bf16.mxu0 0
    %925 = vmatpush1.bf16.msra.mxu0 0
    %926 = vmatprep.subr.bf16.mxu0 0
    %927 = vmatpush1.bf16.msra.mxu0 0
    %928 = vmatprep.subr.bf16.mxu0 0
    %929 = vmatpush1.bf16.msra.mxu0 0
    %930 = vmatprep.subr.bf16.mxu0 0
    %931 = vmatpush1.bf16.msra.mxu0 0
    %932 = vmatprep.subr.bf16.mxu0 0
    %933 = vmatpush1.bf16.msra.mxu0 0
    %934 = vmatprep.subr.bf16.mxu0 0
    %935 = vmatpush1.bf16.msra.mxu0 0
    %936 = vmatprep.subr.bf16.mxu0 0
    %937 = vmatpush1.bf16.msra.mxu0 0
    %938 = vmatprep.subr.bf16.mxu0 0
    %939 = vmatpush1.bf16.msra.mxu0 0
    %940 = vmatprep.subr.bf16.mxu0 0
    %941 = vmatpush1.bf16.msra.mxu0 0
    %942 = vmatprep.subr.bf16.mxu0 0
    %943 = vmatpush1.bf16.msra.mxu0 0
    %944 = vmatprep.subr.bf16.mxu0 0
    %945 = vmatpush1.bf16.msra.mxu0 0
    %946 = vmatprep.subr.bf16.mxu0 0
    %947 = vmatpush1.bf16.msra.mxu0 0
    %948 = vmatprep.mubr.bf16.mxu0 0
    %949 = vmatmul.mubr.bf16.gmra.mrb[0].mxu0 %v914
    %v950 = vpop.f32.mrb[0].mxu0
    %v951 = vadd.f32 0.0, %v950
    %v952 = vpop.f32.mrb[0].mxu0
    %v953 = vadd.f32 0.0, %v952
    %v954 = vpop.f32.mrb[0].mxu0
    %v955 = vpop.f32.mrb[0].mxu0
    %956 = vdwg.mxu0
    %v958 = vrot.slane %v951, 6
    %v960 = vadd.f32 %v107, %v958
    %v962 = vrot.slane %v953, 4
    %v964 = vadd.f32 %v105, %v962
    %v965 = vxor.u32 %v960, 2147483648
    %v966 = vmul.f32 %v965, 1.442695
    %v967 = vpow.pop %v966
    %v968 = vadd.f32 %v967, 1.0
    %v969 = vrcp.pop %v968
    %v970 = vmul.f32 1.0, %v969
    %v971 = vtanh.pop %v960
    %v973 = vrot.slane %v870, 6
    %v975 = vmul.f32 %v970, %v973
    %977 = vrot.lane.b32.xlu0 %v971, 64
    %v978 = vpop.permute.xlu0 %977
    %v980 = vmul.f32 %v970, %v978
    %982 = vrot.lane.b32.xlu0 %v980, 32
    %v983 = vpop.permute.xlu0 %982
    %v985 = vadd.f32 %v975, %v983
    %v986 = vtanh.pop %v985
    %988 = vrot.lane.b32.xlu0 %v986, 64
    %v989 = vpop.permute.xlu0 %988
    %v991 = vmul.f32 %v970, %v989
    %v992 = vxor.u32 %v964, 2147483648
    %v993 = vmul.f32 %v992, 1.442695
    %v994 = vpow.pop %v993
    %v995 = vadd.f32 %v994, 1.0
    %v996 = vrcp.pop %v995
    %v997 = vmul.f32 1.0, %v996
    %v998 = vtanh.pop %v964
    %v1000 = vrot.slane %v891, 2
    %v1002 = vmul.f32 %v997, %v1000
    %1004 = vrot.lane.b32.xlu0 %v998, 64
    %v1005 = vpop.permute.xlu0 %1004
    %v1007 = vmul.f32 %v997, %v1005
    %1009 = vrot.lane.b32.xlu0 %v1007, 32
    %v1010 = vpop.permute.xlu0 %1009
    %v1012 = vadd.f32 %v1002, %v1010
    %v1013 = vtanh.pop %v1012
    %1015 = vrot.lane.b32.xlu0 %v1013, 64
    %v1016 = vpop.permute.xlu0 %1015
    %v1018 = vmul.f32 %v997, %v1016
    %v1019 = vmul.f32 %v255, %v985
    %1020 = vrot.lane.b32.xlu0 %v973, 96
    %v1021 = vpop.permute.xlu0 %1020
    %v1023 = vmul.f32 %v262, %v1021
    %1025 = vrot.lane.b32.xlu0 %v1023, 32
    %v1026 = vpop.permute.xlu0 %1025
    %v1028 = vadd.f32 %v1019, %v1026
    %v1029 = vmul.f32 %v255, %v991
    %v1030 = vrot.slane %v881, 6
    %1031 = vrot.lane.b32.xlu0 %v1030, 32
    %v1032 = vpop.permute.xlu0 %1031
    %v1034 = vmul.f32 %v262, %v1032
    %1036 = vrot.lane.b32.xlu0 %v1034, 96
    %v1037 = vpop.permute.xlu0 %1036
    %v1039 = vadd.f32 %v1029, %v1037
    %v1040 = vmul.f32 %v239, %v1012
    %1041 = vrot.lane.b32.xlu0 %v1000, 96
    %v1042 = vpop.permute.xlu0 %1041
    %v1044 = vmul.f32 %v246, %v1042
    %1046 = vrot.lane.b32.xlu0 %v1044, 32
    %v1047 = vpop.permute.xlu0 %1046
    %v1049 = vadd.f32 %v1040, %v1047
    %v1050 = vmul.f32 %v239, %v1018
    %v1051 = vrot.slane %v901, 2
    %1052 = vrot.lane.b32.xlu0 %v1051, 32
    %v1053 = vpop.permute.xlu0 %1052
    %v1055 = vmul.f32 %v246, %v1053
    %1057 = vrot.lane.b32.xlu0 %v1055, 96
    %v1058 = vpop.permute.xlu0 %1057
    %v1060 = vadd.f32 %v1050, %v1058
    %1062 = vrot.lane.b32.xlu0 %v1039, 32
    %v1063 = vpop.permute.xlu0 %1062
    %v1066 = vrot.slane %v1060, 2
    %1067 = vrot.lane.b32.xlu0 %v1066, 64
    %v1068 = vpop.permute.xlu0 %1067
    %v1070 = vsel %vm64, %v1063, %v1068
    %v1071 = vpack.c.bf16 %v1070, %v1070
    %v1073 = vrot.slane %v1071, 1
    %v1075 = vsel %vm138, %v1073, 0
    %1077 = vmatprep.subr.bf16.mxu0 %v130
    %1078 = vmatpush1.bf16.msra.mxu0 %v129
    %1079 = vmatprep.subr.bf16.mxu0 %v132
    %1080 = vmatpush1.bf16.msra.mxu0 %v131
    %1081 = vmatprep.subr.bf16.mxu0 %v134
    %1082 = vmatpush1.bf16.msra.mxu0 %v133
    %1083 = vmatprep.subr.bf16.mxu0 %v136
    %1084 = vmatpush1.bf16.msra.mxu0 %v135
    %1085 = vmatprep.subr.bf16.mxu0 0
    %1086 = vmatpush1.bf16.msra.mxu0 0
    %1087 = vmatprep.subr.bf16.mxu0 0
    %1088 = vmatpush1.bf16.msra.mxu0 0
    %1089 = vmatprep.subr.bf16.mxu0 0
    %1090 = vmatpush1.bf16.msra.mxu0 0
    %1091 = vmatprep.subr.bf16.mxu0 0
    %1092 = vmatpush1.bf16.msra.mxu0 0
    %1093 = vmatprep.subr.bf16.mxu0 0
    %1094 = vmatpush1.bf16.msra.mxu0 0
    %1095 = vmatprep.subr.bf16.mxu0 0
    %1096 = vmatpush1.bf16.msra.mxu0 0
    %1097 = vmatprep.subr.bf16.mxu0 0
    %1098 = vmatpush1.bf16.msra.mxu0 0
    %1099 = vmatprep.subr.bf16.mxu0 0
    %1100 = vmatpush1.bf16.msra.mxu0 0
    %1101 = vmatprep.subr.bf16.mxu0 0
    %1102 = vmatpush1.bf16.msra.mxu0 0
    %1103 = vmatprep.subr.bf16.mxu0 0
    %1104 = vmatpush1.bf16.msra.mxu0 0
    %1105 = vmatprep.subr.bf16.mxu0 0
    %1106 = vmatpush1.bf16.msra.mxu0 0
    %1107 = vmatprep.subr.bf16.mxu0 0
    %1108 = vmatpush1.bf16.msra.mxu0 0
    %1109 = vmatprep.mubr.bf16.mxu0 0
    %1110 = vmatmul.mubr.bf16.gmra.mrb[0].mxu0 %v1075
    %v1111 = vpop.f32.mrb[0].mxu0
    %v1112 = vadd.f32 0.0, %v1111
    %v1113 = vpop.f32.mrb[0].mxu0
    %v1114 = vadd.f32 0.0, %v1113
    %v1115 = vpop.f32.mrb[0].mxu0
    %v1116 = vpop.f32.mrb[0].mxu0
    %1117 = vdwg.mxu0
    %v1119 = vrot.slane %v1112, 4
    %v1121 = vadd.f32 %v107, %v1119
    %v1123 = vrot.slane %v1114, 6
    %v1125 = vadd.f32 %v105, %v1123
    %v1126 = vxor.u32 %v1121, 2147483648
    %v1127 = vmul.f32 %v1126, 1.442695
    %v1128 = vpow.pop %v1127
    %v1129 = vadd.f32 %v1128, 1.0
    %v1130 = vrcp.pop %v1129
    %v1131 = vmul.f32 1.0, %v1130
    %v1132 = vtanh.pop %v1121
    %v1134 = vrot.slane %v1028, 6
    %v1136 = vmul.f32 %v1131, %v1134
    %1138 = vrot.lane.b32.xlu0 %v1132, 64
    %v1139 = vpop.permute.xlu0 %1138
    %v1141 = vmul.f32 %v1131, %v1139
    %1143 = vrot.lane.b32.xlu0 %v1141, 32
    %v1144 = vpop.permute.xlu0 %1143
    %v1146 = vadd.f32 %v1136, %v1144
    %v1147 = vtanh.pop %v1146
    %1149 = vrot.lane.b32.xlu0 %v1147, 64
    %v1150 = vpop.permute.xlu0 %1149
    %v1152 = vmul.f32 %v1131, %v1150
    %v1153 = vxor.u32 %v1125, 2147483648
    %v1154 = vmul.f32 %v1153, 1.442695
    %v1155 = vpow.pop %v1154
    %v1156 = vadd.f32 %v1155, 1.0
    %v1157 = vrcp.pop %v1156
    %v1158 = vmul.f32 1.0, %v1157
    %v1159 = vtanh.pop %v1125
    %v1161 = vrot.slane %v1049, 2
    %v1163 = vmul.f32 %v1158, %v1161
    %1165 = vrot.lane.b32.xlu0 %v1159, 64
    %v1166 = vpop.permute.xlu0 %1165
    %v1168 = vmul.f32 %v1158, %v1166
    %1170 = vrot.lane.b32.xlu0 %v1168, 32
    %v1171 = vpop.permute.xlu0 %1170
    %v1173 = vadd.f32 %v1163, %v1171
    %v1174 = vtanh.pop %v1173
    %1176 = vrot.lane.b32.xlu0 %v1174, 64
    %v1177 = vpop.permute.xlu0 %1176
    %v1179 = vmul.f32 %v1158, %v1177
    %v1180 = vmul.f32 %v255, %v1146
    %1181 = vrot.lane.b32.xlu0 %v1134, 96
    %v1182 = vpop.permute.xlu0 %1181
    %v1184 = vmul.f32 %v262, %v1182
    %1186 = vrot.lane.b32.xlu0 %v1184, 32
    %v1187 = vpop.permute.xlu0 %1186
    %v1189 = vadd.f32 %v1180, %v1187
    %v1190 = vmul.f32 %v255, %v1152
    %v1191 = vrot.slane %v1039, 6
    %1192 = vrot.lane.b32.xlu0 %v1191, 32
    %v1193 = vpop.permute.xlu0 %1192
    %v1195 = vmul.f32 %v262, %v1193
    %1197 = vrot.lane.b32.xlu0 %v1195, 96
    %v1198 = vpop.permute.xlu0 %1197
    %v1200 = vadd.f32 %v1190, %v1198
    %v1201 = vmul.f32 %v239, %v1173
    %1202 = vrot.lane.b32.xlu0 %v1161, 96
    %v1203 = vpop.permute.xlu0 %1202
    %v1205 = vmul.f32 %v246, %v1203
    %1207 = vrot.lane.b32.xlu0 %v1205, 32
    %v1208 = vpop.permute.xlu0 %1207
    %v1210 = vadd.f32 %v1201, %v1208
    %v1211 = vmul.f32 %v239, %v1179
    %1212 = vrot.lane.b32.xlu0 %v1066, 32
    %v1213 = vpop.permute.xlu0 %1212
    %v1215 = vmul.f32 %v246, %v1213
    %1217 = vrot.lane.b32.xlu0 %v1215, 96
    %v1218 = vpop.permute.xlu0 %1217
    %v1220 = vadd.f32 %v1211, %v1218
    %1222 = vrot.lane.b32.xlu0 %v1200, 32
    %v1223 = vpop.permute.xlu0 %1222
    %v1226 = vrot.slane %v1220, 6
    %1227 = vrot.lane.b32.xlu0 %v1226, 64
    %v1228 = vpop.permute.xlu0 %1227
    %v1230 = vsel %vm64, %v1223, %v1228
    %v1231 = vpack.c.bf16 %v1230, %v1230
    %v1233 = vrot.slane %v1231, 2
    %v1235 = vsel %vm138, %v1233, 0
    %1237 = vmatprep.subr.bf16.mxu0 %v130
    %1238 = vmatpush1.bf16.msra.mxu0 %v129
    %1239 = vmatprep.subr.bf16.mxu0 %v132
    %1240 = vmatpush1.bf16.msra.mxu0 %v131
    %1241 = vmatprep.subr.bf16.mxu0 %v134
    %1242 = vmatpush1.bf16.msra.mxu0 %v133
    %1243 = vmatprep.subr.bf16.mxu0 %v136
    %1244 = vmatpush1.bf16.msra.mxu0 %v135
    %1245 = vmatprep.subr.bf16.mxu0 0
    %1246 = vmatpush1.bf16.msra.mxu0 0
    %1247 = vmatprep.subr.bf16.mxu0 0
    %1248 = vmatpush1.bf16.msra.mxu0 0
    %1249 = vmatprep.subr.bf16.mxu0 0
    %1250 = vmatpush1.bf16.msra.mxu0 0
    %1251 = vmatprep.subr.bf16.mxu0 0
    %1252 = vmatpush1.bf16.msra.mxu0 0
    %1253 = vmatprep.subr.bf16.mxu0 0
    %1254 = vmatpush1.bf16.msra.mxu0 0
    %1255 = vmatprep.subr.bf16.mxu0 0
    %1256 = vmatpush1.bf16.msra.mxu0 0
    %1257 = vmatprep.subr.bf16.mxu0 0
    %1258 = vmatpush1.bf16.msra.mxu0 0
    %1259 = vmatprep.subr.bf16.mxu0 0
    %1260 = vmatpush1.bf16.msra.mxu0 0
    %1261 = vmatprep.subr.bf16.mxu0 0
    %1262 = vmatpush1.bf16.msra.mxu0 0
    %1263 = vmatprep.subr.bf16.mxu0 0
    %1264 = vmatpush1.bf16.msra.mxu0 0
    %1265 = vmatprep.subr.bf16.mxu0 0
    %1266 = vmatpush1.bf16.msra.mxu0 0
    %1267 = vmatprep.subr.bf16.mxu0 0
    %1268 = vmatpush1.bf16.msra.mxu0 0
    %1269 = vmatprep.mubr.bf16.mxu0 0
    %1270 = vmatmul.mubr.bf16.gmra.mrb[0].mxu0 %v1235
    %v1271 = vpop.f32.mrb[0].mxu0
    %v1272 = vadd.f32 0.0, %v1271
    %v1273 = vpop.f32.mrb[0].mxu0
    %v1274 = vadd.f32 0.0, %v1273
    %v1275 = vpop.f32.mrb[0].mxu0
    %v1276 = vpop.f32.mrb[0].mxu0
    %1277 = vdwg.mxu0
    %v1279 = vrot.slane %v1272, 2
    %v1281 = vadd.f32 %v107, %v1279
    %v1282 = vadd.f32 %v105, %v1274
    %v1283 = vxor.u32 %v1281, 2147483648
    %v1284 = vmul.f32 %v1283, 1.442695
    %v1285 = vpow.pop %v1284
    %v1286 = vadd.f32 %v1285, 1.0
    %v1287 = vrcp.pop %v1286
    %v1288 = vmul.f32 1.0, %v1287
    %v1289 = vtanh.pop %v1281
    %v1291 = vrot.slane %v1189, 6
    %v1293 = vmul.f32 %v1288, %v1291
    %1295 = vrot.lane.b32.xlu0 %v1289, 64
    %v1296 = vpop.permute.xlu0 %1295
    %v1298 = vmul.f32 %v1288, %v1296
    %1300 = vrot.lane.b32.xlu0 %v1298, 32
    %v1301 = vpop.permute.xlu0 %1300
    %v1303 = vadd.f32 %v1293, %v1301
    %v1304 = vtanh.pop %v1303
    %1306 = vrot.lane.b32.xlu0 %v1304, 64
    %v1307 = vpop.permute.xlu0 %1306
    %v1309 = vmul.f32 %v1288, %v1307
    %v1310 = vxor.u32 %v1282, 2147483648
    %v1311 = vmul.f32 %v1310, 1.442695
    %v1312 = vpow.pop %v1311
    %v1313 = vadd.f32 %v1312, 1.0
    %v1314 = vrcp.pop %v1313
    %v1315 = vmul.f32 1.0, %v1314
    %v1316 = vtanh.pop %v1282
    %v1318 = vrot.slane %v1210, 2
    %v1320 = vmul.f32 %v1315, %v1318
    %1322 = vrot.lane.b32.xlu0 %v1316, 64
    %v1323 = vpop.permute.xlu0 %1322
    %v1325 = vmul.f32 %v1315, %v1323
    %1327 = vrot.lane.b32.xlu0 %v1325, 32
    %v1328 = vpop.permute.xlu0 %1327
    %v1330 = vadd.f32 %v1320, %v1328
    %v1331 = vtanh.pop %v1330
    %1333 = vrot.lane.b32.xlu0 %v1331, 64
    %v1334 = vpop.permute.xlu0 %1333
    %v1336 = vmul.f32 %v1315, %v1334
    %v1337 = vmul.f32 %v255, %v1309
    %v1338 = vmul.f32 %v239, %v1336
    %v1339 = vadd.f32 %v250, %v1338
    %1341 = vrot.lane.b32.xlu0 %v1339, 32
    %v1342 = vpop.permute.xlu0 %1341
    %vm1344 = vcmask 253952
    %1345 = vst.msk [vmem:[#allocation2] sm:$0x1] %vm1344, %v1342
    %vm1346 = vcmask 254977
    %1347 = vst.msk [vmem:[#allocation2 + $0x7] sm:$0x2] %vm1346, %v1342
    %v1348 = vadd.f32 %v395, %v1211
    %1350 = vrot.lane.b32.xlu0 %v1348, 32
    %v1351 = vpop.permute.xlu0 %1350
    %vm1353 = vcmask 256002
    %1354 = vst.msk [vmem:[#allocation2 - $0x1] sm:$0x4] %vm1353, %v1351
    %vm1355 = vcmask 257027
    %1356 = vst.msk [vmem:[#allocation2 + $0x6] sm:$0x8] %vm1355, %v1351
    %v1357 = vadd.f32 %v556, %v1050
    %1359 = vrot.lane.b32.xlu0 %v1357, 32
    %v1360 = vpop.permute.xlu0 %1359
    %vm1362 = vcmask 258052
    %1363 = vst.msk [vmem:[#allocation2 - $0x2] sm:$0x10] %vm1362, %v1360
    %vm1364 = vcmask 259077
    %1365 = vst.msk [vmem:[#allocation2 + $0x5] sm:$0x20] %vm1364, %v1360
    %v1366 = vadd.f32 %v713, %v892
    %1368 = vrot.lane.b32.xlu0 %v1366, 32
    %v1369 = vpop.permute.xlu0 %1368
    %vm1371 = vcmask 260102
    %1372 = vst.msk [vmem:[#allocation2 - $0x3] sm:$0x40] %vm1371, %v1369
    %vm1373 = vcmask 261127
    %1374 = vst.msk [vmem:[#allocation2 + $0x4] sm:$0x80] %vm1373, %v1369
    %v1375 = vadd.f32 %v871, %v734
    %1377 = vrot.lane.b32.xlu0 %v1375, 32
    %v1378 = vpop.permute.xlu0 %1377
    %1380 = vst.msk [vmem:[#allocation2 + $0x4] sm:$0x1] %vm1344, %v1378
    %1381 = vst.msk [vmem:[#allocation2 + $0xb] sm:$0x2] %vm1346, %v1378
    %v1382 = vadd.f32 %v1029, %v577
    %1384 = vrot.lane.b32.xlu0 %v1382, 32
    %v1385 = vpop.permute.xlu0 %1384
    %1387 = vst.msk [vmem:[#allocation2 + $0x3] sm:$0x4] %vm1353, %v1385
    %1388 = vst.msk [vmem:[#allocation2 + $0xa] sm:$0x8] %vm1355, %v1385
    %v1389 = vadd.f32 %v1190, %v416
    %1391 = vrot.lane.b32.xlu0 %v1389, 32
    %v1392 = vpop.permute.xlu0 %1391
    %1394 = vst.msk [vmem:[#allocation2 + $0x2] sm:$0x10] %vm1362, %v1392
    %1395 = vst.msk [vmem:[#allocation2 + $0x9] sm:$0x20] %vm1364, %v1392
    %v1396 = vadd.f32 %v1337, %v266
    %1398 = vrot.lane.b32.xlu0 %v1396, 32
    %v1399 = vpop.permute.xlu0 %1398
    %1401 = vst.msk [vmem:[#allocation2 + $0x1] sm:$0x40] %vm1371, %v1399
    %1402 = vst.msk [vmem:[#allocation2 + $0x8] sm:$0x80] %vm1373, %v1399
    %v1403 = vld [vmem:[#allocation2] sm:$0xff]
    %v1404 = vld [vmem:[#allocation2 + $0x8] sm:$0xff]
    %v1405 = vpack.c.bf16 %v1404, %v1403
    %v1406 = vld [vmem:[%s6] sm:$0xff]
    %v1407 = vld [vmem:[%s6 + $0x8] sm:$0xff]
    %v1408 = vld [vmem:[%s6 + $0x10] sm:$0xff]
    %v1409 = vld [vmem:[%s6 + $0x18] sm:$0xff]
    %v1410 = vpack.c.bf16 %v1407, %v1406
    %v1411 = vpack.c.bf16 %v1409, %v1408
    %v1413 = vsel %vm64, %v1405, 0
    %1415 = vmatprep.subr.bf16.mxu0 0
    %1416 = vmatpush1.bf16.msra.mxu0 %v1410
    %1417 = vmatprep.subr.bf16.mxu0 0
    %1418 = vmatpush1.bf16.msra.mxu0 %v1411
    %1419 = vmatprep.subr.bf16.mxu0 0
    %1420 = vmatpush1.bf16.msra.mxu0 0
    %1421 = vmatprep.subr.bf16.mxu0 0
    %1422 = vmatpush1.bf16.msra.mxu0 0
    %1423 = vmatprep.subr.bf16.mxu0 0
    %1424 = vmatpush1.bf16.msra.mxu0 0
    %1425 = vmatprep.subr.bf16.mxu0 0
    %1426 = vmatpush1.bf16.msra.mxu0 0
    %1427 = vmatprep.subr.bf16.mxu0 0
    %1428 = vmatpush1.bf16.msra.mxu0 0
    %1429 = vmatprep.subr.bf16.mxu0 0
    %1430 = vmatpush1.bf16.msra.mxu0 0
    %1431 = vmatprep.subr.bf16.mxu0 0
    %1432 = vmatpush1.bf16.msra.mxu0 0
    %1433 = vmatprep.subr.bf16.mxu0 0
    %1434 = vmatpush1.bf16.msra.mxu0 0
    %1435 = vmatprep.subr.bf16.mxu0 0
    %1436 = vmatpush1.bf16.msra.mxu0 0
    %1437 = vmatprep.subr.bf16.mxu0 0
    %1438 = vmatpush1.bf16.msra.mxu0 0
    %1439 = vmatprep.subr.bf16.mxu0 0
    %1440 = vmatpush1.bf16.msra.mxu0 0
    %1441 = vmatprep.subr.bf16.mxu0 0
    %1442 = vmatpush1.bf16.msra.mxu0 0
    %1443 = vmatprep.subr.bf16.mxu0 0
    %1444 = vmatpush1.bf16.msra.mxu0 0
    %1445 = vmatprep.subr.bf16.mxu0 0
    %1446 = vmatpush1.bf16.msra.mxu0 0
    %1447 = vmatprep.mubr.bf16.mxu0 0
    %1448 = vmatmul.mubr.bf16.gmra.mrb[0].mxu0 %v1413
    %v1449 = vpop.f32.mrb[0].mxu0
    %v1450 = vadd.f32 0.0, %v1449
    %v1451 = vpop.f32.mrb[0].mxu0
    %v1452 = vpop.f32.mrb[0].mxu0
    %v1453 = vadd.f32 0.0, %v1452
    %v1454 = vpop.f32.mrb[0].mxu0
    %1455 = vdwg.mxu0
    %v1456 = vld [vmem:[%s2] sm:$0x3]
    %vm1457 = vcmp.gt.f32.partialorder %v1456, 0.5
    %v1458 = vmul.f32 %v1450, 0.35355338
    %v1459 = vpack.c.bf16 %v1458, %v1458
    %v1460 = vpack.c.bf16 %v1450, %v1450
    %1462 = vrot.lane.b32.xlu0 %v1460, 96
    %v1463 = vpop.permute.xlu0 %1462
    %vm1464 = vcmask 64512
    %v1466 = vsel %vm1464, %v1459, 0
    %v1469 = vsel %vm1464, %v1463, 0
    %1471 = vmatprep.subr.bf16.mxu0 0
    %1472 = vmatpush1.bf16.xpose.msra.mxu0 %v1469
    %1473 = vmatprep.subr.bf16.mxu0 0
    %1474 = vmatpush1.bf16.xpose.msra.mxu0 0
    %1475 = vmatprep.subr.bf16.mxu0 0
    %1476 = vmatpush1.bf16.xpose.msra.mxu0 0
    %1477 = vmatprep.subr.bf16.mxu0 0
    %1478 = vmatpush1.bf16.xpose.msra.mxu0 0
    %1479 = vmatprep.subr.bf16.mxu0 0
    %1480 = vmatpush1.bf16.xpose.msra.mxu0 0
    %1481 = vmatprep.subr.bf16.mxu0 0
    %1482 = vmatpush1.bf16.xpose.msra.mxu0 0
    %1483 = vmatprep.subr.bf16.mxu0 0
    %1484 = vmatpush1.bf16.xpose.msra.mxu0 0
    %1485 = vmatprep.subr.bf16.mxu0 0
    %1486 = vmatpush1.bf16.xpose.msra.mxu0 0
    %1487 = vmatprep.subr.bf16.mxu0 0
    %1488 = vmatpush1.bf16.xpose.msra.mxu0 0
    %1489 = vmatprep.subr.bf16.mxu0 0
    %1490 = vmatpush1.bf16.xpose.msra.mxu0 0
    %1491 = vmatprep.subr.bf16.mxu0 0
    %1492 = vmatpush1.bf16.xpose.msra.mxu0 0
    %1493 = vmatprep.subr.bf16.mxu0 0
    %1494 = vmatpush1.bf16.xpose.msra.mxu0 0
    %1495 = vmatprep.subr.bf16.mxu0 0
    %1496 = vmatpush1.bf16.xpose.msra.mxu0 0
    %1497 = vmatprep.subr.bf16.mxu0 0
    %1498 = vmatpush1.bf16.xpose.msra.mxu0 0
    %1499 = vmatprep.subr.bf16.mxu0 0
    %1500 = vmatpush1.bf16.xpose.msra.mxu0 0
    %1501 = vmatprep.subr.bf16.mxu0 0
    %1502 = vmatpush1.bf16.xpose.msra.mxu0 0
    %1503 = vmatprep.mubr.bf16.mxu0 0
    %1504 = vmatmul.mubr.bf16.gmra.mrb[0].mxu0 %v1466
    %v1505 = vpop.f32.mrb[0].mxu0
    %v1506 = vadd.f32 0.0, %v1505
    %v1507 = vpop.f32.mrb[0].mxu0
    %v1508 = vpop.f32.mrb[0].mxu0
    %v1509 = vpop.f32.mrb[0].mxu0
    %1510 = vdwg.mxu0
    %v1511 = vsel %vm1457, 1, 0
    %v1512 = vlaneseq
    %v1513 = vshrl.u32 %v1512, 7
    %v1514 = vsub.s32 0, %v1513
    %v1515 = vrot.slane %v1511, %v1514
    %vm1516 = vcmp.eq.s32.totalorder %v1515, 1
    %v1517 = vsel %vm1516, -1e+09, %v1506
    %v1518 = vsel %vm1464, %v1517, -inf
    %1519 = vmax.xlane.f32.xlu0 %v1518
    %v1520 = vpop.xlane.xlu0 %1519
    %v1521 = vsub.f32 %v1517, %v1520
    %v1522 = vmul.f32 %v1521, 1.442695
    %v1523 = vpow.pop %v1522
    %v1524 = vsel %vm1464, %v1523, 0.0
    %1525 = vadd.xlane.f32.xlu0 %v1524
    %v1526 = vpop.xlane.xlu0 %1525
    %v1527 = vrcp.pop %v1526
    %v1528 = vmul.f32 %v1523, %v1527
    %v1529 = vpack.c.bf16 %v1528, %v1528
    %1530 = vrot.lane.b32.xlu0 %v1460, 64
    %v1531 = vpop.permute.xlu0 %1530
    %v1533 = vsel %vm1464, %v1529, 0
    %vm1535 = vcmask 1043456
    %v1537 = vsel %vm1535, %v1531, 0
    %1539 = vmatprep.subr.bf16.mxu0 0
    %1540 = vmatpush1.bf16.msra.mxu0 %v1537
    %1541 = vmatprep.subr.bf16.mxu0 0
    %1542 = vmatpush1.bf16.msra.mxu0 0
    %1543 = vmatprep.subr.bf16.mxu0 0
    %1544 = vmatpush1.bf16.msra.mxu0 0
    %1545 = vmatprep.subr.bf16.mxu0 0
    %1546 = vmatpush1.bf16.msra.mxu0 0
    %1547 = vmatprep.subr.bf16.mxu0 0
    %1548 = vmatpush1.bf16.msra.mxu0 0
    %1549 = vmatprep.subr.bf16.mxu0 0
    %1550 = vmatpush1.bf16.msra.mxu0 0
    %1551 = vmatprep.subr.bf16.mxu0 0
    %1552 = vmatpush1.bf16.msra.mxu0 0
    %1553 = vmatprep.subr.bf16.mxu0 0
    %1554 = vmatpush1.bf16.msra.mxu0 0
    %1555 = vmatprep.subr.bf16.mxu0 0
    %1556 = vmatpush1.bf16.msra.mxu0 0
    %1557 = vmatprep.subr.bf16.mxu0 0
    %1558 = vmatpush1.bf16.msra.mxu0 0
    %1559 = vmatprep.subr.bf16.mxu0 0
    %1560 = vmatpush1.bf16.msra.mxu0 0
    %1561 = vmatprep.subr.bf16.mxu0 0
    %1562 = vmatpush1.bf16.msra.mxu0 0
    %1563 = vmatprep.subr.bf16.mxu0 0
    %1564 = vmatpush1.bf16.msra.mxu0 0
    %1565 = vmatprep.subr.bf16.mxu0 0
    %1566 = vmatpush1.bf16.msra.mxu0 0
    %1567 = vmatprep.subr.bf16.mxu0 0
    %1568 = vmatpush1.bf16.msra.mxu0 0
    %1569 = vmatprep.subr.bf16.mxu0 0
    %1570 = vmatpush1.bf16.msra.mxu0 0
    %1571 = vmatprep.mubr.bf16.mxu0 0
    %1572 = vmatmul.mubr.bf16.gmra.mrb[0].mxu0 %v1533
    %v1573 = vpop.f32.mrb[0].mxu0
    %v1574 = vadd.f32 0.0, %v1573
    %v1575 = vpop.f32.mrb[0].mxu0
    %v1576 = vpop.f32.mrb[0].mxu0
    %v1577 = vpop.f32.mrb[0].mxu0
    %1578 = vdwg.mxu0
    %1579 = vst.msk [vmem:[#allocation3] sm:$0xff] %vm1464, %v1574
    %1581 = vrot.lane.b32.xlu0 %v1459, 120
    %v1582 = vpop.permute.xlu0 %1581
    %1583 = vrot.lane.b32.xlu0 %v1460, 88
    %v1584 = vpop.permute.xlu0 %1583
    %v1586 = vsel %vm1464, %v1582, 0
    %v1589 = vsel %vm1464, %v1584, 0
    %1591 = vmatprep.subr.bf16.mxu0 0
    %1592 = vmatpush1.bf16.xpose.msra.mxu0 %v1589
    %1593 = vmatprep.subr.bf16.mxu0 0
    %1594 = vmatpush1.bf16.xpose.msra.mxu0 0
    %1595 = vmatprep.subr.bf16.mxu0 0
    %1596 = vmatpush1.bf16.xpose.msra.mxu0 0
    %1597 = vmatprep.subr.bf16.mxu0 0
    %1598 = vmatpush1.bf16.xpose.msra.mxu0 0
    %1599 = vmatprep.subr.bf16.mxu0 0
    %1600 = vmatpush1.bf16.xpose.msra.mxu0 0
    %1601 = vmatprep.subr.bf16.mxu0 0
    %1602 = vmatpush1.bf16.xpose.msra.mxu0 0
    %1603 = vmatprep.subr.bf16.mxu0 0
    %1604 = vmatpush1.bf16.xpose.msra.mxu0 0
    %1605 = vmatprep.subr.bf16.mxu0 0
    %1606 = vmatpush1.bf16.xpose.msra.mxu0 0
    %1607 = vmatprep.subr.bf16.mxu0 0
    %1608 = vmatpush1.bf16.xpose.msra.mxu0 0
    %1609 = vmatprep.subr.bf16.mxu0 0
    %1610 = vmatpush1.bf16.xpose.msra.mxu0 0
    %1611 = vmatprep.subr.bf16.mxu0 0
    %1612 = vmatpush1.bf16.xpose.msra.mxu0 0
    %1613 = vmatprep.subr.bf16.mxu0 0
    %1614 = vmatpush1.bf16.xpose.msra.mxu0 0
    %1615 = vmatprep.subr.bf16.mxu0 0
    %1616 = vmatpush1.bf16.xpose.msra.mxu0 0
    %1617 = vmatprep.subr.bf16.mxu0 0
    %1618 = vmatpush1.bf16.xpose.msra.mxu0 0
    %1619 = vmatprep.subr.bf16.mxu0 0
    %1620 = vmatpush1.bf16.xpose.msra.mxu0 0
    %1621 = vmatprep.subr.bf16.mxu0 0
    %1622 = vmatpush1.bf16.xpose.msra.mxu0 0
    %1623 = vmatprep.mubr.bf16.mxu0 0
    %1624 = vmatmul.mubr.bf16.gmra.mrb[0].mxu0 %v1586
    %v1625 = vpop.f32.mrb[0].mxu0
    %v1626 = vadd.f32 0.0, %v1625
    %v1627 = vpop.f32.mrb[0].mxu0
    %v1628 = vpop.f32.mrb[0].mxu0
    %v1629 = vpop.f32.mrb[0].mxu0
    %1630 = vdwg.mxu0
    %v1631 = vsel %vm1516, -1e+09, %v1626
    %v1632 = vsel %vm1464, %v1631, -inf
    %1633 = vmax.xlane.f32.xlu0 %v1632
    %v1634 = vpop.xlane.xlu0 %1633
    %v1635 = vsub.f32 %v1631, %v1634
    %v1636 = vmul.f32 %v1635, 1.442695
    %v1637 = vpow.pop %v1636
    %v1638 = vsel %vm1464, %v1637, 0.0
    %1639 = vadd.xlane.f32.xlu0 %v1638
    %v1640 = vpop.xlane.xlu0 %1639
    %v1641 = vrcp.pop %v1640
    %v1642 = vmul.f32 %v1637, %v1641
    %v1643 = vpack.c.bf16 %v1642, %v1642
    %1644 = vrot.lane.b32.xlu0 %v1460, 56
    %v1645 = vpop.permute.xlu0 %1644
    %v1647 = vsel %vm1464, %v1643, 0
    %v1650 = vsel %vm1535, %v1645, 0
    %1652 = vmatprep.subr.bf16.mxu0 0
    %1653 = vmatpush1.bf16.msra.mxu0 %v1650
    %1654 = vmatprep.subr.bf16.mxu0 0
    %1655 = vmatpush1.bf16.msra.mxu0 0
    %1656 = vmatprep.subr.bf16.mxu0 0
    %1657 = vmatpush1.bf16.msra.mxu0 0
    %1658 = vmatprep.subr.bf16.mxu0 0
    %1659 = vmatpush1.bf16.msra.mxu0 0
    %1660 = vmatprep.subr.bf16.mxu0 0
    %1661 = vmatpush1.bf16.msra.mxu0 0
    %1662 = vmatprep.subr.bf16.mxu0 0
    %1663 = vmatpush1.bf16.msra.mxu0 0
    %1664 = vmatprep.subr.bf16.mxu0 0
    %1665 = vmatpush1.bf16.msra.mxu0 0
    %1666 = vmatprep.subr.bf16.mxu0 0
    %1667 = vmatpush1.bf16.msra.mxu0 0
    %1668 = vmatprep.subr.bf16.mxu0 0
    %1669 = vmatpush1.bf16.msra.mxu0 0
    %1670 = vmatprep.subr.bf16.mxu0 0
    %1671 = vmatpush1.bf16.msra.mxu0 0
    %1672 = vmatprep.subr.bf16.mxu0 0
    %1673 = vmatpush1.bf16.msra.mxu0 0
    %1674 = vmatprep.subr.bf16.mxu0 0
    %1675 = vmatpush1.bf16.msra.mxu0 0
    %1676 = vmatprep.subr.bf16.mxu0 0
    %1677 = vmatpush1.bf16.msra.mxu0 0
    %1678 = vmatprep.subr.bf16.mxu0 0
    %1679 = vmatpush1.bf16.msra.mxu0 0
    %1680 = vmatprep.subr.bf16.mxu0 0
    %1681 = vmatpush1.bf16.msra.mxu0 0
    %1682 = vmatprep.subr.bf16.mxu0 0
    %1683 = vmatpush1.bf16.msra.mxu0 0
    %1684 = vmatprep.mubr.bf16.mxu0 0
    %1685 = vmatmul.mubr.bf16.gmra.mrb[0].mxu0 %v1647
    %v1686 = vpop.f32.mrb[0].mxu0
    %v1687 = vadd.f32 0.0, %v1686
    %v1688 = vpop.f32.mrb[0].mxu0
    %v1689 = vpop.f32.mrb[0].mxu0
    %v1690 = vpop.f32.mrb[0].mxu0
    %1691 = vdwg.mxu0
    %1693 = vrot.lane.b32.xlu0 %v1687, 8
    %v1694 = vpop.permute.xlu0 %1693
    %vm1696 = vcmask 130112
    %1697 = vst.msk [vmem:[#allocation3] sm:$0xff] %vm1696, %v1694
    %1698 = vrot.lane.b32.xlu0 %v1459, 112
    %v1699 = vpop.permute.xlu0 %1698
    %1700 = vrot.lane.b32.xlu0 %v1460, 80
    %v1701 = vpop.permute.xlu0 %1700
    %v1703 = vsel %vm1464, %v1699, 0
    %v1706 = vsel %vm1464, %v1701, 0
    %1708 = vmatprep.subr.bf16.mxu0 0
    %1709 = vmatpush1.bf16.xpose.msra.mxu0 %v1706
    %1710 = vmatprep.subr.bf16.mxu0 0
    %1711 = vmatpush1.bf16.xpose.msra.mxu0 0
    %1712 = vmatprep.subr.bf16.mxu0 0
    %1713 = vmatpush1.bf16.xpose.msra.mxu0 0
    %1714 = vmatprep.subr.bf16.mxu0 0
    %1715 = vmatpush1.bf16.xpose.msra.mxu0 0
    %1716 = vmatprep.subr.bf16.mxu0 0
    %1717 = vmatpush1.bf16.xpose.msra.mxu0 0
    %1718 = vmatprep.subr.bf16.mxu0 0
    %1719 = vmatpush1.bf16.xpose.msra.mxu0 0
    %1720 = vmatprep.subr.bf16.mxu0 0
    %1721 = vmatpush1.bf16.xpose.msra.mxu0 0
    %1722 = vmatprep.subr.bf16.mxu0 0
    %1723 = vmatpush1.bf16.xpose.msra.mxu0 0
    %1724 = vmatprep.subr.bf16.mxu0 0
    %1725 = vmatpush1.bf16.xpose.msra.mxu0 0
    %1726 = vmatprep.subr.bf16.mxu0 0
    %1727 = vmatpush1.bf16.xpose.msra.mxu0 0
    %1728 = vmatprep.subr.bf16.mxu0 0
    %1729 = vmatpush1.bf16.xpose.msra.mxu0 0
    %1730 = vmatprep.subr.bf16.mxu0 0
    %1731 = vmatpush1.bf16.xpose.msra.mxu0 0
    %1732 = vmatprep.subr.bf16.mxu0 0
    %1733 = vmatpush1.bf16.xpose.msra.mxu0 0
    %1734 = vmatprep.subr.bf16.mxu0 0
    %1735 = vmatpush1.bf16.xpose.msra.mxu0 0
    %1736 = vmatprep.subr.bf16.mxu0 0
    %1737 = vmatpush1.bf16.xpose.msra.mxu0 0
    %1738 = vmatprep.subr.bf16.mxu0 0
    %1739 = vmatpush1.bf16.xpose.msra.mxu0 0
    %1740 = vmatprep.mubr.bf16.mxu0 0
    %1741 = vmatmul.mubr.bf16.gmra.mrb[0].mxu0 %v1703
    %v1742 = vpop.f32.mrb[0].mxu0
    %v1743 = vadd.f32 0.0, %v1742
    %v1744 = vpop.f32.mrb[0].mxu0
    %v1745 = vpop.f32.mrb[0].mxu0
    %v1746 = vpop.f32.mrb[0].mxu0
    %1747 = vdwg.mxu0
    %v1748 = vsel %vm1516, -1e+09, %v1743
    %v1749 = vsel %vm1464, %v1748, -inf
    %1750 = vmax.xlane.f32.xlu0 %v1749
    %v1751 = vpop.xlane.xlu0 %1750
    %v1752 = vsub.f32 %v1748, %v1751
    %v1753 = vmul.f32 %v1752, 1.442695
    %v1754 = vpow.pop %v1753
    %v1755 = vsel %vm1464, %v1754, 0.0
    %1756 = vadd.xlane.f32.xlu0 %v1755
    %v1757 = vpop.xlane.xlu0 %1756
    %v1758 = vrcp.pop %v1757
    %v1759 = vmul.f32 %v1754, %v1758
    %v1760 = vpack.c.bf16 %v1759, %v1759
    %1761 = vrot.lane.b32.xlu0 %v1460, 48
    %v1762 = vpop.permute.xlu0 %1761
    %v1764 = vsel %vm1464, %v1760, 0
    %v1767 = vsel %vm1535, %v1762, 0
    %1769 = vmatprep.subr.bf16.mxu0 0
    %1770 = vmatpush1.bf16.msra.mxu0 %v1767
    %1771 = vmatprep.subr.bf16.mxu0 0
    %1772 = vmatpush1.bf16.msra.mxu0 0
    %1773 = vmatprep.subr.bf16.mxu0 0
    %1774 = vmatpush1.bf16.msra.mxu0 0
    %1775 = vmatprep.subr.bf16.mxu0 0
    %1776 = vmatpush1.bf16.msra.mxu0 0
    %1777 = vmatprep.subr.bf16.mxu0 0
    %1778 = vmatpush1.bf16.msra.mxu0 0
    %1779 = vmatprep.subr.bf16.mxu0 0
    %1780 = vmatpush1.bf16.msra.mxu0 0
    %1781 = vmatprep.subr.bf16.mxu0 0
    %1782 = vmatpush1.bf16.msra.mxu0 0
    %1783 = vmatprep.subr.bf16.mxu0 0
    %1784 = vmatpush1.bf16.msra.mxu0 0
    %1785 = vmatprep.subr.bf16.mxu0 0
    %1786 = vmatpush1.bf16.msra.mxu0 0
    %1787 = vmatprep.subr.bf16.mxu0 0
    %1788 = vmatpush1.bf16.msra.mxu0 0
    %1789 = vmatprep.subr.bf16.mxu0 0
    %1790 = vmatpush1.bf16.msra.mxu0 0
    %1791 = vmatprep.subr.bf16.mxu0 0
    %1792 = vmatpush1.bf16.msra.mxu0 0
    %1793 = vmatprep.subr.bf16.mxu0 0
    %1794 = vmatpush1.bf16.msra.mxu0 0
    %1795 = vmatprep.subr.bf16.mxu0 0
    %1796 = vmatpush1.bf16.msra.mxu0 0
    %1797 = vmatprep.subr.bf16.mxu0 0
    %1798 = vmatpush1.bf16.msra.mxu0 0
    %1799 = vmatprep.subr.bf16.mxu0 0
    %1800 = vmatpush1.bf16.msra.mxu0 0
    %1801 = vmatprep.mubr.bf16.mxu0 0
    %1802 = vmatmul.mubr.bf16.gmra.mrb[0].mxu0 %v1764
    %v1803 = vpop.f32.mrb[0].mxu0
    %v1804 = vadd.f32 0.0, %v1803
    %v1805 = vpop.f32.mrb[0].mxu0
    %v1806 = vpop.f32.mrb[0].mxu0
    %v1807 = vpop.f32.mrb[0].mxu0
    %1808 = vdwg.mxu0
    %1810 = vrot.lane.b32.xlu0 %v1804, 16
    %v1811 = vpop.permute.xlu0 %1810
    %vm1813 = vcmask 195712
    %1814 = vst.msk [vmem:[#allocation3] sm:$0xff] %vm1813, %v1811
    %1815 = vrot.lane.b32.xlu0 %v1459, 104
    %v1816 = vpop.permute.xlu0 %1815
    %1817 = vrot.lane.b32.xlu0 %v1460, 72
    %v1818 = vpop.permute.xlu0 %1817
    %v1820 = vsel %vm1464, %v1816, 0
    %v1823 = vsel %vm1464, %v1818, 0
    %1825 = vmatprep.subr.bf16.mxu0 0
    %1826 = vmatpush1.bf16.xpose.msra.mxu0 %v1823
    %1827 = vmatprep.subr.bf16.mxu0 0
    %1828 = vmatpush1.bf16.xpose.msra.mxu0 0
    %1829 = vmatprep.subr.bf16.mxu0 0
    %1830 = vmatpush1.bf16.xpose.msra.mxu0 0
    %1831 = vmatprep.subr.bf16.mxu0 0
    %1832 = vmatpush1.bf16.xpose.msra.mxu0 0
    %1833 = vmatprep.subr.bf16.mxu0 0
    %1834 = vmatpush1.bf16.xpose.msra.mxu0 0
    %1835 = vmatprep.subr.bf16.mxu0 0
    %1836 = vmatpush1.bf16.xpose.msra.mxu0 0
    %1837 = vmatprep.subr.bf16.mxu0 0
    %1838 = vmatpush1.bf16.xpose.msra.mxu0 0
    %1839 = vmatprep.subr.bf16.mxu0 0
    %1840 = vmatpush1.bf16.xpose.msra.mxu0 0
    %1841 = vmatprep.subr.bf16.mxu0 0
    %1842 = vmatpush1.bf16.xpose.msra.mxu0 0
    %1843 = vmatprep.subr.bf16.mxu0 0
    %1844 = vmatpush1.bf16.xpose.msra.mxu0 0
    %1845 = vmatprep.subr.bf16.mxu0 0
    %1846 = vmatpush1.bf16.xpose.msra.mxu0 0
    %1847 = vmatprep.subr.bf16.mxu0 0
    %1848 = vmatpush1.bf16.xpose.msra.mxu0 0
    %1849 = vmatprep.subr.bf16.mxu0 0
    %1850 = vmatpush1.bf16.xpose.msra.mxu0 0
    %1851 = vmatprep.subr.bf16.mxu0 0
    %1852 = vmatpush1.bf16.xpose.msra.mxu0 0
    %1853 = vmatprep.subr.bf16.mxu0 0
    %1854 = vmatpush1.bf16.xpose.msra.mxu0 0
    %1855 = vmatprep.subr.bf16.mxu0 0
    %1856 = vmatpush1.bf16.xpose.msra.mxu0 0
    %1857 = vmatprep.mubr.bf16.mxu0 0
    %1858 = vmatmul.mubr.bf16.gmra.mrb[0].mxu0 %v1820
    %v1859 = vpop.f32.mrb[0].mxu0
    %v1860 = vadd.f32 0.0, %v1859
    %v1861 = vpop.f32.mrb[0].mxu0
    %v1862 = vpop.f32.mrb[0].mxu0
    %v1863 = vpop.f32.mrb[0].mxu0
    %1864 = vdwg.mxu0
    %v1865 = vsel %vm1516, -1e+09, %v1860
    %v1866 = vsel %vm1464, %v1865, -inf
    %1867 = vmax.xlane.f32.xlu0 %v1866
    %v1868 = vpop.xlane.xlu0 %1867
    %v1869 = vsub.f32 %v1865, %v1868
    %v1870 = vmul.f32 %v1869, 1.442695
    %v1871 = vpow.pop %v1870
    %v1872 = vsel %vm1464, %v1871, 0.0
    %1873 = vadd.xlane.f32.xlu0 %v1872
    %v1874 = vpop.xlane.xlu0 %1873
    %v1875 = vrcp.pop %v1874
    %v1876 = vmul.f32 %v1871, %v1875
    %v1877 = vpack.c.bf16 %v1876, %v1876
    %1878 = vrot.lane.b32.xlu0 %v1460, 40
    %v1879 = vpop.permute.xlu0 %1878
    %v1881 = vsel %vm1464, %v1877, 0
    %v1884 = vsel %vm1535, %v1879, 0
    %1886 = vmatprep.subr.bf16.mxu0 0
    %1887 = vmatpush1.bf16.msra.mxu0 %v1884
    %1888 = vmatprep.subr.bf16.mxu0 0
    %1889 = vmatpush1.bf16.msra.mxu0 0
    %1890 = vmatprep.subr.bf16.mxu0 0
    %1891 = vmatpush1.bf16.msra.mxu0 0
    %1892 = vmatprep.subr.bf16.mxu0 0
    %1893 = vmatpush1.bf16.msra.mxu0 0
    %1894 = vmatprep.subr.bf16.mxu0 0
    %1895 = vmatpush1.bf16.msra.mxu0 0
    %1896 = vmatprep.subr.bf16.mxu0 0
    %1897 = vmatpush1.bf16.msra.mxu0 0
    %1898 = vmatprep.subr.bf16.mxu0 0
    %1899 = vmatpush1.bf16.msra.mxu0 0
    %1900 = vmatprep.subr.bf16.mxu0 0
    %1901 = vmatpush1.bf16.msra.mxu0 0
    %1902 = vmatprep.subr.bf16.mxu0 0
    %1903 = vmatpush1.bf16.msra.mxu0 0
    %1904 = vmatprep.subr.bf16.mxu0 0
    %1905 = vmatpush1.bf16.msra.mxu0 0
    %1906 = vmatprep.subr.bf16.mxu0 0
    %1907 = vmatpush1.bf16.msra.mxu0 0
    %1908 = vmatprep.subr.bf16.mxu0 0
    %1909 = vmatpush1.bf16.msra.mxu0 0
    %1910 = vmatprep.subr.bf16.mxu0 0
    %1911 = vmatpush1.bf16.msra.mxu0 0
    %1912 = vmatprep.subr.bf16.mxu0 0
    %1913 = vmatpush1.bf16.msra.mxu0 0
    %1914 = vmatprep.subr.bf16.mxu0 0
    %1915 = vmatpush1.bf16.msra.mxu0 0
    %1916 = vmatprep.subr.bf16.mxu0 0
    %1917 = vmatpush1.bf16.msra.mxu0 0
    %1918 = vmatprep.mubr.bf16.mxu0 0
    %1919 = vmatmul.mubr.bf16.gmra.mrb[0].mxu0 %v1881
    %v1920 = vpop.f32.mrb[0].mxu0
    %v1921 = vadd.f32 0.0, %v1920
    %v1922 = vpop.f32.mrb[0].mxu0
    %v1923 = vpop.f32.mrb[0].mxu0
    %v1924 = vpop.f32.mrb[0].mxu0
    %1925 = vdwg.mxu0
    %1927 = vrot.lane.b32.xlu0 %v1921, 24
    %v1928 = vpop.permute.xlu0 %1927
    %vm1930 = vcmask 261312
    %1931 = vst.msk [vmem:[#allocation3] sm:$0xff] %vm1930, %v1928
    %v1932 = vmul.f32 %v1453, 0.35355338
    %v1933 = vpack.c.bf16 %v1932, %v1932
    %v1934 = vpack.c.bf16 %v1453, %v1453
    %1936 = vrot.lane.b32.xlu0 %v1934, 96
    %v1937 = vpop.permute.xlu0 %1936
    %v1939 = vsel %vm1464, %v1933, 0
    %v1942 = vsel %vm1464, %v1937, 0
    %1944 = vmatprep.subr.bf16.mxu0 0
    %1945 = vmatpush1.bf16.xpose.msra.mxu0 %v1942
    %1946 = vmatprep.subr.bf16.mxu0 0
    %1947 = vmatpush1.bf16.xpose.msra.mxu0 0
    %1948 = vmatprep.subr.bf16.mxu0 0
    %1949 = vmatpush1.bf16.xpose.msra.mxu0 0
    %1950 = vmatprep.subr.bf16.mxu0 0
    %1951 = vmatpush1.bf16.xpose.msra.mxu0 0
    %1952 = vmatprep.subr.bf16.mxu0 0
    %1953 = vmatpush1.bf16.xpose.msra.mxu0 0
    %1954 = vmatprep.subr.bf16.mxu0 0
    %1955 = vmatpush1.bf16.xpose.msra.mxu0 0
    %1956 = vmatprep.subr.bf16.mxu0 0
    %1957 = vmatpush1.bf16.xpose.msra.mxu0 0
    %1958 = vmatprep.subr.bf16.mxu0 0
    %1959 = vmatpush1.bf16.xpose.msra.mxu0 0
    %1960 = vmatprep.subr.bf16.mxu0 0
    %1961 = vmatpush1.bf16.xpose.msra.mxu0 0
    %1962 = vmatprep.subr.bf16.mxu0 0
    %1963 = vmatpush1.bf16.xpose.msra.mxu0 0
    %1964 = vmatprep.subr.bf16.mxu0 0
    %1965 = vmatpush1.bf16.xpose.msra.mxu0 0
    %1966 = vmatprep.subr.bf16.mxu0 0
    %1967 = vmatpush1.bf16.xpose.msra.mxu0 0
    %1968 = vmatprep.subr.bf16.mxu0 0
    %1969 = vmatpush1.bf16.xpose.msra.mxu0 0
    %1970 = vmatprep.subr.bf16.mxu0 0
    %1971 = vmatpush1.bf16.xpose.msra.mxu0 0
    %1972 = vmatprep.subr.bf16.mxu0 0
    %1973 = vmatpush1.bf16.xpose.msra.mxu0 0
    %1974 = vmatprep.subr.bf16.mxu0 0
    %1975 = vmatpush1.bf16.xpose.msra.mxu0 0
    %1976 = vmatprep.mubr.bf16.mxu0 0
    %1977 = vmatmul.mubr.bf16.gmra.mrb[0].mxu0 %v1939
    %v1978 = vpop.f32.mrb[0].mxu0
    %v1979 = vadd.f32 0.0, %v1978
    %v1980 = vpop.f32.mrb[0].mxu0
    %v1981 = vpop.f32.mrb[0].mxu0
    %v1982 = vpop.f32.mrb[0].mxu0
    %1983 = vdwg.mxu0
    %v1984 = vlaneseq
    %v1985 = vshrl.u32 %v1984, 7
    %v1986 = vsub.s32 1, %v1985
    %v1987 = vrot.slane %v1511, %v1986
    %vm1988 = vcmp.eq.s32.totalorder %v1987, 1
    %v1989 = vsel %vm1988, -1e+09, %v1979
    %v1990 = vsel %vm1464, %v1989, -inf
    %1991 = vmax.xlane.f32.xlu0 %v1990
    %v1992 = vpop.xlane.xlu0 %1991
    %v1993 = vsub.f32 %v1989, %v1992
    %v1994 = vmul.f32 %v1993, 1.442695
    %v1995 = vpow.pop %v1994
    %v1996 = vsel %vm1464, %v1995, 0.0
    %1997 = vadd.xlane.f32.xlu0 %v1996
    %v1998 = vpop.xlane.xlu0 %1997
    %v1999 = vrcp.pop %v1998
    %v2000 = vmul.f32 %v1995, %v1999
    %v2001 = vpack.c.bf16 %v2000, %v2000
    %2002 = vrot.lane.b32.xlu0 %v1934, 64
    %v2003 = vpop.permute.xlu0 %2002
    %v2005 = vsel %vm1464, %v2001, 0
    %v2008 = vsel %vm1535, %v2003, 0
    %2010 = vmatprep.subr.bf16.mxu0 0
    %2011 = vmatpush1.bf16.msra.mxu0 %v2008
    %2012 = vmatprep.subr.bf16.mxu0 0
    %2013 = vmatpush1.bf16.msra.mxu0 0
    %2014 = vmatprep.subr.bf16.mxu0 0
    %2015 = vmatpush1.bf16.msra.mxu0 0
    %2016 = vmatprep.subr.bf16.mxu0 0
    %2017 = vmatpush1.bf16.msra.mxu0 0
    %2018 = vmatprep.subr.bf16.mxu0 0
    %2019 = vmatpush1.bf16.msra.mxu0 0
    %2020 = vmatprep.subr.bf16.mxu0 0
    %2021 = vmatpush1.bf16.msra.mxu0 0
    %2022 = vmatprep.subr.bf16.mxu0 0
    %2023 = vmatpush1.bf16.msra.mxu0 0
    %2024 = vmatprep.subr.bf16.mxu0 0
    %2025 = vmatpush1.bf16.msra.mxu0 0
    %2026 = vmatprep.subr.bf16.mxu0 0
    %2027 = vmatpush1.bf16.msra.mxu0 0
    %2028 = vmatprep.subr.bf16.mxu0 0
    %2029 = vmatpush1.bf16.msra.mxu0 0
    %2030 = vmatprep.subr.bf16.mxu0 0
    %2031 = vmatpush1.bf16.msra.mxu0 0
    %2032 = vmatprep.subr.bf16.mxu0 0
    %2033 = vmatpush1.bf16.msra.mxu0 0
    %2034 = vmatprep.subr.bf16.mxu0 0
    %2035 = vmatpush1.bf16.msra.mxu0 0
    %2036 = vmatprep.subr.bf16.mxu0 0
    %2037 = vmatpush1.bf16.msra.mxu0 0
    %2038 = vmatprep.subr.bf16.mxu0 0
    %2039 = vmatpush1.bf16.msra.mxu0 0
    %2040 = vmatprep.subr.bf16.mxu0 0
    %2041 = vmatpush1.bf16.msra.mxu0 0
    %2042 = vmatprep.mubr.bf16.mxu0 0
    %2043 = vmatmul.mubr.bf16.gmra.mrb[0].mxu0 %v2005
    %v2044 = vpop.f32.mrb[0].mxu0
    %v2045 = vadd.f32 0.0, %v2044
    %v2046 = vpop.f32.mrb[0].mxu0
    %v2047 = vpop.f32.mrb[0].mxu0
    %v2048 = vpop.f32.mrb[0].mxu0
    %2049 = vdwg.mxu0
    %2050 = vst.msk [vmem:[#allocation3 + $0x8] sm:$0xff] %vm1464, %v2045
    %2052 = vrot.lane.b32.xlu0 %v1933, 120
    %v2053 = vpop.permute.xlu0 %2052
    %2054 = vrot.lane.b32.xlu0 %v1934, 88
    %v2055 = vpop.permute.xlu0 %2054
    %v2057 = vsel %vm1464, %v2053, 0
    %v2060 = vsel %vm1464, %v2055, 0
    %2062 = vmatprep.subr.bf16.mxu0 0
    %2063 = vmatpush1.bf16.xpose.msra.mxu0 %v2060
    %2064 = vmatprep.subr.bf16.mxu0 0
    %2065 = vmatpush1.bf16.xpose.msra.mxu0 0
    %2066 = vmatprep.subr.bf16.mxu0 0
    %2067 = vmatpush1.bf16.xpose.msra.mxu0 0
    %2068 = vmatprep.subr.bf16.mxu0 0
    %2069 = vmatpush1.bf16.xpose.msra.mxu0 0
    %2070 = vmatprep.subr.bf16.mxu0 0
    %2071 = vmatpush1.bf16.xpose.msra.mxu0 0
    %2072 = vmatprep.subr.bf16.mxu0 0
    %2073 = vmatpush1.bf16.xpose.msra.mxu0 0
    %2074 = vmatprep.subr.bf16.mxu0 0
    %2075 = vmatpush1.bf16.xpose.msra.mxu0 0
    %2076 = vmatprep.subr.bf16.mxu0 0
    %2077 = vmatpush1.bf16.xpose.msra.mxu0 0
    %2078 = vmatprep.subr.bf16.mxu0 0
    %2079 = vmatpush1.bf16.xpose.msra.mxu0 0
    %2080 = vmatprep.subr.bf16.mxu0 0
    %2081 = vmatpush1.bf16.xpose.msra.mxu0 0
    %2082 = vmatprep.subr.bf16.mxu0 0
    %2083 = vmatpush1.bf16.xpose.msra.mxu0 0
    %2084 = vmatprep.subr.bf16.mxu0 0
    %2085 = vmatpush1.bf16.xpose.msra.mxu0 0
    %2086 = vmatprep.subr.bf16.mxu0 0
    %2087 = vmatpush1.bf16.xpose.msra.mxu0 0
    %2088 = vmatprep.subr.bf16.mxu0 0
    %2089 = vmatpush1.bf16.xpose.msra.mxu0 0
    %2090 = vmatprep.subr.bf16.mxu0 0
    %2091 = vmatpush1.bf16.xpose.msra.mxu0 0
    %2092 = vmatprep.subr.bf16.mxu0 0
    %2093 = vmatpush1.bf16.xpose.msra.mxu0 0
    %2094 = vmatprep.mubr.bf16.mxu0 0
    %2095 = vmatmul.mubr.bf16.gmra.mrb[0].mxu0 %v2057
    %v2096 = vpop.f32.mrb[0].mxu0
    %v2097 = vadd.f32 0.0, %v2096
    %v2098 = vpop.f32.mrb[0].mxu0
    %v2099 = vpop.f32.mrb[0].mxu0
    %v2100 = vpop.f32.mrb[0].mxu0
    %2101 = vdwg.mxu0
    %v2102 = vsel %vm1988, -1e+09, %v2097
    %v2103 = vsel %vm1464, %v2102, -inf
    %2104 = vmax.xlane.f32.xlu0 %v2103
    %v2105 = vpop.xlane.xlu0 %2104
    %v2106 = vsub.f32 %v2102, %v2105
    %v2107 = vmul.f32 %v2106, 1.442695
    %v2108 = vpow.pop %v2107
    %v2109 = vsel %vm1464, %v2108, 0.0
    %2110 = vadd.xlane.f32.xlu0 %v2109
    %v2111 = vpop.xlane.xlu0 %2110
    %v2112 = vrcp.pop %v2111
    %v2113 = vmul.f32 %v2108, %v2112
    %v2114 = vpack.c.bf16 %v2113, %v2113
    %2115 = vrot.lane.b32.xlu0 %v1934, 56
    %v2116 = vpop.permute.xlu0 %2115
    %v2118 = vsel %vm1464, %v2114, 0
    %v2121 = vsel %vm1535, %v2116, 0
    %2123 = vmatprep.subr.bf16.mxu0 0
    %2124 = vmatpush1.bf16.msra.mxu0 %v2121
    %2125 = vmatprep.subr.bf16.mxu0 0
    %2126 = vmatpush1.bf16.msra.mxu0 0
    %2127 = vmatprep.subr.bf16.mxu0 0
    %2128 = vmatpush1.bf16.msra.mxu0 0
    %2129 = vmatprep.subr.bf16.mxu0 0
    %2130 = vmatpush1.bf16.msra.mxu0 0
    %2131 = vmatprep.subr.bf16.mxu0 0
    %2132 = vmatpush1.bf16.msra.mxu0 0
    %2133 = vmatprep.subr.bf16.mxu0 0
    %2134 = vmatpush1.bf16.msra.mxu0 0
    %2135 = vmatprep.subr.bf16.mxu0 0
    %2136 = vmatpush1.bf16.msra.mxu0 0
    %2137 = vmatprep.subr.bf16.mxu0 0
    %2138 = vmatpush1.bf16.msra.mxu0 0
    %2139 = vmatprep.subr.bf16.mxu0 0
    %2140 = vmatpush1.bf16.msra.mxu0 0
    %2141 = vmatprep.subr.bf16.mxu0 0
    %2142 = vmatpush1.bf16.msra.mxu0 0
    %2143 = vmatprep.subr.bf16.mxu0 0
    %2144 = vmatpush1.bf16.msra.mxu0 0
    %2145 = vmatprep.subr.bf16.mxu0 0
    %2146 = vmatpush1.bf16.msra.mxu0 0
    %2147 = vmatprep.subr.bf16.mxu0 0
    %2148 = vmatpush1.bf16.msra.mxu0 0
    %2149 = vmatprep.subr.bf16.mxu0 0
    %2150 = vmatpush1.bf16.msra.mxu0 0
    %2151 = vmatprep.subr.bf16.mxu0 0
    %2152 = vmatpush1.bf16.msra.mxu0 0
    %2153 = vmatprep.subr.bf16.mxu0 0
    %2154 = vmatpush1.bf16.msra.mxu0 0
    %2155 = vmatprep.mubr.bf16.mxu0 0
    %2156 = vmatmul.mubr.bf16.gmra.mrb[0].mxu0 %v2118
    %v2157 = vpop.f32.mrb[0].mxu0
    %v2158 = vadd.f32 0.0, %v2157
    %v2159 = vpop.f32.mrb[0].mxu0
    %v2160 = vpop.f32.mrb[0].mxu0
    %v2161 = vpop.f32.mrb[0].mxu0
    %2162 = vdwg.mxu0
    %2164 = vrot.lane.b32.xlu0 %v2158, 8
    %v2165 = vpop.permute.xlu0 %2164
    %2167 = vst.msk [vmem:[#allocation3 + $0x8] sm:$0xff] %vm1696, %v2165
    %2168 = vrot.lane.b32.xlu0 %v1933, 112
    %v2169 = vpop.permute.xlu0 %2168
    %2170 = vrot.lane.b32.xlu0 %v1934, 80
    %v2171 = vpop.permute.xlu0 %2170
    %v2173 = vsel %vm1464, %v2169, 0
    %v2176 = vsel %vm1464, %v2171, 0
    %2178 = vmatprep.subr.bf16.mxu0 0
    %2179 = vmatpush1.bf16.xpose.msra.mxu0 %v2176
    %2180 = vmatprep.subr.bf16.mxu0 0
    %2181 = vmatpush1.bf16.xpose.msra.mxu0 0
    %2182 = vmatprep.subr.bf16.mxu0 0
    %2183 = vmatpush1.bf16.xpose.msra.mxu0 0
    %2184 = vmatprep.subr.bf16.mxu0 0
    %2185 = vmatpush1.bf16.xpose.msra.mxu0 0
    %2186 = vmatprep.subr.bf16.mxu0 0
    %2187 = vmatpush1.bf16.xpose.msra.mxu0 0
    %2188 = vmatprep.subr.bf16.mxu0 0
    %2189 = vmatpush1.bf16.xpose.msra.mxu0 0
    %2190 = vmatprep.subr.bf16.mxu0 0
    %2191 = vmatpush1.bf16.xpose.msra.mxu0 0
    %2192 = vmatprep.subr.bf16.mxu0 0
    %2193 = vmatpush1.bf16.xpose.msra.mxu0 0
    %2194 = vmatprep.subr.bf16.mxu0 0
    %2195 = vmatpush1.bf16.xpose.msra.mxu0 0
    %2196 = vmatprep.subr.bf16.mxu0 0
    %2197 = vmatpush1.bf16.xpose.msra.mxu0 0
    %2198 = vmatprep.subr.bf16.mxu0 0
    %2199 = vmatpush1.bf16.xpose.msra.mxu0 0
    %2200 = vmatprep.subr.bf16.mxu0 0
    %2201 = vmatpush1.bf16.xpose.msra.mxu0 0
    %2202 = vmatprep.subr.bf16.mxu0 0
    %2203 = vmatpush1.bf16.xpose.msra.mxu0 0
    %2204 = vmatprep.subr.bf16.mxu0 0
    %2205 = vmatpush1.bf16.xpose.msra.mxu0 0
    %2206 = vmatprep.subr.bf16.mxu0 0
    %2207 = vmatpush1.bf16.xpose.msra.mxu0 0
    %2208 = vmatprep.subr.bf16.mxu0 0
    %2209 = vmatpush1.bf16.xpose.msra.mxu0 0
    %2210 = vmatprep.mubr.bf16.mxu0 0
    %2211 = vmatmul.mubr.bf16.gmra.mrb[0].mxu0 %v2173
    %v2212 = vpop.f32.mrb[0].mxu0
    %v2213 = vadd.f32 0.0, %v2212
    %v2214 = vpop.f32.mrb[0].mxu0
    %v2215 = vpop.f32.mrb[0].mxu0
    %v2216 = vpop.f32.mrb[0].mxu0
    %2217 = vdwg.mxu0
    %v2218 = vsel %vm1988, -1e+09, %v2213
    %v2219 = vsel %vm1464, %v2218, -inf
    %2220 = vmax.xlane.f32.xlu0 %v2219
    %v2221 = vpop.xlane.xlu0 %2220
    %v2222 = vsub.f32 %v2218, %v2221
    %v2223 = vmul.f32 %v2222, 1.442695
    %v2224 = vpow.pop %v2223
    %v2225 = vsel %vm1464, %v2224, 0.0
    %2226 = vadd.xlane.f32.xlu0 %v2225
    %v2227 = vpop.xlane.xlu0 %2226
    %v2228 = vrcp.pop %v2227
    %v2229 = vmul.f32 %v2224, %v2228
    %v2230 = vpack.c.bf16 %v2229, %v2229
    %2231 = vrot.lane.b32.xlu0 %v1934, 48
    %v2232 = vpop.permute.xlu0 %2231
    %v2234 = vsel %vm1464, %v2230, 0
    %v2237 = vsel %vm1535, %v2232, 0
    %2239 = vmatprep.subr.bf16.mxu0 0
    %2240 = vmatpush1.bf16.msra.mxu0 %v2237
    %2241 = vmatprep.subr.bf16.mxu0 0
    %2242 = vmatpush1.bf16.msra.mxu0 0
    %2243 = vmatprep.subr.bf16.mxu0 0
    %2244 = vmatpush1.bf16.msra.mxu0 0
    %2245 = vmatprep.subr.bf16.mxu0 0
    %2246 = vmatpush1.bf16.msra.mxu0 0
    %2247 = vmatprep.subr.bf16.mxu0 0
    %2248 = vmatpush1.bf16.msra.mxu0 0
    %2249 = vmatprep.subr.bf16.mxu0 0
    %2250 = vmatpush1.bf16.msra.mxu0 0
    %2251 = vmatprep.subr.bf16.mxu0 0
    %2252 = vmatpush1.bf16.msra.mxu0 0
    %2253 = vmatprep.subr.bf16.mxu0 0
    %2254 = vmatpush1.bf16.msra.mxu0 0
    %2255 = vmatprep.subr.bf16.mxu0 0
    %2256 = vmatpush1.bf16.msra.mxu0 0
    %2257 = vmatprep.subr.bf16.mxu0 0
    %2258 = vmatpush1.bf16.msra.mxu0 0
    %2259 = vmatprep.subr.bf16.mxu0 0
    %2260 = vmatpush1.bf16.msra.mxu0 0
    %2261 = vmatprep.subr.bf16.mxu0 0
    %2262 = vmatpush1.bf16.msra.mxu0 0
    %2263 = vmatprep.subr.bf16.mxu0 0
    %2264 = vmatpush1.bf16.msra.mxu0 0
    %2265 = vmatprep.subr.bf16.mxu0 0
    %2266 = vmatpush1.bf16.msra.mxu0 0
    %2267 = vmatprep.subr.bf16.mxu0 0
    %2268 = vmatpush1.bf16.msra.mxu0 0
    %2269 = vmatprep.subr.bf16.mxu0 0
    %2270 = vmatpush1.bf16.msra.mxu0 0
    %2271 = vmatprep.mubr.bf16.mxu0 0
    %2272 = vmatmul.mubr.bf16.gmra.mrb[0].mxu0 %v2234
    %v2273 = vpop.f32.mrb[0].mxu0
    %v2274 = vadd.f32 0.0, %v2273
    %v2275 = vpop.f32.mrb[0].mxu0
    %v2276 = vpop.f32.mrb[0].mxu0
    %v2277 = vpop.f32.mrb[0].mxu0
    %2278 = vdwg.mxu0
    %2280 = vrot.lane.b32.xlu0 %v2274, 16
    %v2281 = vpop.permute.xlu0 %2280
    %2283 = vst.msk [vmem:[#allocation3 + $0x8] sm:$0xff] %vm1813, %v2281
    %2284 = vrot.lane.b32.xlu0 %v1933, 104
    %v2285 = vpop.permute.xlu0 %2284
    %2286 = vrot.lane.b32.xlu0 %v1934, 72
    %v2287 = vpop.permute.xlu0 %2286
    %v2289 = vsel %vm1464, %v2285, 0
    %v2292 = vsel %vm1464, %v2287, 0
    %2294 = vmatprep.subr.bf16.mxu0 0
    %2295 = vmatpush1.bf16.xpose.msra.mxu0 %v2292
    %2296 = vmatprep.subr.bf16.mxu0 0
    %2297 = vmatpush1.bf16.xpose.msra.mxu0 0
    %2298 = vmatprep.subr.bf16.mxu0 0
    %2299 = vmatpush1.bf16.xpose.msra.mxu0 0
    %2300 = vmatprep.subr.bf16.mxu0 0
    %2301 = vmatpush1.bf16.xpose.msra.mxu0 0
    %2302 = vmatprep.subr.bf16.mxu0 0
    %2303 = vmatpush1.bf16.xpose.msra.mxu0 0
    %2304 = vmatprep.subr.bf16.mxu0 0
    %2305 = vmatpush1.bf16.xpose.msra.mxu0 0
    %2306 = vmatprep.subr.bf16.mxu0 0
    %2307 = vmatpush1.bf16.xpose.msra.mxu0 0
    %2308 = vmatprep.subr.bf16.mxu0 0
    %2309 = vmatpush1.bf16.xpose.msra.mxu0 0
    %2310 = vmatprep.subr.bf16.mxu0 0
    %2311 = vmatpush1.bf16.xpose.msra.mxu0 0
    %2312 = vmatprep.subr.bf16.mxu0 0
    %2313 = vmatpush1.bf16.xpose.msra.mxu0 0
    %2314 = vmatprep.subr.bf16.mxu0 0
    %2315 = vmatpush1.bf16.xpose.msra.mxu0 0
    %2316 = vmatprep.subr.bf16.mxu0 0
    %2317 = vmatpush1.bf16.xpose.msra.mxu0 0
    %2318 = vmatprep.subr.bf16.mxu0 0
    %2319 = vmatpush1.bf16.xpose.msra.mxu0 0
    %2320 = vmatprep.subr.bf16.mxu0 0
    %2321 = vmatpush1.bf16.xpose.msra.mxu0 0
    %2322 = vmatprep.subr.bf16.mxu0 0
    %2323 = vmatpush1.bf16.xpose.msra.mxu0 0
    %2324 = vmatprep.subr.bf16.mxu0 0
    %2325 = vmatpush1.bf16.xpose.msra.mxu0 0
    %2326 = vmatprep.mubr.bf16.mxu0 0
    %2327 = vmatmul.mubr.bf16.gmra.mrb[0].mxu0 %v2289
    %v2328 = vpop.f32.mrb[0].mxu0
    %v2329 = vadd.f32 0.0, %v2328
    %v2330 = vpop.f32.mrb[0].mxu0
    %v2331 = vpop.f32.mrb[0].mxu0
    %v2332 = vpop.f32.mrb[0].mxu0
    %2333 = vdwg.mxu0
    %v2334 = vsel %vm1988, -1e+09, %v2329
    %v2335 = vsel %vm1464, %v2334, -inf
    %2336 = vmax.xlane.f32.xlu0 %v2335
    %v2337 = vpop.xlane.xlu0 %2336
    %v2338 = vsub.f32 %v2334, %v2337
    %v2339 = vmul.f32 %v2338, 1.442695
    %v2340 = vpow.pop %v2339
    %v2341 = vsel %vm1464, %v2340, 0.0
    %2342 = vadd.xlane.f32.xlu0 %v2341
    %v2343 = vpop.xlane.xlu0 %2342
    %v2344 = vrcp.pop %v2343
    %v2345 = vmul.f32 %v2340, %v2344
    %v2346 = vpack.c.bf16 %v2345, %v2345
    %2347 = vrot.lane.b32.xlu0 %v1934, 40
    %v2348 = vpop.permute.xlu0 %2347
    %v2350 = vsel %vm1464, %v2346, 0
    %v2353 = vsel %vm1535, %v2348, 0
    %2355 = vmatprep.subr.bf16.mxu0 0
    %2356 = vmatpush1.bf16.msra.mxu0 %v2353
    %2357 = vmatprep.subr.bf16.mxu0 0
    %2358 = vmatpush1.bf16.msra.mxu0 0
    %2359 = vmatprep.subr.bf16.mxu0 0
    %2360 = vmatpush1.bf16.msra.mxu0 0
    %2361 = vmatprep.subr.bf16.mxu0 0
    %2362 = vmatpush1.bf16.msra.mxu0 0
    %2363 = vmatprep.subr.bf16.mxu0 0
    %2364 = vmatpush1.bf16.msra.mxu0 0
    %2365 = vmatprep.subr.bf16.mxu0 0
    %2366 = vmatpush1.bf16.msra.mxu0 0
    %2367 = vmatprep.subr.bf16.mxu0 0
    %2368 = vmatpush1.bf16.msra.mxu0 0
    %2369 = vmatprep.subr.bf16.mxu0 0
    %2370 = vmatpush1.bf16.msra.mxu0 0
    %2371 = vmatprep.subr.bf16.mxu0 0
    %2372 = vmatpush1.bf16.msra.mxu0 0
    %2373 = vmatprep.subr.bf16.mxu0 0
    %2374 = vmatpush1.bf16.msra.mxu0 0
    %2375 = vmatprep.subr.bf16.mxu0 0
    %2376 = vmatpush1.bf16.msra.mxu0 0
    %2377 = vmatprep.subr.bf16.mxu0 0
    %2378 = vmatpush1.bf16.msra.mxu0 0
    %2379 = vmatprep.subr.bf16.mxu0 0
    %2380 = vmatpush1.bf16.msra.mxu0 0
    %2381 = vmatprep.subr.bf16.mxu0 0
    %2382 = vmatpush1.bf16.msra.mxu0 0
    %2383 = vmatprep.subr.bf16.mxu0 0
    %2384 = vmatpush1.bf16.msra.mxu0 0
    %2385 = vmatprep.subr.bf16.mxu0 0
    %2386 = vmatpush1.bf16.msra.mxu0 0
    %2387 = vmatprep.mubr.bf16.mxu0 0
    %2388 = vmatmul.mubr.bf16.gmra.mrb[0].mxu0 %v2350
    %v2389 = vpop.f32.mrb[0].mxu0
    %v2390 = vadd.f32 0.0, %v2389
    %v2391 = vpop.f32.mrb[0].mxu0
    %v2392 = vpop.f32.mrb[0].mxu0
    %v2393 = vpop.f32.mrb[0].mxu0
    %2394 = vdwg.mxu0
    %2396 = vrot.lane.b32.xlu0 %v2390, 24
    %v2397 = vpop.permute.xlu0 %2396
    %2399 = vst.msk [vmem:[#allocation3 + $0x8] sm:$0xff] %vm1930, %v2397
    %v2400 = vld [vmem:[#allocation3] sm:$0xff]
    %v2401 = vld [vmem:[#allocation3 + $0x8] sm:$0xff]
    %v2402 = vpack.c.bf16 %v2401, %v2400
    %v2403 = vld [vmem:[%s7] sm:$0xff]
    %v2404 = vld [vmem:[%s7 + $0x8] sm:$0xff]
    %v2405 = vld [vmem:[%s7 + $0x10] sm:$0xff]
    %v2406 = vld [vmem:[%s7 + $0x18] sm:$0xff]
    %v2407 = vpack.c.bf16 %v2404, %v2403
    %v2408 = vpack.c.bf16 %v2406, %v2405
    %v2410 = vsel %vm64, %v2402, 0
    %2412 = vmatprep.subr.bf16.mxu0 0
    %2413 = vmatpush1.bf16.msra.mxu0 %v2407
    %2414 = vmatprep.subr.bf16.mxu0 0
    %2415 = vmatpush1.bf16.msra.mxu0 %v2408
    %2416 = vmatprep.subr.bf16.mxu0 0
    %2417 = vmatpush1.bf16.msra.mxu0 0
    %2418 = vmatprep.subr.bf16.mxu0 0
    %2419 = vmatpush1.bf16.msra.mxu0 0
    %2420 = vmatprep.subr.bf16.mxu0 0
    %2421 = vmatpush1.bf16.msra.mxu0 0
    %2422 = vmatprep.subr.bf16.mxu0 0
    %2423 = vmatpush1.bf16.msra.mxu0 0
    %2424 = vmatprep.subr.bf16.mxu0 0
    %2425 = vmatpush1.bf16.msra.mxu0 0
    %2426 = vmatprep.subr.bf16.mxu0 0
    %2427 = vmatpush1.bf16.msra.mxu0 0
    %2428 = vmatprep.subr.bf16.mxu0 0
    %2429 = vmatpush1.bf16.msra.mxu0 0
    %2430 = vmatprep.subr.bf16.mxu0 0
    %2431 = vmatpush1.bf16.msra.mxu0 0
    %2432 = vmatprep.subr.bf16.mxu0 0
    %2433 = vmatpush1.bf16.msra.mxu0 0
    %2434 = vmatprep.subr.bf16.mxu0 0
    %2435 = vmatpush1.bf16.msra.mxu0 0
    %2436 = vmatprep.subr.bf16.mxu0 0
    %2437 = vmatpush1.bf16.msra.mxu0 0
    %2438 = vmatprep.subr.bf16.mxu0 0
    %2439 = vmatpush1.bf16.msra.mxu0 0
    %2440 = vmatprep.subr.bf16.mxu0 0
    %2441 = vmatpush1.bf16.msra.mxu0 0
    %2442 = vmatprep.subr.bf16.mxu0 0
    %2443 = vmatpush1.bf16.msra.mxu0 0
    %2444 = vmatprep.mubr.bf16.mxu0 0
    %2445 = vmatmul.mubr.bf16.gmra.mrb[0].mxu0 %v2410
    %v2446 = vpop.f32.mrb[0].mxu0
    %v2447 = vadd.f32 0.0, %v2446
    %v2448 = vpop.f32.mrb[0].mxu0
    %v2449 = vpop.f32.mrb[0].mxu0
    %v2450 = vadd.f32 0.0, %v2449
    %v2451 = vpop.f32.mrb[0].mxu0
    %2452 = vdwg.mxu0
    %2453 = vst.msk [vmem:[#allocation4] sm:$0x1] %vm1344, %v2447
    %v2456 = vunpack.c.l.s4 1983009808
    %v2457 = vunpack.c.0.s8 %v2456
    %v2458 = vlaneseq
    %v2459 = vshrl.u32 %v2458, 7
    %v2460 = vsub.s32 %v2457, %v2459
    %v2461 = vrot.slane %v2447, %v2460
    %v2462 = vrot.slane %v2461, 7
    %v2463 = vrot.slane %v2462, 2
    %2464 = vrot.lane.b32.xlu0 %v2463, 32
    %v2465 = vpop.permute.xlu0 %2464
    %vm2467 = vcmask 516352
    %2468 = vst.msk [vmem:[#allocation4] sm:$0x1] %vm2467, %v2465
    %v2469 = vcombine.high %v2461, %v2461
    %2470 = vrot.lane.b32.xlu0 %v2469, 64
    %v2471 = vpop.permute.xlu0 %2470
    %vm2473 = vcmask 778752
    %2474 = vst.msk [vmem:[#allocation4] sm:$0x1] %vm2473, %v2471
    %v2475 = vrot.slane %v2469, 7
    %v2476 = vrot.slane %v2475, 2
    %2477 = vrot.lane.b32.xlu0 %v2476, 96
    %v2478 = vpop.permute.xlu0 %2477
    %vm2480 = vcmask 1041152
    %2481 = vst.msk [vmem:[#allocation4] sm:$0x1] %vm2480, %v2478
    %v2482 = vcombine.high %v2447, %v2447
    %v2484 = vunpack.c.l.s4 1983009808
    %v2485 = vunpack.c.0.s8 %v2484
    %v2486 = vlaneseq
    %v2487 = vshrl.u32 %v2486, 7
    %v2488 = vsub.s32 %v2485, %v2487
    %v2489 = vrot.slane %v2482, %v2488
    %2491 = vst.msk [vmem:[#allocation4 + $0x2] sm:$0x1] %vm1344, %v2489
    %v2492 = vrot.slane %v2489, 7
    %v2493 = vrot.slane %v2492, 2
    %2494 = vrot.lane.b32.xlu0 %v2493, 32
    %v2495 = vpop.permute.xlu0 %2494
    %2497 = vst.msk [vmem:[#allocation4 + $0x2] sm:$0x1] %vm2467, %v2495
    %v2498 = vcombine.high %v2489, %v2489
    %2499 = vrot.lane.b32.xlu0 %v2498, 64
    %v2500 = vpop.permute.xlu0 %2499
    %2502 = vst.msk [vmem:[#allocation4 + $0x2] sm:$0x1] %vm2473, %v2500
    %v2503 = vrot.slane %v2498, 7
    %v2504 = vrot.slane %v2503, 2
    %2505 = vrot.lane.b32.xlu0 %v2504, 96
    %v2506 = vpop.permute.xlu0 %2505
    %2508 = vst.msk [vmem:[#allocation4 + $0x2] sm:$0x1] %vm2480, %v2506
    %2509 = vst.msk [vmem:[#allocation4 + $0x1] sm:$0x1] %vm1344, %v2450
    %v2512 = vunpack.c.l.s4 1983009808
    %v2513 = vunpack.c.0.s8 %v2512
    %v2514 = vlaneseq
    %v2515 = vshrl.u32 %v2514, 7
    %v2516 = vsub.s32 %v2513, %v2515
    %v2517 = vrot.slane %v2450, %v2516
    %v2518 = vrot.slane %v2517, 7
    %v2519 = vrot.slane %v2518, 2
    %2520 = vrot.lane.b32.xlu0 %v2519, 32
    %v2521 = vpop.permute.xlu0 %2520
    %2523 = vst.msk [vmem:[#allocation4 + $0x1] sm:$0x1] %vm2467, %v2521
    %v2524 = vcombine.high %v2517, %v2517
    %2525 = vrot.lane.b32.xlu0 %v2524, 64
    %v2526 = vpop.permute.xlu0 %2525
    %2528 = vst.msk [vmem:[#allocation4 + $0x1] sm:$0x1] %vm2473, %v2526
    %v2529 = vrot.slane %v2524, 7
    %v2530 = vrot.slane %v2529, 2
    %2531 = vrot.lane.b32.xlu0 %v2530, 96
    %v2532 = vpop.permute.xlu0 %2531
    %2534 = vst.msk [vmem:[#allocation4 + $0x1] sm:$0x1] %vm2480, %v2532
    %v2535 = vcombine.high %v2450, %v2450
    %v2537 = vunpack.c.l.s4 1983009808
    %v2538 = vunpack.c.0.s8 %v2537
    %v2539 = vlaneseq
    %v2540 = vshrl.u32 %v2539, 7
    %v2541 = vsub.s32 %v2538, %v2540
    %v2542 = vrot.slane %v2535, %v2541
    %2544 = vst.msk [vmem:[#allocation4 + $0x3] sm:$0x1] %vm1344, %v2542
    %v2545 = vrot.slane %v2542, 7
    %v2546 = vrot.slane %v2545, 2
    %2547 = vrot.lane.b32.xlu0 %v2546, 32
    %v2548 = vpop.permute.xlu0 %2547
    %2550 = vst.msk [vmem:[#allocation4 + $0x3] sm:$0x1] %vm2467, %v2548
    %v2551 = vcombine.high %v2542, %v2542
    %2552 = vrot.lane.b32.xlu0 %v2551, 64
    %v2553 = vpop.permute.xlu0 %2552
    %2555 = vst.msk [vmem:[#allocation4 + $0x3] sm:$0x1] %vm2473, %v2553
    %v2556 = vrot.slane %v2551, 7
    %v2557 = vrot.slane %v2556, 2
    %2558 = vrot.lane.b32.xlu0 %v2557, 96
    %v2559 = vpop.permute.xlu0 %2558
    %2561 = vst.msk [vmem:[#allocation4 + $0x3] sm:$0x1] %vm2480, %v2559
    %v2562 = vld [vmem:[#allocation4] sm:$0xf]
    %v2565 = vunpack.c.l.s4 1983009808
    %v2566 = vunpack.c.0.s8 %v2565
    %v2567 = vlaneseq
    %v2568 = vshrl.u32 %v2567, 7
    %v2569 = vsub.s32 %v2566, %v2568
    %v2570 = vrot.slane %v2562, %v2569
    %v2571 = vcombine.high %v2570, %v2570
    %v2574 = vpack.c.bf16 %v2570, %v2570
    %v2575 = vpack.c.bf16 %v2571, %v2571
    %v2576 = vld [vmem:[%s8] sm:$0xff]
    %v2577 = vld [vmem:[%s8 + $0x8] sm:$0xff]
    %v2578 = vld [vmem:[%s8 + $0x10] sm:$0xff]
    %v2579 = vld [vmem:[%s8 + $0x18] sm:$0xff]
    %v2580 = vld [vmem:[%s8 + $0x20] sm:$0xff]
    %v2581 = vld [vmem:[%s8 + $0x28] sm:$0xff]
    %v2582 = vld [vmem:[%s8 + $0x30] sm:$0xff]
    %v2583 = vld [vmem:[%s8 + $0x38] sm:$0xff]
    %v2584 = vld [vmem:[%s8 + $0x40] sm:$0xff]
    %v2585 = vld [vmem:[%s8 + $0x48] sm:$0xff]
    %v2586 = vld [vmem:[%s8 + $0x50] sm:$0xff]
    %v2587 = vld [vmem:[%s8 + $0x58] sm:$0xff]
    %v2588 = vld [vmem:[%s8 + $0x60] sm:$0xff]
    %v2589 = vld [vmem:[%s8 + $0x68] sm:$0xff]
    %v2590 = vld [vmem:[%s8 + $0x70] sm:$0xff]
    %v2591 = vld [vmem:[%s8 + $0x78] sm:$0xff]
    %v2592 = vld [vmem:[%s8 + $0x80] sm:$0xff]
    %v2593 = vld [vmem:[%s8 + $0x88] sm:$0xff]
    %v2594 = vld [vmem:[%s8 + $0x90] sm:$0xff]
    %v2595 = vld [vmem:[%s8 + $0x98] sm:$0xff]
    %v2596 = vld [vmem:[%s8 + $0xa0] sm:$0xff]
    %v2597 = vld [vmem:[%s8 + $0xa8] sm:$0xff]
    %v2598 = vld [vmem:[%s8 + $0xb0] sm:$0xff]
    %v2599 = vld [vmem:[%s8 + $0xb8] sm:$0xff]
    %v2600 = vld [vmem:[%s8 + $0xc0] sm:$0xff]
    %v2601 = vld [vmem:[%s8 + $0xc8] sm:$0xff]
    %v2602 = vld [vmem:[%s8 + $0xd0] sm:$0xff]
    %v2603 = vld [vmem:[%s8 + $0xd8] sm:$0xff]
    %v2604 = vld [vmem:[%s8 + $0xe0] sm:$0xff]
    %v2605 = vld [vmem:[%s8 + $0xe8] sm:$0xff]
    %v2606 = vld [vmem:[%s8 + $0xf0] sm:$0xff]
    %v2607 = vld [vmem:[%s8 + $0xf8] sm:$0xff]
    %v2608 = vpack.c.bf16 %v2577, %v2576
    %v2609 = vpack.c.bf16 %v2579, %v2578
    %v2610 = vpack.c.bf16 %v2581, %v2580
    %v2611 = vpack.c.bf16 %v2583, %v2582
    %v2612 = vpack.c.bf16 %v2585, %v2584
    %v2613 = vpack.c.bf16 %v2587, %v2586
    %v2614 = vpack.c.bf16 %v2589, %v2588
    %v2615 = vpack.c.bf16 %v2591, %v2590
    %v2616 = vpack.c.bf16 %v2593, %v2592
    %v2617 = vpack.c.bf16 %v2595, %v2594
    %v2618 = vpack.c.bf16 %v2597, %v2596
    %v2619 = vpack.c.bf16 %v2599, %v2598
    %v2620 = vpack.c.bf16 %v2601, %v2600
    %v2621 = vpack.c.bf16 %v2603, %v2602
    %v2622 = vpack.c.bf16 %v2605, %v2604
    %v2623 = vpack.c.bf16 %v2607, %v2606
    %v2624 = vld [vmem:[%s9] sm:$0x1]
    %v2626 = vlaneseq
    %v2627 = vshrl.u32 %v2626, 7
    %v2628 = vsub.s32 0, %v2627
    %v2629 = vrot.slane %v2624, %v2628
    %2631 = vmatprep.subr.bf16.mxu0 0
    %2632 = vmatpush1.bf16.msra.mxu0 %v2608
    %2633 = vmatprep.subr.bf16.mxu0 0
    %2634 = vmatpush1.bf16.msra.mxu0 %v2609
    %2635 = vmatprep.subr.bf16.mxu0 0
    %2636 = vmatpush1.bf16.msra.mxu0 %v2610
    %2637 = vmatprep.subr.bf16.mxu0 0
    %2638 = vmatpush1.bf16.msra.mxu0 %v2611
    %2639 = vmatprep.subr.bf16.mxu0 0
    %2640 = vmatpush1.bf16.msra.mxu0 %v2612
    %2641 = vmatprep.subr.bf16.mxu0 0
    %2642 = vmatpush1.bf16.msra.mxu0 %v2613
    %2643 = vmatprep.subr.bf16.mxu0 0
    %2644 = vmatpush1.bf16.msra.mxu0 %v2614
    %2645 = vmatprep.subr.bf16.mxu0 0
    %2646 = vmatpush1.bf16.msra.mxu0 %v2615
    %2647 = vmatprep.subr.bf16.mxu0 0
    %2648 = vmatpush1.bf16.msra.mxu0 %v2616
    %2649 = vmatprep.subr.bf16.mxu0 0
    %2650 = vmatpush1.bf16.msra.mxu0 %v2617
    %2651 = vmatprep.subr.bf16.mxu0 0
    %2652 = vmatpush1.bf16.msra.mxu0 %v2618
    %2653 = vmatprep.subr.bf16.mxu0 0
    %2654 = vmatpush1.bf16.msra.mxu0 %v2619
    %2655 = vmatprep.subr.bf16.mxu0 0
    %2656 = vmatpush1.bf16.msra.mxu0 %v2620
    %2657 = vmatprep.subr.bf16.mxu0 0
    %2658 = vmatpush1.bf16.msra.mxu0 %v2621
    %2659 = vmatprep.subr.bf16.mxu0 0
    %2660 = vmatpush1.bf16.msra.mxu0 %v2622
    %2661 = vmatprep.subr.bf16.mxu0 0
    %2662 = vmatpush1.bf16.msra.mxu0 %v2623
    %2663 = vmatprep.mubr.bf16.mxu0 %v2575
    %2664 = vmatmul.mubr.bf16.gmra.mrb[0].mxu0 %v2574
    %v2665 = vpop.f32.mrb[0].mxu0
    %v2666 = vadd.f32 %v2629, %v2665
    %v2667 = vpop.f32.mrb[0].mxu0
    %v2668 = vpop.f32.mrb[0].mxu0
    %v2669 = vpop.f32.mrb[0].mxu0
    %2670 = vdwg.mxu0
    %vm2671 = vcmask 33792
    %2672 = vst.msk [vmem:[#allocation5] sm:$0x3] %vm2671, %v2666
    // Predicated region
    $region42: #{textcnn_forward.1} parent=1 // pred_check
      _
    $region43: #{textcnn_forward.1} parent=1 // pred_check_branch
      %2674 = sbr.rel (0) target = $region45
    $region44: #{textcnn_forward.1} parent=1 // pred_region
      %s2676 = ssub.s32 32, 32
      %2677 = vsyncadd [#allocation6], %s2676
      %s2679 = sshll.u32 [#allocation5], 4
      %s2680 = int_to_ptr.vmem [resolvable:$true] %s2679
      %2682 = dma.vmem_to_hbm [thread:$0]  %s2680, 32, %s10, [#allocation6]
    $region45: #{textcnn_forward.1} parent=1 // pred_fallthru
      _
    // Predicated region
    $region46: #{textcnn_forward.1} parent=1 // pred_check
      _
    $region47: #{textcnn_forward.1} parent=1 // pred_check_branch
      %2684 = sbr.rel (0) target = $region49
    $region48: #{textcnn_forward.1} parent=1 // pred_region
      %2685 = dma.done [#allocation6], 32
    $region49: #{textcnn_forward.1} parent=1 // pred_fallthru
      _
    %2686 = vsyncpa [#allocation6], 1

</llo_original>
